<compile_context>
chip_gen: v5e
topology: v5e:2x2
jax: 0.10.0
libtpu: 0.0.40
codegen_flags: <defaults>
</compile_context>

<pallas_src>
from functools import partial

import jax
import jax.numpy as jnp
from jax.experimental import pallas as pl
from jax.experimental.pallas import tpu as pltpu


def _round_up(x, m):
    return (x + m - 1) // m * m


# ------------------------------- fused kernel ------------------------------- #

def _fused_ir_kernel(*refs, H, W, H_out, W_out, Hh, stride, expand, use_res):
    if expand:
        (x_ref, w_exp, b_exp, w_dw, b_dw, w_proj, b_proj, o_ref, hid_ref) = refs
    else:
        (x_ref, w_dw, b_dw, w_proj, b_proj, o_ref, hid_ref) = refs
        w_exp = b_exp = None

    Cin_p = x_ref.shape[-1]
    Ch = hid_ref.shape[-1]
    Cout_p = o_ref.shape[-1]

    wdw = w_dw[...]            # (3, 3, Ch)  f32, BN scale folded
    bdw = b_dw[...]            # (1, 1, Ch)  f32
    wp = w_proj[...]           # (Ch, Cout)  bf16
    bp = b_proj[...]           # (1, Cout)   f32

    # ---- zero the halo ring of the staged hidden (static row/col stores only) ----
    hid_ref[:, 0:1, :] = jnp.zeros((Hh, 1, Ch), hid_ref.dtype)
    hid_ref[:, W + 1:W + 2, :] = jnp.zeros((Hh, 1, Ch), hid_ref.dtype)
    hid_ref[0:1, :, :] = jnp.zeros((1, W + 2, Ch), hid_ref.dtype)
    if Hh == H + 2:            # bottom halo row is only ever read when stride == 1
        hid_ref[H + 1:H + 2, :, :] = jnp.zeros((1, W + 2, Ch), hid_ref.dtype)

    # ---- 1x1 expand conv (BN folded) + ReLU6, staged bf16, chunked over rows ----
    if expand:
        we = w_exp[...]        # (Cin_p, Ch) bf16
        be = b_exp[...]        # (1, Ch)     f32
        RCE = max(1, min(H, 128 // max(1, W)))       # ~128 matmul rows per chunk
        for r0 in range(0, H, RCE):
            rr = min(RCE, H - r0)
            xb = x_ref[r0:r0 + rr, :, :].reshape(rr * W, Cin_p)
            hh = jnp.dot(xb, we, preferred_element_type=jnp.float32)
            hh = jnp.clip(hh + be, 0.0, 6.0)
            hid_ref[1 + r0:1 + r0 + rr, 1:W + 1, :] = (
                hh.reshape(rr, W, Ch).astype(hid_ref.dtype))
    else:
        hid_ref[1:H + 1, 1:W + 1, :] = x_ref[...]

    # ---- 3x3 depthwise (BN folded) + ReLU6 -> 1x1 project (BN folded) [+res] ----
    RCP = max(1, min(H_out, 128 // max(1, W_out)))   # output rows per chunk
    for c0 in range(0, H_out, RCP):
        rc = min(RCP, H_out - c0)
        acc = jnp.zeros((rc, W_out, Ch), jnp.float32)
        for dy in range(3):
            for dx in range(3):
                if stride == 1:
                    win = hid_ref[c0 + dy:c0 + dy + rc, dx:dx + W_out, :]
                else:
                    # TODO(synk): de-interleave even/odd width columns once so these
                    # stride-2 sublane reads become contiguous slices (XLU shuffle).
                    win = hid_ref[pl.ds(c0 * stride + dy, rc, stride),
                                  pl.ds(dx, W_out, stride), :]
                acc = acc + win.astype(jnp.float32) * wdw[dy, dx, :]
        y = jnp.clip(acc + bdw, 0.0, 6.0).astype(jnp.bfloat16)
        out = jnp.dot(y.reshape(rc * W_out, Ch), wp,
                      preferred_element_type=jnp.float32) + bp
        if use_res:
            res = x_ref[c0:c0 + rc, :, :]            # stride == 1 here, W_out == W
            out = out + res.reshape(rc * W_out, Cin_p).astype(jnp.float32)
        o_ref[c0:c0 + rc, :, :] = out.reshape(rc, W_out, Cout_p).astype(o_ref.dtype)


# ------------------------------ public wrapper ------------------------------ #

def inverted_residual(x_nchw, prep, *, stride, expand_ratio, input_dim, output_dim):
    N, Cin, H, W = x_nchw.shape
    assert Cin == input_dim
    use_res = (stride == 1) and (input_dim == output_dim)
    expand = expand_ratio != 1
    cin_p, ch_p, cout_p = prep["cin_p"], prep["ch_p"], prep["cout_p"]

    H_out = (H - 1) // stride + 1
    W_out = (W - 1) // stride + 1
    Hh = (H_out - 1) * stride + 3                    # rows of padded hidden needed

    # NCHW -> NHWC, bf16, channel pad to a lane-dense multiple of 128 (rows unpadded;
    # the kernel zeroes the hidden halo ring itself).
    x = jnp.transpose(x_nchw, (0, 2, 3, 1)).astype(jnp.bfloat16)
    x = jnp.pad(x, ((0, 0), (0, 0), (0, 0), (0, cin_p - Cin)))

    kernel = partial(_fused_ir_kernel, H=H, W=W, H_out=H_out, W_out=W_out, Hh=Hh,
                     stride=stride, expand=expand, use_res=use_res)

    in_specs = [pl.BlockSpec((None, H, W, cin_p), lambda n: (n, 0, 0, 0))]
    args = [x]
    if expand:
        in_specs += [pl.BlockSpec((cin_p, ch_p), lambda n: (0, 0)),
                     pl.BlockSpec((1, ch_p), lambda n: (0, 0))]
        args += [prep["w_exp"], prep["b_exp"]]
    in_specs += [pl.BlockSpec((3, 3, ch_p), lambda n: (0, 0, 0)),
                 pl.BlockSpec((1, 1, ch_p), lambda n: (0, 0, 0)),
                 pl.BlockSpec((ch_p, cout_p), lambda n: (0, 0)),
                 pl.BlockSpec((1, cout_p), lambda n: (0, 0))]
    args += [prep["w_dw"], prep["b_dw"], prep["w_proj"], prep["b_proj"]]

    out = pl.pallas_call(
        kernel,
        out_shape=jax.ShapeDtypeStruct((N, H_out, W_out, cout_p), jnp.float32),
        grid=(N,),
        in_specs=in_specs,
        out_specs=pl.BlockSpec((None, H_out, W_out, cout_p), lambda n: (n, 0, 0, 0)),
        scratch_shapes=[
            pltpu.VMEM((Hh, W + 2, ch_p), jnp.bfloat16),   # zero-padded hidden (bf16)
        ],
        compiler_params=pltpu.CompilerParams(
            dimension_semantics=("parallel",)),
    )(*args)

    out = out[:, :, :, :output_dim]                  # drop channel padding
    return jnp.transpose(out, (0, 3, 1, 2))          # NHWC -> NCHW


# -------------------- parameter folding / layout preparation ----------------- #

def prepare_params(params, *, input_dim, output_dim, expand_ratio):
    """Fold BN scales into conv weights, zero-pad channel dims to multiples of 128
    (lane-dense), cast matmul weights to bf16.  Used by kernel AND reference."""
    hidden = int(round(input_dim * expand_ratio))
    cin_p = _round_up(input_dim, 128)
    ch_p = _round_up(hidden, 128)
    cout_p = _round_up(output_dim, 128)
    out = {"cin_p": cin_p, "ch_p": ch_p, "cout_p": cout_p}
    if expand_ratio != 1:
        w = params["w_exp"] * params["s_exp"][None, :]                 # (Cin, hid)
        w = jnp.pad(w, ((0, cin_p - input_dim), (0, ch_p - hidden)))
        out["w_exp"] = w.astype(jnp.bfloat16)
        out["b_exp"] = jnp.pad(params["b_exp"], (0, ch_p - hidden)).reshape(1, ch_p)
    wd = params["w_dw"] * params["s_dw"][None, None, :]                # (3,3,hid)
    out["w_dw"] = jnp.pad(wd, ((0, 0), (0, 0), (0, ch_p - hidden))).astype(jnp.float32)
    out["b_dw"] = jnp.pad(params["b_dw"], (0, ch_p - hidden)).reshape(1, 1, ch_p)
    wp = params["w_proj"] * params["s_proj"][None, :]                  # (hid, Cout)
    wp = jnp.pad(wp, ((0, ch_p - hidden), (0, cout_p - output_dim)))
    out["w_proj"] = wp.astype(jnp.bfloat16)
    out["b_proj"] = jnp.pad(params["b_proj"], (0, cout_p - output_dim)).reshape(1, cout_p)
    return out


# ------------------------ deterministic parameter init ----------------------- #

def _fold_bn(key, c, eps=1e-5):
    k1, k2, k3, k4 = jax.random.split(key, 4)
    gamma = 1.0 + 0.1 * jax.random.normal(k1, (c,), jnp.float32)
    beta = 0.1 * jax.random.normal(k2, (c,), jnp.float32)
    mean = 0.05 * jax.random.normal(k3, (c,), jnp.float32)
    var = 1.0 + 0.1 * jnp.abs(jax.random.normal(k4, (c,), jnp.float32))
    scale = gamma / jnp.sqrt(var + eps)
    bias = beta - mean * scale
    return scale, bias


def make_params(key, input_dim, output_dim, expand_ratio):
    hidden = int(round(input_dim * expand_ratio))
    ks = jax.random.split(key, 6)
    p = {}
    # 1x1 expand: PyTorch weight (hidden, Cin, 1, 1) -> stored as (Cin, hidden)
    p["w_exp"] = 0.2 * jax.random.normal(ks[0], (input_dim, hidden), jnp.float32)
    p["s_exp"], p["b_exp"] = _fold_bn(ks[1], hidden)
    # 3x3 depthwise: PyTorch weight (hidden, 1, 3, 3) -> stored as (3, 3, hidden)
    p["w_dw"] = 0.2 * jax.random.normal(ks[2], (3, 3, hidden), jnp.float32)
    p["s_dw"], p["b_dw"] = _fold_bn(ks[3], hidden)
    # 1x1 project: (Cout, hidden, 1, 1) -> stored as (hidden, Cout)
    p["w_proj"] = 0.2 * jax.random.normal(ks[4], (hidden, output_dim), jnp.float32)
    p["s_proj"], p["b_proj"] = _fold_bn(ks[5], output_dim)
    return p


# --------------------- pure-JAX reference (numerics-matched) ----------------- #

def reference(x_nchw, prep, *, stride, expand_ratio, input_dim, output_dim):
    use_res = (stride == 1) and (input_dim == output_dim)
    N, Cin, H, W = x_nchw.shape
    cin_p, ch_p, cout_p = prep["cin_p"], prep["ch_p"], prep["cout_p"]
    x = jnp.transpose(x_nchw, (0, 2, 3, 1)).astype(jnp.bfloat16)     # same rounding
    x = jnp.pad(x, ((0, 0), (0, 0), (0, 0), (0, cin_p - Cin)))
    xf = x.astype(jnp.float32)
    if expand_ratio != 1:
        h = jnp.einsum("nhwc,cd->nhwd", xf, prep["w_exp"].astype(jnp.float32))
        h = jnp.clip(h + prep["b_exp"].reshape(ch_p), 0.0, 6.0)
    else:
        h = xf
    h = h.astype(jnp.bfloat16)                # hidden is staged in bf16 by the kernel
    hp = jnp.pad(h, ((0, 0), (1, 1), (1, 1), (0, 0)))
    H_out = (H - 1) // stride + 1
    W_out = (W - 1) // stride + 1
    acc = jnp.zeros((N, H_out, W_out, h.shape[-1]), jnp.float32)
    for dy in range(3):
        for dx in range(3):
            win = hp[:, dy:dy + (H_out - 1) * stride + 1:stride,
                        dx:dx + (W_out - 1) * stride + 1:stride, :]
            acc = acc + win.astype(jnp.float32) * prep["w_dw"][dy, dx, :]
    y = jnp.clip(acc + prep["b_dw"].reshape(-1), 0.0, 6.0).astype(jnp.bfloat16)
    out = jnp.einsum("nhwc,cd->nhwd", y.astype(jnp.float32),
                     prep["w_proj"].astype(jnp.float32))
    out = out + prep["b_proj"].reshape(cout_p)
    if use_res:
        out = out + xf
    out = out[..., :output_dim]
    return jnp.transpose(out, (0, 3, 1, 2))


# ----------------------------------- main ------------------------------------ #

if __name__ == "__main__":
    N, H, W = 2, 16, 16
    configs = [
        dict(input_dim=8, output_dim=8, stride=1, expand_ratio=4),    # residual path
        dict(input_dim=8, output_dim=16, stride=2, expand_ratio=4),   # strided path
    ]

    key = jax.random.PRNGKey(0)
    for cfg in configs:
        kx, kp, key = jax.random.split(key, 3)
        x = jax.random.normal(kx, (N, cfg["input_dim"], H, W), jnp.float32)  # NCHW
        raw = make_params(kp, cfg["input_dim"], cfg["output_dim"], cfg["expand_ratio"])
        prep = prepare_params(raw, input_dim=cfg["input_dim"],
                              output_dim=cfg["output_dim"],
                              expand_ratio=cfg["expand_ratio"])

        out = inverted_residual(x, prep, stride=cfg["stride"],
                                expand_ratio=cfg["expand_ratio"],
                                input_dim=cfg["input_dim"],
                                output_dim=cfg["output_dim"])
        out = jax.block_until_ready(out)

        ref = reference(x, prep, stride=cfg["stride"],
                        expand_ratio=cfg["expand_ratio"],
                        input_dim=cfg["input_dim"],
                        output_dim=cfg["output_dim"])

        H_out = (H - 1) // cfg["stride"] + 1
        W_out = (W - 1) // cfg["stride"] + 1
        assert out.shape == (N, cfg["output_dim"], H_out, W_out), out.shape
        assert jnp.allclose(out, ref, atol=2e-3, rtol=2e-3), (
            float(jnp.max(jnp.abs(out - ref))))

    print("KERNEL_OK")
</pallas_src>

<mosaic_0001>
module attributes {stable_mosaic.version = 11 : i64} {
  func.func @_fused_ir_kernel(%arg0: i32, %arg1: memref<1x16x16x128xbf16, #tpu.memory_space<vmem>>, %arg2: memref<128x128xbf16, #tpu.memory_space<vmem>>, %arg3: memref<1x128xf32, #tpu.memory_space<vmem>>, %arg4: memref<3x3x128xf32, #tpu.memory_space<vmem>>, %arg5: memref<1x1x128xf32, #tpu.memory_space<vmem>>, %arg6: memref<128x128xbf16, #tpu.memory_space<vmem>>, %arg7: memref<1x128xf32, #tpu.memory_space<vmem>>, %arg8: memref<1x16x16x128xf32, #tpu.memory_space<vmem>>, %arg9: memref<18x18x128xbf16, #tpu.memory_space<vmem>>) attributes {dimension_semantics = [#tpu.dimension_semantics<parallel>], iteration_bounds = array<i64: 2>, scalar_prefetch = 0 : i64, scratch_operands = 1 : i64, tpu.core_type = #tpu.core_type<tc>, window_params = [{transform_indices = @transform_0, window_bounds = array<i64: 1, 16, 16, 128>}, {pipeline_mode = #tpu.pipeline_mode<synchronous>, transform_indices = @transform_1, window_bounds = array<i64: 128, 128>}, {pipeline_mode = #tpu.pipeline_mode<synchronous>, transform_indices = @transform_2, window_bounds = array<i64: 1, 128>}, {pipeline_mode = #tpu.pipeline_mode<synchronous>, transform_indices = @transform_3, window_bounds = array<i64: 3, 3, 128>}, {pipeline_mode = #tpu.pipeline_mode<synchronous>, transform_indices = @transform_4, window_bounds = array<i64: 1, 1, 128>}, {pipeline_mode = #tpu.pipeline_mode<synchronous>, transform_indices = @transform_5, window_bounds = array<i64: 128, 128>}, {pipeline_mode = #tpu.pipeline_mode<synchronous>, transform_indices = @transform_6, window_bounds = array<i64: 1, 128>}, {transform_indices = @transform_7, window_bounds = array<i64: 1, 16, 16, 128>}]} {
    %c0 = arith.constant 0 : index
    %c0_0 = arith.constant 0 : index
    %c0_1 = arith.constant 0 : index
    %0 = vector.load %arg4[%c0, %c0_0, %c0_1] : memref<3x3x128xf32, #tpu.memory_space<vmem>>, vector<3x3x128xf32>
    %c0_2 = arith.constant 0 : index
    %c0_3 = arith.constant 0 : index
    %c0_4 = arith.constant 0 : index
    %1 = vector.load %arg5[%c0_2, %c0_3, %c0_4] : memref<1x1x128xf32, #tpu.memory_space<vmem>>, vector<1x1x128xf32>
    %c0_5 = arith.constant 0 : index
    %c0_6 = arith.constant 0 : index
    %2 = vector.load %arg6[%c0_5, %c0_6] : memref<128x128xbf16, #tpu.memory_space<vmem>>, vector<128x128xbf16>
    %c0_7 = arith.constant 0 : index
    %c0_8 = arith.constant 0 : index
    %3 = vector.load %arg7[%c0_7, %c0_8] : memref<1x128xf32, #tpu.memory_space<vmem>>, vector<1x128xf32>
    %cst = arith.constant 0.000000e+00 : bf16
    %4 = vector.broadcast %cst : bf16 to vector<18x1x128xbf16>
    %c0_9 = arith.constant 0 : index
    %c0_10 = arith.constant 0 : index
    %c0_11 = arith.constant 0 : index
    %5 = vector.load %arg9[%c0_9, %c0_10, %c0_11] : memref<18x18x128xbf16, #tpu.memory_space<vmem>>, vector<18x1x128xbf16>
    tpu.vector_store %arg9[%c0_9, %c0_10, %c0_11], %4 {strides = array<i32>} : memref<18x18x128xbf16, #tpu.memory_space<vmem>>, vector<18x1x128xbf16>,
    %cst_12 = arith.constant 0.000000e+00 : bf16
    %6 = vector.broadcast %cst_12 : bf16 to vector<18x1x128xbf16>
    %c0_13 = arith.constant 0 : index
    %c17 = arith.constant 17 : index
    %c0_14 = arith.constant 0 : index
    %7 = vector.load %arg9[%c0_13, %c17, %c0_14] : memref<18x18x128xbf16, #tpu.memory_space<vmem>>, vector<18x1x128xbf16>
    tpu.vector_store %arg9[%c0_13, %c17, %c0_14], %6 {strides = array<i32>} : memref<18x18x128xbf16, #tpu.memory_space<vmem>>, vector<18x1x128xbf16>,
    %cst_15 = arith.constant 0.000000e+00 : bf16
    %8 = vector.broadcast %cst_15 : bf16 to vector<1x18x128xbf16>
    %c0_16 = arith.constant 0 : index
    %c0_17 = arith.constant 0 : index
    %c0_18 = arith.constant 0 : index
    %9 = vector.load %arg9[%c0_16, %c0_17, %c0_18] : memref<18x18x128xbf16, #tpu.memory_space<vmem>>, vector<1x18x128xbf16>
    tpu.vector_store %arg9[%c0_16, %c0_17, %c0_18], %8 {strides = array<i32>} : memref<18x18x128xbf16, #tpu.memory_space<vmem>>, vector<1x18x128xbf16>,
    %cst_19 = arith.constant 0.000000e+00 : bf16
    %10 = vector.broadcast %cst_19 : bf16 to vector<1x18x128xbf16>
    %c17_20 = arith.constant 17 : index
    %c0_21 = arith.constant 0 : index
    %c0_22 = arith.constant 0 : index
    %11 = vector.load %arg9[%c17_20, %c0_21, %c0_22] : memref<18x18x128xbf16, #tpu.memory_space<vmem>>, vector<1x18x128xbf16>
    tpu.vector_store %arg9[%c17_20, %c0_21, %c0_22], %10 {strides = array<i32>} : memref<18x18x128xbf16, #tpu.memory_space<vmem>>, vector<1x18x128xbf16>,
    %c0_23 = arith.constant 0 : index
    %c0_24 = arith.constant 0 : index
    %12 = vector.load %arg2[%c0_23, %c0_24] : memref<128x128xbf16, #tpu.memory_space<vmem>>, vector<128x128xbf16>
    %c0_25 = arith.constant 0 : index
    %c0_26 = arith.constant 0 : index
    %13 = vector.load %arg3[%c0_25, %c0_26] : memref<1x128xf32, #tpu.memory_space<vmem>>, vector<1x128xf32>
    %c0_27 = arith.constant 0 : index
    %c0_28 = arith.constant 0 : index
    %c0_29 = arith.constant 0 : index
    %c0_30 = arith.constant 0 : index
    %14 = vector.load %arg1[%c0_27, %c0_28, %c0_29, %c0_30] : memref<1x16x16x128xbf16, #tpu.memory_space<vmem>>, vector<1x8x16x128xbf16>
    %15 = vector.shape_cast %14 : vector<1x8x16x128xbf16> to vector<8x16x128xbf16>
    %16 = vector.shape_cast %15 : vector<8x16x128xbf16> to vector<128x128xbf16>
    %cst_31 = arith.constant dense<0.000000e+00> : vector<128x128xf32>
    %17 = tpu.matmul %16, %12, %cst_31 {dimension_numbers = #tpu.dot_dimension_numbers<[1], [0], [0], [1], [0, 0, 1, 1], [], []>} : vector<128x128xbf16>, vector<128x128xbf16>, vector<128x128xf32> -> vector<128x128xf32>
    %18 = vector.broadcast %13 : vector<1x128xf32> to vector<128x128xf32>
    %19 = arith.addf %17, %18 : vector<128x128xf32>
    %cst_32 = arith.constant 0.000000e+00 : f32
    %cst_33 = arith.constant 6.000000e+00 : f32
    %20 = vector.broadcast %cst_32 : f32 to vector<128x128xf32>
    %21 = arith.maximumf %20, %19 : vector<128x128xf32>
    %22 = vector.broadcast %cst_33 : f32 to vector<128x128xf32>
    %23 = arith.minimumf %22, %21 : vector<128x128xf32>
    %24 = vector.shape_cast %23 : vector<128x128xf32> to vector<8x16x128xf32>
    %25 = arith.truncf %24 : vector<8x16x128xf32> to vector<8x16x128xbf16>
    %c1 = arith.constant 1 : index
    %c1_34 = arith.constant 1 : index
    %c0_35 = arith.constant 0 : index
    %26 = vector.load %arg9[%c1, %c1_34, %c0_35] : memref<18x18x128xbf16, #tpu.memory_space<vmem>>, vector<8x16x128xbf16>
    tpu.vector_store %arg9[%c1, %c1_34, %c0_35], %25 {strides = array<i32>} : memref<18x18x128xbf16, #tpu.memory_space<vmem>>, vector<8x16x128xbf16>,
    %c0_36 = arith.constant 0 : index
    %c8 = arith.constant 8 : index
    %c0_37 = arith.constant 0 : index
    %c0_38 = arith.constant 0 : index
    %27 = vector.load %arg1[%c0_36, %c8, %c0_37, %c0_38] : memref<1x16x16x128xbf16, #tpu.memory_space<vmem>>, vector<1x8x16x128xbf16>
    %28 = vector.shape_cast %27 : vector<1x8x16x128xbf16> to vector<8x16x128xbf16>
    %29 = vector.shape_cast %28 : vector<8x16x128xbf16> to vector<128x128xbf16>
    %cst_39 = arith.constant dense<0.000000e+00> : vector<128x128xf32>
    %30 = tpu.matmul %29, %12, %cst_39 {dimension_numbers = #tpu.dot_dimension_numbers<[1], [0], [0], [1], [0, 0, 1, 1], [], []>} : vector<128x128xbf16>, vector<128x128xbf16>, vector<128x128xf32> -> vector<128x128xf32>
    %31 = vector.broadcast %13 : vector<1x128xf32> to vector<128x128xf32>
    %32 = arith.addf %30, %31 : vector<128x128xf32>
    %cst_40 = arith.constant 0.000000e+00 : f32
    %cst_41 = arith.constant 6.000000e+00 : f32
    %33 = vector.broadcast %cst_40 : f32 to vector<128x128xf32>
    %34 = arith.maximumf %33, %32 : vector<128x128xf32>
    %35 = vector.broadcast %cst_41 : f32 to vector<128x128xf32>
    %36 = arith.minimumf %35, %34 : vector<128x128xf32>
    %37 = vector.shape_cast %36 : vector<128x128xf32> to vector<8x16x128xf32>
    %38 = arith.truncf %37 : vector<8x16x128xf32> to vector<8x16x128xbf16>
    %c9 = arith.constant 9 : index
    %c1_42 = arith.constant 1 : index
    %c0_43 = arith.constant 0 : index
    %39 = vector.load %arg9[%c9, %c1_42, %c0_43] : memref<18x18x128xbf16, #tpu.memory_space<vmem>>, vector<8x16x128xbf16>
    tpu.vector_store %arg9[%c9, %c1_42, %c0_43], %38 {strides = array<i32>} : memref<18x18x128xbf16, #tpu.memory_space<vmem>>, vector<8x16x128xbf16>,
    %cst_44 = arith.constant 0.000000e+00 : f32
    %40 = vector.broadcast %cst_44 : f32 to vector<8x16x128xf32>
    %c0_45 = arith.constant 0 : index
    %c0_46 = arith.constant 0 : index
    %c0_47 = arith.constant 0 : index
    %41 = vector.load %arg9[%c0_45, %c0_46, %c0_47] : memref<18x18x128xbf16, #tpu.memory_space<vmem>>, vector<8x16x128xbf16>
    %42 = arith.extf %41 : vector<8x16x128xbf16> to vector<8x16x128xf32>
    %43 = vector.extract_strided_slice %0 {offsets = [0, 0, 0], sizes = [1, 1, 128], strides = [1, 1, 1]} : vector<3x3x128xf32> to vector<1x1x128xf32>
    %44 = vector.shape_cast %43 : vector<1x1x128xf32> to vector<128xf32>
    %45 = vector.shape_cast %44 : vector<128xf32> to vector<1x1x128xf32>
    %46 = vector.broadcast %45 : vector<1x1x128xf32> to vector<8x16x128xf32>
    %47 = arith.mulf %42, %46 : vector<8x16x128xf32>
    %48 = arith.addf %40, %47 : vector<8x16x128xf32>
    %c0_48 = arith.constant 0 : index
    %c1_49 = arith.constant 1 : index
    %c0_50 = arith.constant 0 : index
    %49 = vector.load %arg9[%c0_48, %c1_49, %c0_50] : memref<18x18x128xbf16, #tpu.memory_space<vmem>>, vector<8x16x128xbf16>
    %50 = arith.extf %49 : vector<8x16x128xbf16> to vector<8x16x128xf32>
    %51 = vector.extract_strided_slice %0 {offsets = [0, 1, 0], sizes = [1, 1, 128], strides = [1, 1, 1]} : vector<3x3x128xf32> to vector<1x1x128xf32>
    %52 = vector.shape_cast %51 : vector<1x1x128xf32> to vector<128xf32>
    %53 = vector.shape_cast %52 : vector<128xf32> to vector<1x1x128xf32>
    %54 = vector.broadcast %53 : vector<1x1x128xf32> to vector<8x16x128xf32>
    %55 = arith.mulf %50, %54 : vector<8x16x128xf32>
    %56 = arith.addf %48, %55 : vector<8x16x128xf32>
    %c0_51 = arith.constant 0 : index
    %c2 = arith.constant 2 : index
    %c0_52 = arith.constant 0 : index
    %57 = vector.load %arg9[%c0_51, %c2, %c0_52] : memref<18x18x128xbf16, #tpu.memory_space<vmem>>, vector<8x16x128xbf16>
    %58 = arith.extf %57 : vector<8x16x128xbf16> to vector<8x16x128xf32>
    %59 = vector.extract_strided_slice %0 {offsets = [0, 2, 0], sizes = [1, 1, 128], strides = [1, 1, 1]} : vector<3x3x128xf32> to vector<1x1x128xf32>
    %60 = vector.shape_cast %59 : vector<1x1x128xf32> to vector<128xf32>
    %61 = vector.shape_cast %60 : vector<128xf32> to vector<1x1x128xf32>
    %62 = vector.broadcast %61 : vector<1x1x128xf32> to vector<8x16x128xf32>
    %63 = arith.mulf %58, %62 : vector<8x16x128xf32>
    %64 = arith.addf %56, %63 : vector<8x16x128xf32>
    %c1_53 = arith.constant 1 : index
    %c0_54 = arith.constant 0 : index
    %c0_55 = arith.constant 0 : index
    %65 = vector.load %arg9[%c1_53, %c0_54, %c0_55] : memref<18x18x128xbf16, #tpu.memory_space<vmem>>, vector<8x16x128xbf16>
    %66 = arith.extf %65 : vector<8x16x128xbf16> to vector<8x16x128xf32>
    %67 = vector.extract_strided_slice %0 {offsets = [1, 0, 0], sizes = [1, 1, 128], strides = [1, 1, 1]} : vector<3x3x128xf32> to vector<1x1x128xf32>
    %68 = vector.shape_cast %67 : vector<1x1x128xf32> to vector<128xf32>
    %69 = vector.shape_cast %68 : vector<128xf32> to vector<1x1x128xf32>
    %70 = vector.broadcast %69 : vector<1x1x128xf32> to vector<8x16x128xf32>
    %71 = arith.mulf %66, %70 : vector<8x16x128xf32>
    %72 = arith.addf %64, %71 : vector<8x16x128xf32>
    %c1_56 = arith.constant 1 : index
    %c1_57 = arith.constant 1 : index
    %c0_58 = arith.constant 0 : index
    %73 = vector.load %arg9[%c1_56, %c1_57, %c0_58] : memref<18x18x128xbf16, #tpu.memory_space<vmem>>, vector<8x16x128xbf16>
    %74 = arith.extf %73 : vector<8x16x128xbf16> to vector<8x16x128xf32>
    %75 = vector.extract_strided_slice %0 {offsets = [1, 1, 0], sizes = [1, 1, 128], strides = [1, 1, 1]} : vector<3x3x128xf32> to vector<1x1x128xf32>
    %76 = vector.shape_cast %75 : vector<1x1x128xf32> to vector<128xf32>
    %77 = vector.shape_cast %76 : vector<128xf32> to vector<1x1x128xf32>
    %78 = vector.broadcast %77 : vector<1x1x128xf32> to vector<8x16x128xf32>
    %79 = arith.mulf %74, %78 : vector<8x16x128xf32>
    %80 = arith.addf %72, %79 : vector<8x16x128xf32>
    %c1_59 = arith.constant 1 : index
    %c2_60 = arith.constant 2 : index
    %c0_61 = arith.constant 0 : index
    %81 = vector.load %arg9[%c1_59, %c2_60, %c0_61] : memref<18x18x128xbf16, #tpu.memory_space<vmem>>, vector<8x16x128xbf16>
    %82 = arith.extf %81 : vector<8x16x128xbf16> to vector<8x16x128xf32>
    %83 = vector.extract_strided_slice %0 {offsets = [1, 2, 0], sizes = [1, 1, 128], strides = [1, 1, 1]} : vector<3x3x128xf32> to vector<1x1x128xf32>
    %84 = vector.shape_cast %83 : vector<1x1x128xf32> to vector<128xf32>
    %85 = vector.shape_cast %84 : vector<128xf32> to vector<1x1x128xf32>
    %86 = vector.broadcast %85 : vector<1x1x128xf32> to vector<8x16x128xf32>
    %87 = arith.mulf %82, %86 : vector<8x16x128xf32>
    %88 = arith.addf %80, %87 : vector<8x16x128xf32>
    %c2_62 = arith.constant 2 : index
    %c0_63 = arith.constant 0 : index
    %c0_64 = arith.constant 0 : index
    %89 = vector.load %arg9[%c2_62, %c0_63, %c0_64] : memref<18x18x128xbf16, #tpu.memory_space<vmem>>, vector<8x16x128xbf16>
    %90 = arith.extf %89 : vector<8x16x128xbf16> to vector<8x16x128xf32>
    %91 = vector.extract_strided_slice %0 {offsets = [2, 0, 0], sizes = [1, 1, 128], strides = [1, 1, 1]} : vector<3x3x128xf32> to vector<1x1x128xf32>
    %92 = vector.shape_cast %91 : vector<1x1x128xf32> to vector<128xf32>
    %93 = vector.shape_cast %92 : vector<128xf32> to vector<1x1x128xf32>
    %94 = vector.broadcast %93 : vector<1x1x128xf32> to vector<8x16x128xf32>
    %95 = arith.mulf %90, %94 : vector<8x16x128xf32>
    %96 = arith.addf %88, %95 : vector<8x16x128xf32>
    %c2_65 = arith.constant 2 : index
    %c1_66 = arith.constant 1 : index
    %c0_67 = arith.constant 0 : index
    %97 = vector.load %arg9[%c2_65, %c1_66, %c0_67] : memref<18x18x128xbf16, #tpu.memory_space<vmem>>, vector<8x16x128xbf16>
    %98 = arith.extf %97 : vector<8x16x128xbf16> to vector<8x16x128xf32>
    %99 = vector.extract_strided_slice %0 {offsets = [2, 1, 0], sizes = [1, 1, 128], strides = [1, 1, 1]} : vector<3x3x128xf32> to vector<1x1x128xf32>
    %100 = vector.shape_cast %99 : vector<1x1x128xf32> to vector<128xf32>
    %101 = vector.shape_cast %100 : vector<128xf32> to vector<1x1x128xf32>
    %102 = vector.broadcast %101 : vector<1x1x128xf32> to vector<8x16x128xf32>
    %103 = arith.mulf %98, %102 : vector<8x16x128xf32>
    %104 = arith.addf %96, %103 : vector<8x16x128xf32>
    %c2_68 = arith.constant 2 : index
    %c2_69 = arith.constant 2 : index
    %c0_70 = arith.constant 0 : index
    %105 = vector.load %arg9[%c2_68, %c2_69, %c0_70] : memref<18x18x128xbf16, #tpu.memory_space<vmem>>, vector<8x16x128xbf16>
    %106 = arith.extf %105 : vector<8x16x128xbf16> to vector<8x16x128xf32>
    %107 = vector.extract_strided_slice %0 {offsets = [2, 2, 0], sizes = [1, 1, 128], strides = [1, 1, 1]} : vector<3x3x128xf32> to vector<1x1x128xf32>
    %108 = vector.shape_cast %107 : vector<1x1x128xf32> to vector<128xf32>
    %109 = vector.shape_cast %108 : vector<128xf32> to vector<1x1x128xf32>
    %110 = vector.broadcast %109 : vector<1x1x128xf32> to vector<8x16x128xf32>
    %111 = arith.mulf %106, %110 : vector<8x16x128xf32>
    %112 = arith.addf %104, %111 : vector<8x16x128xf32>
    %113 = vector.broadcast %1 : vector<1x1x128xf32> to vector<8x16x128xf32>
    %114 = arith.addf %112, %113 : vector<8x16x128xf32>
    %cst_71 = arith.constant 0.000000e+00 : f32
    %cst_72 = arith.constant 6.000000e+00 : f32
    %115 = vector.broadcast %cst_71 : f32 to vector<8x16x128xf32>
    %116 = arith.maximumf %115, %114 : vector<8x16x128xf32>
    %117 = vector.broadcast %cst_72 : f32 to vector<8x16x128xf32>
    %118 = arith.minimumf %117, %116 : vector<8x16x128xf32>
    %119 = arith.truncf %118 : vector<8x16x128xf32> to vector<8x16x128xbf16>
    %120 = vector.shape_cast %119 : vector<8x16x128xbf16> to vector<128x128xbf16>
    %cst_73 = arith.constant dense<0.000000e+00> : vector<128x128xf32>
    %121 = tpu.matmul %120, %2, %cst_73 {dimension_numbers = #tpu.dot_dimension_numbers<[1], [0], [0], [1], [0, 0, 1, 1], [], []>} : vector<128x128xbf16>, vector<128x128xbf16>, vector<128x128xf32> -> vector<128x128xf32>
    %122 = vector.broadcast %3 : vector<1x128xf32> to vector<128x128xf32>
    %123 = arith.addf %121, %122 : vector<128x128xf32>
    %c0_74 = arith.constant 0 : index
    %c0_75 = arith.constant 0 : index
    %c0_76 = arith.constant 0 : index
    %c0_77 = arith.constant 0 : index
    %124 = vector.load %arg1[%c0_74, %c0_75, %c0_76, %c0_77] : memref<1x16x16x128xbf16, #tpu.memory_space<vmem>>, vector<1x8x16x128xbf16>
    %125 = vector.shape_cast %124 : vector<1x8x16x128xbf16> to vector<8x16x128xbf16>
    %126 = vector.shape_cast %125 : vector<8x16x128xbf16> to vector<128x128xbf16>
    %127 = arith.extf %126 : vector<128x128xbf16> to vector<128x128xf32>
    %128 = arith.addf %123, %127 : vector<128x128xf32>
    %129 = vector.shape_cast %128 : vector<128x128xf32> to vector<8x16x128xf32>
    %c0_78 = arith.constant 0 : index
    %c0_79 = arith.constant 0 : index
    %c0_80 = arith.constant 0 : index
    %c0_81 = arith.constant 0 : index
    %130 = vector.load %arg8[%c0_78, %c0_79, %c0_80, %c0_81] : memref<1x16x16x128xf32, #tpu.memory_space<vmem>>, vector<1x8x16x128xf32>
    %131 = vector.shape_cast %130 : vector<1x8x16x128xf32> to vector<8x16x128xf32>
    %132 = vector.shape_cast %129 : vector<8x16x128xf32> to vector<1x8x16x128xf32>
    tpu.vector_store %arg8[%c0_78, %c0_79, %c0_80, %c0_81], %132 {strides = array<i32>} : memref<1x16x16x128xf32, #tpu.memory_space<vmem>>, vector<1x8x16x128xf32>,
    %cst_82 = arith.constant 0.000000e+00 : f32
    %133 = vector.broadcast %cst_82 : f32 to vector<8x16x128xf32>
    %c8_83 = arith.constant 8 : index
    %c0_84 = arith.constant 0 : index
    %c0_85 = arith.constant 0 : index
    %134 = vector.load %arg9[%c8_83, %c0_84, %c0_85] : memref<18x18x128xbf16, #tpu.memory_space<vmem>>, vector<8x16x128xbf16>
    %135 = arith.extf %134 : vector<8x16x128xbf16> to vector<8x16x128xf32>
    %136 = vector.extract_strided_slice %0 {offsets = [0, 0, 0], sizes = [1, 1, 128], strides = [1, 1, 1]} : vector<3x3x128xf32> to vector<1x1x128xf32>
    %137 = vector.shape_cast %136 : vector<1x1x128xf32> to vector<128xf32>
    %138 = vector.shape_cast %137 : vector<128xf32> to vector<1x1x128xf32>
    %139 = vector.broadcast %138 : vector<1x1x128xf32> to vector<8x16x128xf32>
    %140 = arith.mulf %135, %139 : vector<8x16x128xf32>
    %141 = arith.addf %133, %140 : vector<8x16x128xf32>
    %c8_86 = arith.constant 8 : index
    %c1_87 = arith.constant 1 : index
    %c0_88 = arith.constant 0 : index
    %142 = vector.load %arg9[%c8_86, %c1_87, %c0_88] : memref<18x18x128xbf16, #tpu.memory_space<vmem>>, vector<8x16x128xbf16>
    %143 = arith.extf %142 : vector<8x16x128xbf16> to vector<8x16x128xf32>
    %144 = vector.extract_strided_slice %0 {offsets = [0, 1, 0], sizes = [1, 1, 128], strides = [1, 1, 1]} : vector<3x3x128xf32> to vector<1x1x128xf32>
    %145 = vector.shape_cast %144 : vector<1x1x128xf32> to vector<128xf32>
    %146 = vector.shape_cast %145 : vector<128xf32> to vector<1x1x128xf32>
    %147 = vector.broadcast %146 : vector<1x1x128xf32> to vector<8x16x128xf32>
    %148 = arith.mulf %143, %147 : vector<8x16x128xf32>
    %149 = arith.addf %141, %148 : vector<8x16x128xf32>
    %c8_89 = arith.constant 8 : index
    %c2_90 = arith.constant 2 : index
    %c0_91 = arith.constant 0 : index
    %150 = vector.load %arg9[%c8_89, %c2_90, %c0_91] : memref<18x18x128xbf16, #tpu.memory_space<vmem>>, vector<8x16x128xbf16>
    %151 = arith.extf %150 : vector<8x16x128xbf16> to vector<8x16x128xf32>
    %152 = vector.extract_strided_slice %0 {offsets = [0, 2, 0], sizes = [1, 1, 128], strides = [1, 1, 1]} : vector<3x3x128xf32> to vector<1x1x128xf32>
    %153 = vector.shape_cast %152 : vector<1x1x128xf32> to vector<128xf32>
    %154 = vector.shape_cast %153 : vector<128xf32> to vector<1x1x128xf32>
    %155 = vector.broadcast %154 : vector<1x1x128xf32> to vector<8x16x128xf32>
    %156 = arith.mulf %151, %155 : vector<8x16x128xf32>
    %157 = arith.addf %149, %156 : vector<8x16x128xf32>
    %c9_92 = arith.constant 9 : index
    %c0_93 = arith.constant 0 : index
    %c0_94 = arith.constant 0 : index
    %158 = vector.load %arg9[%c9_92, %c0_93, %c0_94] : memref<18x18x128xbf16, #tpu.memory_space<vmem>>, vector<8x16x128xbf16>
    %159 = arith.extf %158 : vector<8x16x128xbf16> to vector<8x16x128xf32>
    %160 = vector.extract_strided_slice %0 {offsets = [1, 0, 0], sizes = [1, 1, 128], strides = [1, 1, 1]} : vector<3x3x128xf32> to vector<1x1x128xf32>
    %161 = vector.shape_cast %160 : vector<1x1x128xf32> to vector<128xf32>
    %162 = vector.shape_cast %161 : vector<128xf32> to vector<1x1x128xf32>
    %163 = vector.broadcast %162 : vector<1x1x128xf32> to vector<8x16x128xf32>
    %164 = arith.mulf %159, %163 : vector<8x16x128xf32>
    %165 = arith.addf %157, %164 : vector<8x16x128xf32>
    %c9_95 = arith.constant 9 : index
    %c1_96 = arith.constant 1 : index
    %c0_97 = arith.constant 0 : index
    %166 = vector.load %arg9[%c9_95, %c1_96, %c0_97] : memref<18x18x128xbf16, #tpu.memory_space<vmem>>, vector<8x16x128xbf16>
    %167 = arith.extf %166 : vector<8x16x128xbf16> to vector<8x16x128xf32>
    %168 = vector.extract_strided_slice %0 {offsets = [1, 1, 0], sizes = [1, 1, 128], strides = [1, 1, 1]} : vector<3x3x128xf32> to vector<1x1x128xf32>
    %169 = vector.shape_cast %168 : vector<1x1x128xf32> to vector<128xf32>
    %170 = vector.shape_cast %169 : vector<128xf32> to vector<1x1x128xf32>
    %171 = vector.broadcast %170 : vector<1x1x128xf32> to vector<8x16x128xf32>
    %172 = arith.mulf %167, %171 : vector<8x16x128xf32>
    %173 = arith.addf %165, %172 : vector<8x16x128xf32>
    %c9_98 = arith.constant 9 : index
    %c2_99 = arith.constant 2 : index
    %c0_100 = arith.constant 0 : index
    %174 = vector.load %arg9[%c9_98, %c2_99, %c0_100] : memref<18x18x128xbf16, #tpu.memory_space<vmem>>, vector<8x16x128xbf16>
    %175 = arith.extf %174 : vector<8x16x128xbf16> to vector<8x16x128xf32>
    %176 = vector.extract_strided_slice %0 {offsets = [1, 2, 0], sizes = [1, 1, 128], strides = [1, 1, 1]} : vector<3x3x128xf32> to vector<1x1x128xf32>
    %177 = vector.shape_cast %176 : vector<1x1x128xf32> to vector<128xf32>
    %178 = vector.shape_cast %177 : vector<128xf32> to vector<1x1x128xf32>
    %179 = vector.broadcast %178 : vector<1x1x128xf32> to vector<8x16x128xf32>
    %180 = arith.mulf %175, %179 : vector<8x16x128xf32>
    %181 = arith.addf %173, %180 : vector<8x16x128xf32>
    %c10 = arith.constant 10 : index
    %c0_101 = arith.constant 0 : index
    %c0_102 = arith.constant 0 : index
    %182 = vector.load %arg9[%c10, %c0_101, %c0_102] : memref<18x18x128xbf16, #tpu.memory_space<vmem>>, vector<8x16x128xbf16>
    %183 = arith.extf %182 : vector<8x16x128xbf16> to vector<8x16x128xf32>
    %184 = vector.extract_strided_slice %0 {offsets = [2, 0, 0], sizes = [1, 1, 128], strides = [1, 1, 1]} : vector<3x3x128xf32> to vector<1x1x128xf32>
    %185 = vector.shape_cast %184 : vector<1x1x128xf32> to vector<128xf32>
    %186 = vector.shape_cast %185 : vector<128xf32> to vector<1x1x128xf32>
    %187 = vector.broadcast %186 : vector<1x1x128xf32> to vector<8x16x128xf32>
    %188 = arith.mulf %183, %187 : vector<8x16x128xf32>
    %189 = arith.addf %181, %188 : vector<8x16x128xf32>
    %c10_103 = arith.constant 10 : index
    %c1_104 = arith.constant 1 : index
    %c0_105 = arith.constant 0 : index
    %190 = vector.load %arg9[%c10_103, %c1_104, %c0_105] : memref<18x18x128xbf16, #tpu.memory_space<vmem>>, vector<8x16x128xbf16>
    %191 = arith.extf %190 : vector<8x16x128xbf16> to vector<8x16x128xf32>
    %192 = vector.extract_strided_slice %0 {offsets = [2, 1, 0], sizes = [1, 1, 128], strides = [1, 1, 1]} : vector<3x3x128xf32> to vector<1x1x128xf32>
    %193 = vector.shape_cast %192 : vector<1x1x128xf32> to vector<128xf32>
    %194 = vector.shape_cast %193 : vector<128xf32> to vector<1x1x128xf32>
    %195 = vector.broadcast %194 : vector<1x1x128xf32> to vector<8x16x128xf32>
    %196 = arith.mulf %191, %195 : vector<8x16x128xf32>
    %197 = arith.addf %189, %196 : vector<8x16x128xf32>
    %c10_106 = arith.constant 10 : index
    %c2_107 = arith.constant 2 : index
    %c0_108 = arith.constant 0 : index
    %198 = vector.load %arg9[%c10_106, %c2_107, %c0_108] : memref<18x18x128xbf16, #tpu.memory_space<vmem>>, vector<8x16x128xbf16>
    %199 = arith.extf %198 : vector<8x16x128xbf16> to vector<8x16x128xf32>
    %200 = vector.extract_strided_slice %0 {offsets = [2, 2, 0], sizes = [1, 1, 128], strides = [1, 1, 1]} : vector<3x3x128xf32> to vector<1x1x128xf32>
    %201 = vector.shape_cast %200 : vector<1x1x128xf32> to vector<128xf32>
    %202 = vector.shape_cast %201 : vector<128xf32> to vector<1x1x128xf32>
    %203 = vector.broadcast %202 : vector<1x1x128xf32> to vector<8x16x128xf32>
    %204 = arith.mulf %199, %203 : vector<8x16x128xf32>
    %205 = arith.addf %197, %204 : vector<8x16x128xf32>
    %206 = vector.broadcast %1 : vector<1x1x128xf32> to vector<8x16x128xf32>
    %207 = arith.addf %205, %206 : vector<8x16x128xf32>
    %cst_109 = arith.constant 0.000000e+00 : f32
    %cst_110 = arith.constant 6.000000e+00 : f32
    %208 = vector.broadcast %cst_109 : f32 to vector<8x16x128xf32>
    %209 = arith.maximumf %208, %207 : vector<8x16x128xf32>
    %210 = vector.broadcast %cst_110 : f32 to vector<8x16x128xf32>
    %211 = arith.minimumf %210, %209 : vector<8x16x128xf32>
    %212 = arith.truncf %211 : vector<8x16x128xf32> to vector<8x16x128xbf16>
    %213 = vector.shape_cast %212 : vector<8x16x128xbf16> to vector<128x128xbf16>
    %cst_111 = arith.constant dense<0.000000e+00> : vector<128x128xf32>
    %214 = tpu.matmul %213, %2, %cst_111 {dimension_numbers = #tpu.dot_dimension_numbers<[1], [0], [0], [1], [0, 0, 1, 1], [], []>} : vector<128x128xbf16>, vector<128x128xbf16>, vector<128x128xf32> -> vector<128x128xf32>
    %215 = vector.broadcast %3 : vector<1x128xf32> to vector<128x128xf32>
    %216 = arith.addf %214, %215 : vector<128x128xf32>
    %c0_112 = arith.constant 0 : index
    %c8_113 = arith.constant 8 : index
    %c0_114 = arith.constant 0 : index
    %c0_115 = arith.constant 0 : index
    %217 = vector.load %arg1[%c0_112, %c8_113, %c0_114, %c0_115] : memref<1x16x16x128xbf16, #tpu.memory_space<vmem>>, vector<1x8x16x128xbf16>
    %218 = vector.shape_cast %217 : vector<1x8x16x128xbf16> to vector<8x16x128xbf16>
    %219 = vector.shape_cast %218 : vector<8x16x128xbf16> to vector<128x128xbf16>
    %220 = arith.extf %219 : vector<128x128xbf16> to vector<128x128xf32>
    %221 = arith.addf %216, %220 : vector<128x128xf32>
    %222 = vector.shape_cast %221 : vector<128x128xf32> to vector<8x16x128xf32>
    %c0_116 = arith.constant 0 : index
    %c8_117 = arith.constant 8 : index
    %c0_118 = arith.constant 0 : index
    %c0_119 = arith.constant 0 : index
    %223 = vector.load %arg8[%c0_116, %c8_117, %c0_118, %c0_119] : memref<1x16x16x128xf32, #tpu.memory_space<vmem>>, vector<1x8x16x128xf32>
    %224 = vector.shape_cast %223 : vector<1x8x16x128xf32> to vector<8x16x128xf32>
    %225 = vector.shape_cast %222 : vector<8x16x128xf32> to vector<1x8x16x128xf32>
    tpu.vector_store %arg8[%c0_116, %c8_117, %c0_118, %c0_119], %225 {strides = array<i32>} : memref<1x16x16x128xf32, #tpu.memory_space<vmem>>, vector<1x8x16x128xf32>,
    return
  }
  func.func @transform_0(%arg0: i32) -> (i32, i32, i32, i32) {
    %c0_i32 = arith.constant 0 : i32
    %c0_i32_0 = arith.constant 0 : i32
    %c0_i32_1 = arith.constant 0 : i32
    %c0_i32_2 = arith.constant 0 : i32
    return %arg0, %c0_i32, %c0_i32_0, %c0_i32_1 : i32, i32, i32, i32
  }
  func.func @transform_1(%arg0: i32) -> (i32, i32) {
    %c0_i32 = arith.constant 0 : i32
    %c0_i32_0 = arith.constant 0 : i32
    %c0_i32_1 = arith.constant 0 : i32
    return %c0_i32, %c0_i32_0 : i32, i32
  }
  func.func @transform_2(%arg0: i32) -> (i32, i32) {
    %c0_i32 = arith.constant 0 : i32
    %c0_i32_0 = arith.constant 0 : i32
    %c0_i32_1 = arith.constant 0 : i32
    return %c0_i32, %c0_i32_0 : i32, i32
  }
  func.func @transform_3(%arg0: i32) -> (i32, i32, i32) {
    %c0_i32 = arith.constant 0 : i32
    %c0_i32_0 = arith.constant 0 : i32
    %c0_i32_1 = arith.constant 0 : i32
    %c0_i32_2 = arith.constant 0 : i32
    return %c0_i32, %c0_i32_0, %c0_i32_1 : i32, i32, i32
  }
  func.func @transform_4(%arg0: i32) -> (i32, i32, i32) {
    %c0_i32 = arith.constant 0 : i32
    %c0_i32_0 = arith.constant 0 : i32
    %c0_i32_1 = arith.constant 0 : i32
    %c0_i32_2 = arith.constant 0 : i32
    return %c0_i32, %c0_i32_0, %c0_i32_1 : i32, i32, i32
  }
  func.func @transform_5(%arg0: i32) -> (i32, i32) {
    %c0_i32 = arith.constant 0 : i32
    %c0_i32_0 = arith.constant 0 : i32
    %c0_i32_1 = arith.constant 0 : i32
    return %c0_i32, %c0_i32_0 : i32, i32
  }
  func.func @transform_6(%arg0: i32) -> (i32, i32) {
    %c0_i32 = arith.constant 0 : i32
    %c0_i32_0 = arith.constant 0 : i32
    %c0_i32_1 = arith.constant 0 : i32
    return %c0_i32, %c0_i32_0 : i32, i32
  }
  func.func @transform_7(%arg0: i32) -> (i32, i32, i32, i32) {
    %c0_i32 = arith.constant 0 : i32
    %c0_i32_0 = arith.constant 0 : i32
    %c0_i32_1 = arith.constant 0 : i32
    %c0_i32_2 = arith.constant 0 : i32
    return %arg0, %c0_i32, %c0_i32_0, %c0_i32_1 : i32, i32, i32, i32
  }
}

</mosaic_0001>

<llo_original>
// kernel: tpu_custom_call.1
$region0: #{tpu_custom_call.1}
  #allocation0 [shape = 'u32[]', space=smem, size = 0x4, offset = 0x4, fixed_abs, tag = 'smem constant byte address 0x4 - core index']
  #allocation1 [shape = 'u32[72,128]{1,0:T(1,128)}', space=vmem, size = 0x9000, scoped, tag = 'internal scratch']
  #allocation2 [shape = 'bf16[18,18,128]{2,1,0:T(8,128)(2,1)}', space=vmem, size = 0x1b000, scoped, tag = 'scratch operand']
  %s0 = inlined_call_operand.hbm [shape: bf16[2,16,16,128], index: 0, kind: input, shape index: {}]
  %s1 = inlined_call_operand.hbm [shape: bf16[128,128], index: 1, kind: input, shape index: {}]
  %s2 = inlined_call_operand.vmem [shape: f32[1,128], index: 2, kind: input, shape index: {}]
  %s3 = inlined_call_operand.hbm [shape: f32[3,3,128], index: 3, kind: input, shape index: {}]
  %s4 = inlined_call_operand.vmem [shape: f32[1,1,128], index: 4, kind: input, shape index: {}]
  %s5 = inlined_call_operand.hbm [shape: bf16[128,128], index: 5, kind: input, shape index: {}]
  %s6 = inlined_call_operand.vmem [shape: f32[1,128], index: 6, kind: input, shape index: {}]
  %s7 = inlined_call_operand.hbm [shape: f32[2,16,16,128], index: 7, kind: output, shape index: {}]
  %s8 = sld [smem:[#allocation0]]
  $region77: #{tpu_custom_call.1} parent=0
    _
  %s10 = ssub.s32 1, %s8
  %s11 = scalar_select 0, %s10, %s8
  $region1: #{tpu_custom_call.1} parent=0
    #allocation3 [shape = 'u8[131072]{0}', space=vmem, size = 0x20000, scoped, tag = 'input window, operand 0']
    #allocation4 [shape = 's32[2]{0}', space=sflag, size = 0x8, scoped, tag = 'scoped memory for tpu_custom_call.1']
    #allocation5 [shape = 's32[2]{0}', space=sflag, size = 0x8, scoped, tag = 'scoped memory for tpu_custom_call.1']
    #allocation6 [shape = 'u8[32768]{0}', space=vmem, size = 0x8000, scoped, tag = 'input window, operand 1, single buffered']
    #allocation7 [shape = 's32[1]{0}', space=sflag, size = 0x4, scoped, tag = 'scoped memory for tpu_custom_call.1']
    #allocation8 [shape = 'u8[6144]{0}', space=vmem, size = 0x1800, scoped, tag = 'input window, operand 3, single buffered']
    #allocation9 [shape = 'u8[32768]{0}', space=vmem, size = 0x8000, scoped, tag = 'input window, operand 5, single buffered']
    #allocation10 [shape = 's32[1]{0}', space=sflag, size = 0x4, scoped, tag = 'scoped memory for tpu_custom_call.1']
    #allocation11 [shape = 'u8[262144]{0}', space=vmem, size = 0x40000, scoped, tag = 'output window, operand 0']
    %12 = vsyncpa [#allocation4], 0
    %s13 = scalar_lea.sflag [#allocation4], 1
    %14 = vsyncpa %s13, 0
    %15 = vsyncpa [#allocation7], 0
    %16 = vsyncpa [#allocation10], 0
    %17 = vsyncpa [#allocation5], 0
    %s18 = scalar_lea.sflag [#allocation5], 1
    %19 = vsyncpa %s18, 0
    loop: start=0, step=1, limit=4
    $region2: #{tpu_custom_call.1} parent=1 // loop_pre_header
      _
    $region3: #{tpu_custom_call.1} parent=1 // loop_header
      %s21 = sphi 0, %s25
      %p22 = scmp.ge.s32.totalorder %s21, 4
      %s31 = sphi 0, %s33
      %s34 = sphi 0, %s31
      %s35 = sphi 0, %s34
      %s51 = sphi 0, %s35
      %s55 = sphi 0, %s55
      %s57 = sphi 0, %s55
      %s58 = sphi 0, %s57
      %s72 = sphi 0, %s58
      %s76 = sphi 0, %s76
      %s78 = sphi 0, %s76
      %s79 = sphi 0, %s78
      %s93 = sphi 0, %s79
      %s97 = sphi 0, %s97
      %s99 = sphi 0, %s97
      %s100 = sphi 0, %s99
      %s114 = sphi 0, %s100
      %s118 = sphi 0, %s118
      %s120 = sphi 0, %s118
      %s121 = sphi 0, %s120
      %s135 = sphi 0, %s121
      %s139 = sphi 0, %s139
      %s141 = sphi 0, %s139
      %s142 = sphi 0, %s141
      %s156 = sphi 0, %s142
      %s160 = sphi 0, %s160
      %s162 = sphi 0, %s160
      %s163 = sphi 0, %s162
      %s177 = sphi 0, %s163
      %s183 = sphi 0, %s185
      %s186 = sphi 0, %s183
      %s187 = sphi 0, %s186
      %s203 = sphi 0, %s187
    $region4: #{tpu_custom_call.1} parent=1 // loop_header_branch
      %24 = sbr.rel (%p22) target = $region8
    $region5: #{tpu_custom_call.1} parent=1 // loop_body
      %s26 = ssub.s32 %s21, 1
      %s27 = ssub.s32 %s21, 2
      %s28 = sadd.s32 %s21, 1
      %s29 = ssub.s32 %s21, %s28
      %p30 = scmp.eq.s32.totalorder %s29, 0
      %s32 = sadd.s32 %s31, 1
      %s33 = scalar_select %p30, %s31, %s32
      %p36 = pneg %p30
      %p37 = scmp.eq.s32.totalorder %s21, 1
      %p38 = por %p36, %p37
      %p39 = scmp.ne.s32.totalorder %s31, %s34
      %p40 = scmp.eq.s32.totalorder %s21, 0
      %p41 = por %p39, %p40
      %p42 = scmp.ne.s32.totalorder %s31, %s34
      %p43 = scmp.eq.s32.totalorder %s26, 1
      %p44 = por %p42, %p43
      %p45 = scmp.ne.s32.totalorder %s34, %s35
      %p46 = scmp.eq.s32.totalorder %s26, 0
      %p47 = por %p45, %p46
      %p48 = scmp.ne.s32.totalorder %s34, %s35
      %p49 = scmp.eq.s32.totalorder %s27, 1
      %p50 = por %p48, %p49
      %p52 = scmp.ne.s32.totalorder %s35, %s51
      %p53 = scmp.eq.s32.totalorder %s27, 0
      %p54 = por %p52, %p53
      %s56 = sadd.s32 %s55, 1
      %p59 = scmp.eq.s32.totalorder %s21, 1
      %p60 = scmp.ne.s32.totalorder %s55, %s57
      %p61 = scmp.eq.s32.totalorder %s21, 0
      %p62 = por %p60, %p61
      %p63 = scmp.ne.s32.totalorder %s55, %s57
      %p64 = scmp.eq.s32.totalorder %s26, 1
      %p65 = por %p63, %p64
      %p66 = scmp.ne.s32.totalorder %s57, %s58
      %p67 = scmp.eq.s32.totalorder %s26, 0
      %p68 = por %p66, %p67
      %p69 = scmp.ne.s32.totalorder %s57, %s58
      %p70 = scmp.eq.s32.totalorder %s27, 1
      %p71 = por %p69, %p70
      %p73 = scmp.ne.s32.totalorder %s58, %s72
      %p74 = scmp.eq.s32.totalorder %s27, 0
      %p75 = por %p73, %p74
      %s77 = sadd.s32 %s76, 1
      %p80 = scmp.eq.s32.totalorder %s21, 1
      %p81 = scmp.ne.s32.totalorder %s76, %s78
      %p82 = scmp.eq.s32.totalorder %s21, 0
      %p83 = por %p81, %p82
      %p84 = scmp.ne.s32.totalorder %s76, %s78
      %p85 = scmp.eq.s32.totalorder %s26, 1
      %p86 = por %p84, %p85
      %p87 = scmp.ne.s32.totalorder %s78, %s79
      %p88 = scmp.eq.s32.totalorder %s26, 0
      %p89 = por %p87, %p88
      %p90 = scmp.ne.s32.totalorder %s78, %s79
      %p91 = scmp.eq.s32.totalorder %s27, 1
      %p92 = por %p90, %p91
      %p94 = scmp.ne.s32.totalorder %s79, %s93
      %p95 = scmp.eq.s32.totalorder %s27, 0
      %p96 = por %p94, %p95
      %s98 = sadd.s32 %s97, 1
      %p101 = scmp.eq.s32.totalorder %s21, 1
      %p102 = scmp.ne.s32.totalorder %s97, %s99
      %p103 = scmp.eq.s32.totalorder %s21, 0
      %p104 = por %p102, %p103
      %p105 = scmp.ne.s32.totalorder %s97, %s99
      %p106 = scmp.eq.s32.totalorder %s26, 1
      %p107 = por %p105, %p106
      %p108 = scmp.ne.s32.totalorder %s99, %s100
      %p109 = scmp.eq.s32.totalorder %s26, 0
      %p110 = por %p108, %p109
      %p111 = scmp.ne.s32.totalorder %s99, %s100
      %p112 = scmp.eq.s32.totalorder %s27, 1
      %p113 = por %p111, %p112
      %p115 = scmp.ne.s32.totalorder %s100, %s114
      %p116 = scmp.eq.s32.totalorder %s27, 0
      %p117 = por %p115, %p116
      %s119 = sadd.s32 %s118, 1
      %p122 = scmp.eq.s32.totalorder %s21, 1
      %p123 = scmp.ne.s32.totalorder %s118, %s120
      %p124 = scmp.eq.s32.totalorder %s21, 0
      %p125 = por %p123, %p124
      %p126 = scmp.ne.s32.totalorder %s118, %s120
      %p127 = scmp.eq.s32.totalorder %s26, 1
      %p128 = por %p126, %p127
      %p129 = scmp.ne.s32.totalorder %s120, %s121
      %p130 = scmp.eq.s32.totalorder %s26, 0
      %p131 = por %p129, %p130
      %p132 = scmp.ne.s32.totalorder %s120, %s121
      %p133 = scmp.eq.s32.totalorder %s27, 1
      %p134 = por %p132, %p133
      %p136 = scmp.ne.s32.totalorder %s121, %s135
      %p137 = scmp.eq.s32.totalorder %s27, 0
      %p138 = por %p136, %p137
      %s140 = sadd.s32 %s139, 1
      %p143 = scmp.eq.s32.totalorder %s21, 1
      %p144 = scmp.ne.s32.totalorder %s139, %s141
      %p145 = scmp.eq.s32.totalorder %s21, 0
      %p146 = por %p144, %p145
      %p147 = scmp.ne.s32.totalorder %s139, %s141
      %p148 = scmp.eq.s32.totalorder %s26, 1
      %p149 = por %p147, %p148
      %p150 = scmp.ne.s32.totalorder %s141, %s142
      %p151 = scmp.eq.s32.totalorder %s26, 0
      %p152 = por %p150, %p151
      %p153 = scmp.ne.s32.totalorder %s141, %s142
      %p154 = scmp.eq.s32.totalorder %s27, 1
      %p155 = por %p153, %p154
      %p157 = scmp.ne.s32.totalorder %s142, %s156
      %p158 = scmp.eq.s32.totalorder %s27, 0
      %p159 = por %p157, %p158
      %s161 = sadd.s32 %s160, 1
      %p164 = scmp.eq.s32.totalorder %s21, 1
      %p165 = scmp.ne.s32.totalorder %s160, %s162
      %p166 = scmp.eq.s32.totalorder %s21, 0
      %p167 = por %p165, %p166
      %p168 = scmp.ne.s32.totalorder %s160, %s162
      %p169 = scmp.eq.s32.totalorder %s26, 1
      %p170 = por %p168, %p169
      %p171 = scmp.ne.s32.totalorder %s162, %s163
      %p172 = scmp.eq.s32.totalorder %s26, 0
      %p173 = por %p171, %p172
      %p174 = scmp.ne.s32.totalorder %s162, %s163
      %p175 = scmp.eq.s32.totalorder %s27, 1
      %p176 = por %p174, %p175
      %p178 = scmp.ne.s32.totalorder %s163, %s177
      %p179 = scmp.eq.s32.totalorder %s27, 0
      %p180 = por %p178, %p179
      %s181 = ssub.s32 %s21, %s28
      %p182 = scmp.eq.s32.totalorder %s181, 0
      %s184 = sadd.s32 %s183, 1
      %s185 = scalar_select %p182, %s183, %s184
      %p188 = pneg %p182
      %p189 = scmp.eq.s32.totalorder %s21, 1
      %p190 = por %p188, %p189
      %p191 = scmp.ne.s32.totalorder %s183, %s186
      %p192 = scmp.eq.s32.totalorder %s21, 0
      %p193 = por %p191, %p192
      %p194 = scmp.ne.s32.totalorder %s183, %s186
      %p195 = scmp.eq.s32.totalorder %s26, 1
      %p196 = por %p194, %p195
      %p197 = scmp.ne.s32.totalorder %s186, %s187
      %p198 = scmp.eq.s32.totalorder %s26, 0
      %p199 = por %p197, %p198
      %p200 = scmp.ne.s32.totalorder %s186, %s187
      %p201 = scmp.eq.s32.totalorder %s27, 1
      %p202 = por %p200, %p201
      %p204 = scmp.ne.s32.totalorder %s187, %s203
      %p205 = scmp.eq.s32.totalorder %s27, 0
      %p206 = por %p204, %p205
      %p207 = scmp.le.s32.totalorder 1, %s21
      %p208 = scmp.lt.s32.totalorder %s21, 3
      %p209 = pnand %p207, %p208
      %p210 = pneg %p209
      // Predicated region
      $region9: #{tpu_custom_call.1} parent=5 // pred_check
        _
      $region10: #{tpu_custom_call.1} parent=5 // pred_check_branch
        %212 = sbr.rel (%p209) target = $region12
      $region11: #{tpu_custom_call.1} parent=5 // pred_region
        %s213 = ssub.s32 %s21, 1
        // Predicated region
        $region13: #{tpu_custom_call.1} parent=11 // pred_check
          %p214 = pneg %p68
        $region14: #{tpu_custom_call.1} parent=11 // pred_check_branch
          %216 = sbr.rel (%p214) target = $region16
        $region15: #{tpu_custom_call.1} parent=11 // pred_region
          %218 = vsyncadd [#allocation7], 0
          %s219 = sshll.u32 %s1, 4
          %s220 = int_to_ptr.hbm [resolvable:$true] %s219
          %s221 = sshll.u32 [#allocation6], 4
          %s222 = int_to_ptr.vmem [resolvable:$true] %s221
          %227 = dma.hbm_to_vmem [thread:$0]  %s220, 1024, %s222, [#allocation7], 64, 64, 4
        $region16: #{tpu_custom_call.1} parent=11 // pred_fallthru
          _
        // Predicated region
        $region17: #{tpu_custom_call.1} parent=11 // pred_check
          %p228 = pneg %p89
        $region18: #{tpu_custom_call.1} parent=11 // pred_check_branch
          %230 = sbr.rel (%p228) target = $region20
        $region19: #{tpu_custom_call.1} parent=11 // pred_region
          _
        $region20: #{tpu_custom_call.1} parent=11 // pred_fallthru
          _
        // Predicated region
        $region21: #{tpu_custom_call.1} parent=11 // pred_check
          %p231 = pneg %p110
        $region22: #{tpu_custom_call.1} parent=11 // pred_check_branch
          %233 = sbr.rel (%p231) target = $region24
        $region23: #{tpu_custom_call.1} parent=11 // pred_region
          %235 = vsyncadd [#allocation7], 0
          %s236 = sshll.u32 %s3, 4
          %s237 = int_to_ptr.hbm [resolvable:$true] %s236
          %s238 = sshll.u32 [#allocation8], 4
          %s239 = int_to_ptr.vmem [resolvable:$true] %s238
          %244 = dma.hbm_to_vmem [thread:$0]  %s237, 192, %s239, [#allocation7], 64, 64, 4
        $region24: #{tpu_custom_call.1} parent=11 // pred_fallthru
          _
        // Predicated region
        $region25: #{tpu_custom_call.1} parent=11 // pred_check
          %p245 = pneg %p131
        $region26: #{tpu_custom_call.1} parent=11 // pred_check_branch
          %247 = sbr.rel (%p245) target = $region28
        $region27: #{tpu_custom_call.1} parent=11 // pred_region
          _
        $region28: #{tpu_custom_call.1} parent=11 // pred_fallthru
          _
        // Predicated region
        $region29: #{tpu_custom_call.1} parent=11 // pred_check
          %p248 = pneg %p152
        $region30: #{tpu_custom_call.1} parent=11 // pred_check_branch
          %250 = sbr.rel (%p248) target = $region32
        $region31: #{tpu_custom_call.1} parent=11 // pred_region
          %252 = vsyncadd [#allocation10], 0
          %s253 = sshll.u32 %s5, 4
          %s254 = int_to_ptr.hbm [resolvable:$true] %s253
          %s255 = sshll.u32 [#allocation9], 4
          %s256 = int_to_ptr.vmem [resolvable:$true] %s255
          %261 = dma.hbm_to_vmem [thread:$0]  %s254, 1024, %s256, [#allocation10], 64, 64, 4
        $region32: #{tpu_custom_call.1} parent=11 // pred_fallthru
          _
        // Predicated region
        $region33: #{tpu_custom_call.1} parent=11 // pred_check
          %p262 = pneg %p173
        $region34: #{tpu_custom_call.1} parent=11 // pred_check_branch
          %264 = sbr.rel (%p262) target = $region36
        $region35: #{tpu_custom_call.1} parent=11 // pred_region
          _
        $region36: #{tpu_custom_call.1} parent=11 // pred_fallthru
          _
      $region12: #{tpu_custom_call.1} parent=5 // pred_fallthru
        _
      %p265 = scmp.lt.s32.totalorder %s21, 2
      // Predicated region
      $region37: #{tpu_custom_call.1} parent=5 // pred_check
        %p266 = pneg %p265
      $region38: #{tpu_custom_call.1} parent=5 // pred_check_branch
        %268 = sbr.rel (%p266) target = $region40
      $region39: #{tpu_custom_call.1} parent=5 // pred_region
        // Predicated region
        $region41: #{tpu_custom_call.1} parent=39 // pred_check
          %p269 = pneg %p41
        $region42: #{tpu_custom_call.1} parent=39 // pred_check_branch
          %271 = sbr.rel (%p269) target = $region44
        $region43: #{tpu_custom_call.1} parent=39 // pred_region
          %s272 = sand.u32 %s31, 1
          %s273 = scalar_lea.sflag [#allocation4], %s272
          %s274 = sand.u32 %s31, 1
          %s275 = smul.addr %s274, 128
          %s276 = scalar_lea.vmem [#allocation3], %s275
          %278 = vsyncadd %s273, 0
          %s279 = smul.addr %s21, 32
          %s280 = smul.addr %s279, 4
          %s281 = scalar_lea.hbm %s0, %s280
          %s282 = sshll.u32 %s281, 4
          %s283 = int_to_ptr.hbm [resolvable:$true] %s282
          %s284 = sshll.u32 %s276, 4
          %s285 = int_to_ptr.vmem [resolvable:$true] %s284
          %290 = dma.hbm_to_vmem [thread:$0]  %s283, 2048, %s285, %s273, 64, 64, 4
        $region44: #{tpu_custom_call.1} parent=39 // pred_fallthru
          _
      $region40: #{tpu_custom_call.1} parent=5 // pred_fallthru
        _
      %p291 = scmp.le.s32.totalorder 1, %s21
      %p292 = scmp.lt.s32.totalorder %s21, 3
      %p293 = pnand %p291, %p292
      %p294 = pneg %p293
      // Predicated region
      $region45: #{tpu_custom_call.1} parent=5 // pred_check
        _
      $region46: #{tpu_custom_call.1} parent=5 // pred_check_branch
        %296 = sbr.rel (%p293) target = $region48
      $region47: #{tpu_custom_call.1} parent=5 // pred_region
        %s297 = ssub.s32 %s21, 1
        %s298 = sand.u32 %s34, 1
        %s299 = scalar_lea.sflag [#allocation4], %s298
        %s300 = sand.u32 %s34, 1
        %s301 = smul.addr %s300, 128
        %s302 = scalar_lea.vmem [#allocation3], %s301
        // Predicated region
        $region49: #{tpu_custom_call.1} parent=47 // pred_check
          %p303 = pneg %p47
        $region50: #{tpu_custom_call.1} parent=47 // pred_check_branch
          %305 = sbr.rel (%p303) target = $region52
        $region51: #{tpu_custom_call.1} parent=47 // pred_region
          %307 = dma.done %s299, 2048
        $region52: #{tpu_custom_call.1} parent=47 // pred_fallthru
          _
        // Predicated region
        $region53: #{tpu_custom_call.1} parent=47 // pred_check
          %p308 = pneg %p68
        $region54: #{tpu_custom_call.1} parent=47 // pred_check_branch
          %310 = sbr.rel (%p308) target = $region56
        $region55: #{tpu_custom_call.1} parent=47 // pred_region
          %312 = dma.done [#allocation7], 1024
        $region56: #{tpu_custom_call.1} parent=47 // pred_fallthru
          _
        // Predicated region
        $region57: #{tpu_custom_call.1} parent=47 // pred_check
          %p313 = pneg %p110
        $region58: #{tpu_custom_call.1} parent=47 // pred_check_branch
          %315 = sbr.rel (%p313) target = $region60
        $region59: #{tpu_custom_call.1} parent=47 // pred_region
          %317 = dma.done [#allocation7], 192
        $region60: #{tpu_custom_call.1} parent=47 // pred_fallthru
          _
        // Predicated region
        $region61: #{tpu_custom_call.1} parent=47 // pred_check
          %p318 = pneg %p152
        $region62: #{tpu_custom_call.1} parent=47 // pred_check_branch
          %320 = sbr.rel (%p318) target = $region64
        $region63: #{tpu_custom_call.1} parent=47 // pred_region
          %322 = dma.done [#allocation10], 1024
        $region64: #{tpu_custom_call.1} parent=47 // pred_fallthru
          _
        %s323 = sand.u32 %s34, 1
        %s324 = scalar_lea.sflag [#allocation4], %s323
        %s325 = sand.u32 %s34, 1
        %s326 = smul.addr %s325, 128
        %s327 = scalar_lea.vmem [#allocation3], %s326
        %p328 = pneg %p47
        %p329 = pneg %p44
        %p330 = pneg %p68
        %p331 = pneg %p65
        %p332 = pneg %p89
        %p333 = pneg %p86
        %p334 = pneg %p110
        %p335 = pneg %p107
        %p336 = pneg %p131
        %p337 = pneg %p128
        %p338 = pneg %p152
        %p339 = pneg %p149
        %p340 = pneg %p173
        %p341 = pneg %p170
        %p342 = pneg %p199
        %p343 = pneg %p196
        %s344 = sand.u32 %s186, 1
        %s345 = scalar_lea.sflag [#allocation5], %s344
        %s346 = sand.u32 %s186, 1
        %s347 = smul.addr %s346, 256
        %s348 = scalar_lea.vmem [#allocation11], %s347
        %v350 = vld [vmem:[#allocation8] sm:$0x7]
        %v351 = vld [vmem:[#allocation8 + $0x4] sm:$0x7]
        %v352 = vld [vmem:[#allocation8 + $0x8] sm:$0x7]
        %v353 = vld [vmem:[%s4] sm:$0x1]
        %v354 = vld [vmem:[#allocation9] sm:$0xf]
        %v355 = vld [vmem:[#allocation9 + $0x4] sm:$0xf]
        %v356 = vld [vmem:[#allocation9 + $0x8] sm:$0xf]
        %v357 = vld [vmem:[#allocation9 + $0xc] sm:$0xf]
        %v358 = vld [vmem:[#allocation9 + $0x10] sm:$0xf]
        %v359 = vld [vmem:[#allocation9 + $0x14] sm:$0xf]
        %v360 = vld [vmem:[#allocation9 + $0x18] sm:$0xf]
        %v361 = vld [vmem:[#allocation9 + $0x1c] sm:$0xf]
        %v362 = vld [vmem:[#allocation9 + $0x20] sm:$0xf]
        %v363 = vld [vmem:[#allocation9 + $0x24] sm:$0xf]
        %v364 = vld [vmem:[#allocation9 + $0x28] sm:$0xf]
        %v365 = vld [vmem:[#allocation9 + $0x2c] sm:$0xf]
        %v366 = vld [vmem:[#allocation9 + $0x30] sm:$0xf]
        %v367 = vld [vmem:[#allocation9 + $0x34] sm:$0xf]
        %v368 = vld [vmem:[#allocation9 + $0x38] sm:$0xf]
        %v369 = vld [vmem:[#allocation9 + $0x3c] sm:$0xf]
        %v370 = vld [vmem:[%s6] sm:$0x1]
        %vm371 = vcmask 1040384
        %vm372 = vsmask.f32 256
        %vm373 = vmand %vm371, %vm372
        %v374 = vld [vmem:[#allocation2] sm:$0x1]
        %v375 = vsel %vm373, 0, %v374
        %376 = vst [vmem:[#allocation2] sm:$0x1] %v375
        %v377 = vld [vmem:[#allocation2 + $0xc] sm:$0x1]
        %v378 = vsel %vm373, 0, %v377
        %379 = vst [vmem:[#allocation2 + $0xc] sm:$0x1] %v378
        %v380 = vld [vmem:[#allocation2 + $0x18] sm:$0x1]
        %v381 = vsel %vm373, 0, %v380
        %382 = vst [vmem:[#allocation2 + $0x18] sm:$0x1] %v381
        %v383 = vld [vmem:[#allocation2 + $0x24] sm:$0x1]
        %v384 = vsel %vm373, 0, %v383
        %385 = vst [vmem:[#allocation2 + $0x24] sm:$0x1] %v384
        %v386 = vld [vmem:[#allocation2 + $0x30] sm:$0x1]
        %v387 = vsel %vm373, 0, %v386
        %388 = vst [vmem:[#allocation2 + $0x30] sm:$0x1] %v387
        %v389 = vld [vmem:[#allocation2 + $0x3c] sm:$0x1]
        %v390 = vsel %vm373, 0, %v389
        %391 = vst [vmem:[#allocation2 + $0x3c] sm:$0x1] %v390
        %v392 = vld [vmem:[#allocation2 + $0x48] sm:$0x1]
        %v393 = vsel %vm373, 0, %v392
        %394 = vst [vmem:[#allocation2 + $0x48] sm:$0x1] %v393
        %v395 = vld [vmem:[#allocation2 + $0x54] sm:$0x1]
        %v396 = vsel %vm373, 0, %v395
        %397 = vst [vmem:[#allocation2 + $0x54] sm:$0x1] %v396
        %v398 = vld [vmem:[#allocation2 + $0x60] sm:$0x1]
        %v399 = vsel %vm373, 0, %v398
        %400 = vst [vmem:[#allocation2 + $0x60] sm:$0x1] %v399
        %v401 = vld [vmem:[#allocation2 + $0x6c] sm:$0x1]
        %v402 = vsel %vm373, 0, %v401
        %403 = vst [vmem:[#allocation2 + $0x6c] sm:$0x1] %v402
        %v404 = vld [vmem:[#allocation2 + $0x78] sm:$0x1]
        %v405 = vsel %vm373, 0, %v404
        %406 = vst [vmem:[#allocation2 + $0x78] sm:$0x1] %v405
        %v407 = vld [vmem:[#allocation2 + $0x84] sm:$0x1]
        %v408 = vsel %vm373, 0, %v407
        %409 = vst [vmem:[#allocation2 + $0x84] sm:$0x1] %v408
        %v410 = vld [vmem:[#allocation2 + $0x90] sm:$0x1]
        %v411 = vsel %vm373, 0, %v410
        %412 = vst [vmem:[#allocation2 + $0x90] sm:$0x1] %v411
        %v413 = vld [vmem:[#allocation2 + $0x9c] sm:$0x1]
        %v414 = vsel %vm373, 0, %v413
        %415 = vst [vmem:[#allocation2 + $0x9c] sm:$0x1] %v414
        %v416 = vld [vmem:[#allocation2 + $0xa8] sm:$0x1]
        %v417 = vsel %vm373, 0, %v416
        %418 = vst [vmem:[#allocation2 + $0xa8] sm:$0x1] %v417
        %v419 = vld [vmem:[#allocation2 + $0xb4] sm:$0x1]
        %v420 = vsel %vm373, 0, %v419
        %421 = vst [vmem:[#allocation2 + $0xb4] sm:$0x1] %v420
        %v422 = vld [vmem:[#allocation2 + $0xc0] sm:$0x1]
        %v423 = vsel %vm373, 0, %v422
        %424 = vst [vmem:[#allocation2 + $0xc0] sm:$0x1] %v423
        %v425 = vld [vmem:[#allocation2 + $0xcc] sm:$0x1]
        %v426 = vsel %vm373, 0, %v425
        %427 = vst [vmem:[#allocation2 + $0xcc] sm:$0x1] %v426
        %vm428 = vsmask.f32 7938
        %vm429 = vmand %vm371, %vm428
        %v430 = vld [vmem:[#allocation2 + $0x8] sm:$0x1]
        %v431 = vsel %vm429, 0, %v430
        %432 = vst [vmem:[#allocation2 + $0x8] sm:$0x1] %v431
        %v433 = vld [vmem:[#allocation2 + $0x14] sm:$0x1]
        %v434 = vsel %vm429, 0, %v433
        %435 = vst [vmem:[#allocation2 + $0x14] sm:$0x1] %v434
        %v436 = vld [vmem:[#allocation2 + $0x20] sm:$0x1]
        %v437 = vsel %vm429, 0, %v436
        %438 = vst [vmem:[#allocation2 + $0x20] sm:$0x1] %v437
        %v439 = vld [vmem:[#allocation2 + $0x2c] sm:$0x1]
        %v440 = vsel %vm429, 0, %v439
        %441 = vst [vmem:[#allocation2 + $0x2c] sm:$0x1] %v440
        %v442 = vld [vmem:[#allocation2 + $0x38] sm:$0x1]
        %v443 = vsel %vm429, 0, %v442
        %444 = vst [vmem:[#allocation2 + $0x38] sm:$0x1] %v443
        %v445 = vld [vmem:[#allocation2 + $0x44] sm:$0x1]
        %v446 = vsel %vm429, 0, %v445
        %447 = vst [vmem:[#allocation2 + $0x44] sm:$0x1] %v446
        %v448 = vld [vmem:[#allocation2 + $0x50] sm:$0x1]
        %v449 = vsel %vm429, 0, %v448
        %450 = vst [vmem:[#allocation2 + $0x50] sm:$0x1] %v449
        %v451 = vld [vmem:[#allocation2 + $0x5c] sm:$0x1]
        %v452 = vsel %vm429, 0, %v451
        %453 = vst [vmem:[#allocation2 + $0x5c] sm:$0x1] %v452
        %v454 = vld [vmem:[#allocation2 + $0x68] sm:$0x1]
        %v455 = vsel %vm429, 0, %v454
        %456 = vst [vmem:[#allocation2 + $0x68] sm:$0x1] %v455
        %v457 = vld [vmem:[#allocation2 + $0x74] sm:$0x1]
        %v458 = vsel %vm429, 0, %v457
        %459 = vst [vmem:[#allocation2 + $0x74] sm:$0x1] %v458
        %v460 = vld [vmem:[#allocation2 + $0x80] sm:$0x1]
        %v461 = vsel %vm429, 0, %v460
        %462 = vst [vmem:[#allocation2 + $0x80] sm:$0x1] %v461
        %v463 = vld [vmem:[#allocation2 + $0x8c] sm:$0x1]
        %v464 = vsel %vm429, 0, %v463
        %465 = vst [vmem:[#allocation2 + $0x8c] sm:$0x1] %v464
        %v466 = vld [vmem:[#allocation2 + $0x98] sm:$0x1]
        %v467 = vsel %vm429, 0, %v466
        %468 = vst [vmem:[#allocation2 + $0x98] sm:$0x1] %v467
        %v469 = vld [vmem:[#allocation2 + $0xa4] sm:$0x1]
        %v470 = vsel %vm429, 0, %v469
        %471 = vst [vmem:[#allocation2 + $0xa4] sm:$0x1] %v470
        %v472 = vld [vmem:[#allocation2 + $0xb0] sm:$0x1]
        %v473 = vsel %vm429, 0, %v472
        %474 = vst [vmem:[#allocation2 + $0xb0] sm:$0x1] %v473
        %v475 = vld [vmem:[#allocation2 + $0xbc] sm:$0x1]
        %v476 = vsel %vm429, 0, %v475
        %477 = vst [vmem:[#allocation2 + $0xbc] sm:$0x1] %v476
        %v478 = vld [vmem:[#allocation2 + $0xc8] sm:$0x1]
        %v479 = vsel %vm429, 0, %v478
        %480 = vst [vmem:[#allocation2 + $0xc8] sm:$0x1] %v479
        %v481 = vld [vmem:[#allocation2 + $0xd4] sm:$0x1]
        %v482 = vsel %vm429, 0, %v481
        %483 = vst [vmem:[#allocation2 + $0xd4] sm:$0x1] %v482
        %484 = vst [vmem:[#allocation2] sm:$0xf] 0
        %485 = vst [vmem:[#allocation2 + $0x4] sm:$0xf] 0
        %486 = vst [vmem:[#allocation2 + $0x8] sm:$0x1] 0
        %s487 = scalar_lea.vmem [#allocation2], 204
        %488 = vst [vmem:[%s487] sm:$0xf] 0
        %489 = vst [vmem:[%s487 + $0x4] sm:$0xf] 0
        %490 = vst [vmem:[%s487 + $0x8] sm:$0x1] 0
        %v491 = vld [vmem:[#allocation6] sm:$0xf]
        %v492 = vld [vmem:[#allocation6 + $0x4] sm:$0xf]
        %v493 = vld [vmem:[#allocation6 + $0x8] sm:$0xf]
        %v494 = vld [vmem:[#allocation6 + $0xc] sm:$0xf]
        %v495 = vld [vmem:[#allocation6 + $0x10] sm:$0xf]
        %v496 = vld [vmem:[#allocation6 + $0x14] sm:$0xf]
        %v497 = vld [vmem:[#allocation6 + $0x18] sm:$0xf]
        %v498 = vld [vmem:[#allocation6 + $0x1c] sm:$0xf]
        %v499 = vld [vmem:[#allocation6 + $0x20] sm:$0xf]
        %v500 = vld [vmem:[#allocation6 + $0x24] sm:$0xf]
        %v501 = vld [vmem:[#allocation6 + $0x28] sm:$0xf]
        %v502 = vld [vmem:[#allocation6 + $0x2c] sm:$0xf]
        %v503 = vld [vmem:[#allocation6 + $0x30] sm:$0xf]
        %v504 = vld [vmem:[#allocation6 + $0x34] sm:$0xf]
        %v505 = vld [vmem:[#allocation6 + $0x38] sm:$0xf]
        %v506 = vld [vmem:[#allocation6 + $0x3c] sm:$0xf]
        %v507 = vld [vmem:[%s2] sm:$0x1]
        %v508 = vld [vmem:[%s302] sm:$0xf]
        %v509 = vld [vmem:[%s302 + $0x4] sm:$0xf]
        %v510 = vld [vmem:[%s302 + $0x8] sm:$0xf]
        %v511 = vld [vmem:[%s302 + $0xc] sm:$0xf]
        %v512 = vld [vmem:[%s302 + $0x10] sm:$0xf]
        %v513 = vld [vmem:[%s302 + $0x14] sm:$0xf]
        %v514 = vld [vmem:[%s302 + $0x18] sm:$0xf]
        %v515 = vld [vmem:[%s302 + $0x1c] sm:$0xf]
        %v516 = vld [vmem:[%s302 + $0x20] sm:$0xf]
        %v517 = vld [vmem:[%s302 + $0x24] sm:$0xf]
        %v518 = vld [vmem:[%s302 + $0x28] sm:$0xf]
        %v519 = vld [vmem:[%s302 + $0x2c] sm:$0xf]
        %v520 = vld [vmem:[%s302 + $0x30] sm:$0xf]
        %v521 = vld [vmem:[%s302 + $0x34] sm:$0xf]
        %v522 = vld [vmem:[%s302 + $0x38] sm:$0xf]
        %v523 = vld [vmem:[%s302 + $0x3c] sm:$0xf]
        %v525 = vperm.slane %v507, 0
        %v543 = vunpack.c.l.b16 %v508
        %v544 = vunpack.c.l.b16 %v509
        %v545 = vunpack.c.l.b16 %v510
        %v546 = vunpack.c.l.b16 %v511
        %v547 = vunpack.c.l.b16 %v512
        %v548 = vunpack.c.l.b16 %v513
        %v549 = vunpack.c.l.b16 %v514
        %v550 = vunpack.c.l.b16 %v515
        %v551 = vunpack.c.l.b16 %v516
        %v552 = vunpack.c.l.b16 %v517
        %v553 = vunpack.c.l.b16 %v518
        %v554 = vunpack.c.l.b16 %v519
        %v555 = vunpack.c.l.b16 %v520
        %v556 = vunpack.c.l.b16 %v521
        %v557 = vunpack.c.l.b16 %v522
        %v558 = vunpack.c.l.b16 %v523
        %v559 = vpack.c.b16 %v544, %v543
        %v560 = vpack.c.b16 %v546, %v545
        %v561 = vpack.c.b16 %v548, %v547
        %v562 = vpack.c.b16 %v550, %v549
        %v563 = vpack.c.b16 %v552, %v551
        %v564 = vpack.c.b16 %v554, %v553
        %v565 = vpack.c.b16 %v556, %v555
        %v566 = vpack.c.b16 %v558, %v557
        %v591 = vunpack.c.l.b16 %v491
        %v592 = vunpack.c.l.b16 %v492
        %v593 = vunpack.c.l.b16 %v493
        %v594 = vunpack.c.l.b16 %v494
        %v595 = vunpack.c.l.b16 %v495
        %v596 = vunpack.c.l.b16 %v496
        %v597 = vunpack.c.l.b16 %v497
        %v598 = vunpack.c.l.b16 %v498
        %v599 = vunpack.c.l.b16 %v499
        %v600 = vunpack.c.l.b16 %v500
        %v601 = vunpack.c.l.b16 %v501
        %v602 = vunpack.c.l.b16 %v502
        %v603 = vunpack.c.l.b16 %v503
        %v604 = vunpack.c.l.b16 %v504
        %v605 = vunpack.c.l.b16 %v505
        %v606 = vunpack.c.l.b16 %v506
        %v607 = vpack.c.b16 %v592, %v591
        %v608 = vpack.c.b16 %v594, %v593
        %v609 = vpack.c.b16 %v596, %v595
        %v610 = vpack.c.b16 %v598, %v597
        %v611 = vpack.c.b16 %v600, %v599
        %v612 = vpack.c.b16 %v602, %v601
        %v613 = vpack.c.b16 %v604, %v603
        %v614 = vpack.c.b16 %v606, %v605
        %623 = vmatpush.bf16.msra.mxu0 %v614
        %624 = vmatpush.bf16.msra.mxu0 %v613
        %625 = vmatpush.bf16.msra.mxu0 %v612
        %626 = vmatpush.bf16.msra.mxu0 %v611
        %627 = vmatpush.bf16.msra.mxu0 %v610
        %628 = vmatpush.bf16.msra.mxu0 %v609
        %629 = vmatpush.bf16.msra.mxu0 %v608
        %630 = vmatpush.bf16.msra.mxu0 %v607
        %631 = vmatmul.bf16.gmra.mxu0 %v559
        %v632 = vpop.f32.mrf.mxu0
        %v633 = vadd.f32 %v525, %v632
        %v634 = vpop.f32.mrf.mxu0
        %v635 = vadd.f32 %v525, %v634
        %636 = vmatmul.bf16.gmra.mxu0 %v560
        %v637 = vpop.f32.mrf.mxu0
        %v638 = vadd.f32 %v525, %v637
        %v639 = vpop.f32.mrf.mxu0
        %v640 = vadd.f32 %v525, %v639
        %641 = vmatmul.bf16.gmra.mxu0 %v561
        %v642 = vpop.f32.mrf.mxu0
        %v643 = vadd.f32 %v525, %v642
        %v644 = vpop.f32.mrf.mxu0
        %v645 = vadd.f32 %v525, %v644
        %646 = vmatmul.bf16.gmra.mxu0 %v562
        %v647 = vpop.f32.mrf.mxu0
        %v648 = vadd.f32 %v525, %v647
        %v649 = vpop.f32.mrf.mxu0
        %v650 = vadd.f32 %v525, %v649
        %651 = vmatmul.bf16.gmra.mxu0 %v563
        %v652 = vpop.f32.mrf.mxu0
        %v653 = vadd.f32 %v525, %v652
        %v654 = vpop.f32.mrf.mxu0
        %v655 = vadd.f32 %v525, %v654
        %656 = vmatmul.bf16.gmra.mxu0 %v564
        %v657 = vpop.f32.mrf.mxu0
        %v658 = vadd.f32 %v525, %v657
        %v659 = vpop.f32.mrf.mxu0
        %v660 = vadd.f32 %v525, %v659
        %661 = vmatmul.bf16.gmra.mxu0 %v565
        %v662 = vpop.f32.mrf.mxu0
        %v663 = vadd.f32 %v525, %v662
        %v664 = vpop.f32.mrf.mxu0
        %v665 = vadd.f32 %v525, %v664
        %666 = vmatmul.bf16.gmra.mxu0 %v566
        %v667 = vpop.f32.mrf.mxu0
        %v668 = vadd.f32 %v525, %v667
        %v669 = vpop.f32.mrf.mxu0
        %v670 = vadd.f32 %v525, %v669
        %671 = vdwg.mxu0
        %v672 = vmax.f32 %v633, 0.0
        %v673 = vmax.f32 %v635, 0.0
        %v674 = vmax.f32 %v638, 0.0
        %v675 = vmax.f32 %v640, 0.0
        %v676 = vmax.f32 %v643, 0.0
        %v677 = vmax.f32 %v645, 0.0
        %v678 = vmax.f32 %v648, 0.0
        %v679 = vmax.f32 %v650, 0.0
        %v680 = vmax.f32 %v653, 0.0
        %v681 = vmax.f32 %v655, 0.0
        %v682 = vmax.f32 %v658, 0.0
        %v683 = vmax.f32 %v660, 0.0
        %v684 = vmax.f32 %v663, 0.0
        %v685 = vmax.f32 %v665, 0.0
        %v686 = vmax.f32 %v668, 0.0
        %v687 = vmax.f32 %v670, 0.0
        %v688 = vmin.f32 %v672, 6.0
        %v689 = vmin.f32 %v673, 6.0
        %v690 = vmin.f32 %v674, 6.0
        %v691 = vmin.f32 %v675, 6.0
        %v692 = vmin.f32 %v676, 6.0
        %v693 = vmin.f32 %v677, 6.0
        %v694 = vmin.f32 %v678, 6.0
        %v695 = vmin.f32 %v679, 6.0
        %v696 = vmin.f32 %v680, 6.0
        %v697 = vmin.f32 %v681, 6.0
        %v698 = vmin.f32 %v682, 6.0
        %v699 = vmin.f32 %v683, 6.0
        %v700 = vmin.f32 %v684, 6.0
        %v701 = vmin.f32 %v685, 6.0
        %v702 = vmin.f32 %v686, 6.0
        %v703 = vmin.f32 %v687, 6.0
        %v704 = vpack.c.bf16 %v688, %v688
        %v705 = vpack.c.bf16 %v689, %v689
        %v706 = vpack.c.bf16 %v690, %v690
        %v707 = vpack.c.bf16 %v691, %v691
        %v708 = vpack.c.bf16 %v692, %v692
        %v709 = vpack.c.bf16 %v693, %v693
        %v710 = vpack.c.bf16 %v694, %v694
        %v711 = vpack.c.bf16 %v695, %v695
        %v712 = vpack.c.bf16 %v696, %v696
        %v713 = vpack.c.bf16 %v697, %v697
        %v714 = vpack.c.bf16 %v698, %v698
        %v715 = vpack.c.bf16 %v699, %v699
        %v716 = vpack.c.bf16 %v700, %v700
        %v717 = vpack.c.bf16 %v701, %v701
        %v718 = vpack.c.bf16 %v702, %v702
        %v719 = vpack.c.bf16 %v703, %v703
        %vm720 = vsmask.f32 4368
        %vm721 = vmor %vm372, %vm720
        %v723 = vshrl.u32 %v704, 16
        %v725 = vrot.slane %v723, 7
        %v726 = vshll.u32 %v704, 16
        %v728 = vor.u32 %v725, %v726
        %v729 = vrot.slane %v725, 4
        %v731 = vshrl.u32 %v705, 16
        %v733 = vrot.slane %v731, 7
        %v734 = vshll.u32 %v705, 16
        %v736 = vor.u32 %v733, %v734
        %v737 = vsel %vm721, %v729, %v736
        %v738 = vrot.slane %v733, 4
        %v740 = vshrl.u32 %v706, 16
        %v742 = vrot.slane %v740, 7
        %v743 = vshll.u32 %v706, 16
        %v745 = vor.u32 %v742, %v743
        %v746 = vrot.slane %v742, 4
        %v748 = vshrl.u32 %v707, 16
        %v750 = vrot.slane %v748, 7
        %v751 = vshll.u32 %v707, 16
        %v753 = vor.u32 %v750, %v751
        %v754 = vsel %vm721, %v746, %v753
        %v755 = vrot.slane %v750, 4
        %v757 = vshrl.u32 %v708, 16
        %v759 = vrot.slane %v757, 7
        %v760 = vshll.u32 %v708, 16
        %v762 = vor.u32 %v759, %v760
        %v763 = vrot.slane %v759, 4
        %v765 = vshrl.u32 %v709, 16
        %v767 = vrot.slane %v765, 7
        %v768 = vshll.u32 %v709, 16
        %v770 = vor.u32 %v767, %v768
        %v771 = vsel %vm721, %v763, %v770
        %v772 = vrot.slane %v767, 4
        %v774 = vshrl.u32 %v710, 16
        %v776 = vrot.slane %v774, 7
        %v777 = vshll.u32 %v710, 16
        %v779 = vor.u32 %v776, %v777
        %v780 = vrot.slane %v776, 4
        %v782 = vshrl.u32 %v711, 16
        %v784 = vrot.slane %v782, 7
        %v785 = vshll.u32 %v711, 16
        %v787 = vor.u32 %v784, %v785
        %v788 = vsel %vm721, %v780, %v787
        %v789 = vrot.slane %v784, 4
        %v791 = vshrl.u32 %v712, 16
        %v793 = vrot.slane %v791, 7
        %v794 = vshll.u32 %v712, 16
        %v796 = vor.u32 %v793, %v794
        %v797 = vrot.slane %v793, 4
        %v799 = vshrl.u32 %v713, 16
        %v801 = vrot.slane %v799, 7
        %v802 = vshll.u32 %v713, 16
        %v804 = vor.u32 %v801, %v802
        %v805 = vsel %vm721, %v797, %v804
        %v806 = vrot.slane %v801, 4
        %v808 = vshrl.u32 %v714, 16
        %v810 = vrot.slane %v808, 7
        %v811 = vshll.u32 %v714, 16
        %v813 = vor.u32 %v810, %v811
        %v814 = vrot.slane %v810, 4
        %v816 = vshrl.u32 %v715, 16
        %v818 = vrot.slane %v816, 7
        %v819 = vshll.u32 %v715, 16
        %v821 = vor.u32 %v818, %v819
        %v822 = vsel %vm721, %v814, %v821
        %v823 = vrot.slane %v818, 4
        %v825 = vshrl.u32 %v716, 16
        %v827 = vrot.slane %v825, 7
        %v828 = vshll.u32 %v716, 16
        %v830 = vor.u32 %v827, %v828
        %v831 = vrot.slane %v827, 4
        %v833 = vshrl.u32 %v717, 16
        %v835 = vrot.slane %v833, 7
        %v836 = vshll.u32 %v717, 16
        %v838 = vor.u32 %v835, %v836
        %v839 = vsel %vm721, %v831, %v838
        %v840 = vrot.slane %v835, 4
        %v842 = vshrl.u32 %v718, 16
        %v844 = vrot.slane %v842, 7
        %v845 = vshll.u32 %v718, 16
        %v847 = vor.u32 %v844, %v845
        %v848 = vrot.slane %v844, 4
        %v850 = vshrl.u32 %v719, 16
        %v852 = vrot.slane %v850, 7
        %v853 = vshll.u32 %v719, 16
        %v855 = vor.u32 %v852, %v853
        %v856 = vsel %vm721, %v848, %v855
        %v857 = vrot.slane %v852, 4
        %s882 = scalar_lea.vmem [#allocation2], 12
        %vm883 = vcmask 1043456
        %vm884 = vmand %vm883, %vm428
        %v885 = vld [vmem:[%s882] sm:$0xf]
        %v886 = vsel %vm884, %v728, %v885
        %887 = vst [vmem:[%s882] sm:$0xf] %v886
        %888 = vst [vmem:[%s882 + $0x4] sm:$0xf] %v737
        %v889 = vld [vmem:[%s882 + $0x8] sm:$0x1]
        %v890 = vsel %vm373, %v738, %v889
        %891 = vst [vmem:[%s882 + $0x8] sm:$0x1] %v890
        %v892 = vld [vmem:[%s882 + $0xc] sm:$0xf]
        %v893 = vsel %vm884, %v745, %v892
        %894 = vst [vmem:[%s882 + $0xc] sm:$0xf] %v893
        %895 = vst [vmem:[%s882 + $0x10] sm:$0xf] %v754
        %v896 = vld [vmem:[%s882 + $0x14] sm:$0x1]
        %v897 = vsel %vm373, %v755, %v896
        %898 = vst [vmem:[%s882 + $0x14] sm:$0x1] %v897
        %v899 = vld [vmem:[%s882 + $0x18] sm:$0xf]
        %v900 = vsel %vm884, %v762, %v899
        %901 = vst [vmem:[%s882 + $0x18] sm:$0xf] %v900
        %902 = vst [vmem:[%s882 + $0x1c] sm:$0xf] %v771
        %v903 = vld [vmem:[%s882 + $0x20] sm:$0x1]
        %v904 = vsel %vm373, %v772, %v903
        %905 = vst [vmem:[%s882 + $0x20] sm:$0x1] %v904
        %v906 = vld [vmem:[%s882 + $0x24] sm:$0xf]
        %v907 = vsel %vm884, %v779, %v906
        %908 = vst [vmem:[%s882 + $0x24] sm:$0xf] %v907
        %909 = vst [vmem:[%s882 + $0x28] sm:$0xf] %v788
        %v910 = vld [vmem:[%s882 + $0x2c] sm:$0x1]
        %v911 = vsel %vm373, %v789, %v910
        %912 = vst [vmem:[%s882 + $0x2c] sm:$0x1] %v911
        %v913 = vld [vmem:[%s882 + $0x30] sm:$0xf]
        %v914 = vsel %vm884, %v796, %v913
        %915 = vst [vmem:[%s882 + $0x30] sm:$0xf] %v914
        %916 = vst [vmem:[%s882 + $0x34] sm:$0xf] %v805
        %v917 = vld [vmem:[%s882 + $0x38] sm:$0x1]
        %v918 = vsel %vm373, %v806, %v917
        %919 = vst [vmem:[%s882 + $0x38] sm:$0x1] %v918
        %v920 = vld [vmem:[%s882 + $0x3c] sm:$0xf]
        %v921 = vsel %vm884, %v813, %v920
        %922 = vst [vmem:[%s882 + $0x3c] sm:$0xf] %v921
        %923 = vst [vmem:[%s882 + $0x40] sm:$0xf] %v822
        %v924 = vld [vmem:[%s882 + $0x44] sm:$0x1]
        %v925 = vsel %vm373, %v823, %v924
        %926 = vst [vmem:[%s882 + $0x44] sm:$0x1] %v925
        %v927 = vld [vmem:[%s882 + $0x48] sm:$0xf]
        %v928 = vsel %vm884, %v830, %v927
        %929 = vst [vmem:[%s882 + $0x48] sm:$0xf] %v928
        %930 = vst [vmem:[%s882 + $0x4c] sm:$0xf] %v839
        %v931 = vld [vmem:[%s882 + $0x50] sm:$0x1]
        %v932 = vsel %vm373, %v840, %v931
        %933 = vst [vmem:[%s882 + $0x50] sm:$0x1] %v932
        %v934 = vld [vmem:[%s882 + $0x54] sm:$0xf]
        %v935 = vsel %vm884, %v847, %v934
        %936 = vst [vmem:[%s882 + $0x54] sm:$0xf] %v935
        %937 = vst [vmem:[%s882 + $0x58] sm:$0xf] %v856
        %v938 = vld [vmem:[%s882 + $0x5c] sm:$0x1]
        %v939 = vsel %vm373, %v857, %v938
        %940 = vst [vmem:[%s882 + $0x5c] sm:$0x1] %v939
        %s941 = scalar_lea.vmem %s302, 64 [#allocation3]
        %v942 = vld [vmem:[%s941] sm:$0xf]
        %v943 = vld [vmem:[%s941 + $0x4] sm:$0xf]
        %v944 = vld [vmem:[%s941 + $0x8] sm:$0xf]
        %v945 = vld [vmem:[%s941 + $0xc] sm:$0xf]
        %v946 = vld [vmem:[%s941 + $0x10] sm:$0xf]
        %v947 = vld [vmem:[%s941 + $0x14] sm:$0xf]
        %v948 = vld [vmem:[%s941 + $0x18] sm:$0xf]
        %v949 = vld [vmem:[%s941 + $0x1c] sm:$0xf]
        %v950 = vld [vmem:[%s941 + $0x20] sm:$0xf]
        %v951 = vld [vmem:[%s941 + $0x24] sm:$0xf]
        %v952 = vld [vmem:[%s941 + $0x28] sm:$0xf]
        %v953 = vld [vmem:[%s941 + $0x2c] sm:$0xf]
        %v954 = vld [vmem:[%s941 + $0x30] sm:$0xf]
        %v955 = vld [vmem:[%s941 + $0x34] sm:$0xf]
        %v956 = vld [vmem:[%s941 + $0x38] sm:$0xf]
        %v957 = vld [vmem:[%s941 + $0x3c] sm:$0xf]
        %v974 = vunpack.c.l.b16 %v942
        %v975 = vunpack.c.l.b16 %v943
        %v976 = vunpack.c.l.b16 %v944
        %v977 = vunpack.c.l.b16 %v945
        %v978 = vunpack.c.l.b16 %v946
        %v979 = vunpack.c.l.b16 %v947
        %v980 = vunpack.c.l.b16 %v948
        %v981 = vunpack.c.l.b16 %v949
        %v982 = vunpack.c.l.b16 %v950
        %v983 = vunpack.c.l.b16 %v951
        %v984 = vunpack.c.l.b16 %v952
        %v985 = vunpack.c.l.b16 %v953
        %v986 = vunpack.c.l.b16 %v954
        %v987 = vunpack.c.l.b16 %v955
        %v988 = vunpack.c.l.b16 %v956
        %v989 = vunpack.c.l.b16 %v957
        %v990 = vpack.c.b16 %v975, %v974
        %v991 = vpack.c.b16 %v977, %v976
        %v992 = vpack.c.b16 %v979, %v978
        %v993 = vpack.c.b16 %v981, %v980
        %v994 = vpack.c.b16 %v983, %v982
        %v995 = vpack.c.b16 %v985, %v984
        %v996 = vpack.c.b16 %v987, %v986
        %v997 = vpack.c.b16 %v989, %v988
        %1006 = vmatpush.bf16.msra.mxu0 %v614
        %1007 = vmatpush.bf16.msra.mxu0 %v613
        %1008 = vmatpush.bf16.msra.mxu0 %v612
        %1009 = vmatpush.bf16.msra.mxu0 %v611
        %1010 = vmatpush.bf16.msra.mxu0 %v610
        %1011 = vmatpush.bf16.msra.mxu0 %v609
        %1012 = vmatpush.bf16.msra.mxu0 %v608
        %1013 = vmatpush.bf16.msra.mxu0 %v607
        %1014 = vmatmul.bf16.gmra.mxu0 %v990
        %v1015 = vpop.f32.mrf.mxu0
        %v1016 = vadd.f32 %v525, %v1015
        %v1017 = vpop.f32.mrf.mxu0
        %v1018 = vadd.f32 %v525, %v1017
        %1019 = vmatmul.bf16.gmra.mxu0 %v991
        %v1020 = vpop.f32.mrf.mxu0
        %v1021 = vadd.f32 %v525, %v1020
        %v1022 = vpop.f32.mrf.mxu0
        %v1023 = vadd.f32 %v525, %v1022
        %1024 = vmatmul.bf16.gmra.mxu0 %v992
        %v1025 = vpop.f32.mrf.mxu0
        %v1026 = vadd.f32 %v525, %v1025
        %v1027 = vpop.f32.mrf.mxu0
        %v1028 = vadd.f32 %v525, %v1027
        %1029 = vmatmul.bf16.gmra.mxu0 %v993
        %v1030 = vpop.f32.mrf.mxu0
        %v1031 = vadd.f32 %v525, %v1030
        %v1032 = vpop.f32.mrf.mxu0
        %v1033 = vadd.f32 %v525, %v1032
        %1034 = vmatmul.bf16.gmra.mxu0 %v994
        %v1035 = vpop.f32.mrf.mxu0
        %v1036 = vadd.f32 %v525, %v1035
        %v1037 = vpop.f32.mrf.mxu0
        %v1038 = vadd.f32 %v525, %v1037
        %1039 = vmatmul.bf16.gmra.mxu0 %v995
        %v1040 = vpop.f32.mrf.mxu0
        %v1041 = vadd.f32 %v525, %v1040
        %v1042 = vpop.f32.mrf.mxu0
        %v1043 = vadd.f32 %v525, %v1042
        %1044 = vmatmul.bf16.gmra.mxu0 %v996
        %v1045 = vpop.f32.mrf.mxu0
        %v1046 = vadd.f32 %v525, %v1045
        %v1047 = vpop.f32.mrf.mxu0
        %v1048 = vadd.f32 %v525, %v1047
        %1049 = vmatmul.bf16.gmra.mxu0 %v997
        %v1050 = vpop.f32.mrf.mxu0
        %v1051 = vadd.f32 %v525, %v1050
        %v1052 = vpop.f32.mrf.mxu0
        %v1053 = vadd.f32 %v525, %v1052
        %1054 = vdwg.mxu0
        %v1055 = vmax.f32 %v1016, 0.0
        %v1056 = vmax.f32 %v1018, 0.0
        %v1057 = vmax.f32 %v1021, 0.0
        %v1058 = vmax.f32 %v1023, 0.0
        %v1059 = vmax.f32 %v1026, 0.0
        %v1060 = vmax.f32 %v1028, 0.0
        %v1061 = vmax.f32 %v1031, 0.0
        %v1062 = vmax.f32 %v1033, 0.0
        %v1063 = vmax.f32 %v1036, 0.0
        %v1064 = vmax.f32 %v1038, 0.0
        %v1065 = vmax.f32 %v1041, 0.0
        %v1066 = vmax.f32 %v1043, 0.0
        %v1067 = vmax.f32 %v1046, 0.0
        %v1068 = vmax.f32 %v1048, 0.0
        %v1069 = vmax.f32 %v1051, 0.0
        %v1070 = vmax.f32 %v1053, 0.0
        %v1071 = vmin.f32 %v1055, 6.0
        %v1072 = vmin.f32 %v1056, 6.0
        %v1073 = vmin.f32 %v1057, 6.0
        %v1074 = vmin.f32 %v1058, 6.0
        %v1075 = vmin.f32 %v1059, 6.0
        %v1076 = vmin.f32 %v1060, 6.0
        %v1077 = vmin.f32 %v1061, 6.0
        %v1078 = vmin.f32 %v1062, 6.0
        %v1079 = vmin.f32 %v1063, 6.0
        %v1080 = vmin.f32 %v1064, 6.0
        %v1081 = vmin.f32 %v1065, 6.0
        %v1082 = vmin.f32 %v1066, 6.0
        %v1083 = vmin.f32 %v1067, 6.0
        %v1084 = vmin.f32 %v1068, 6.0
        %v1085 = vmin.f32 %v1069, 6.0
        %v1086 = vmin.f32 %v1070, 6.0
        %v1087 = vpack.c.bf16 %v1071, %v1071
        %v1088 = vpack.c.bf16 %v1072, %v1072
        %v1089 = vpack.c.bf16 %v1073, %v1073
        %v1090 = vpack.c.bf16 %v1074, %v1074
        %v1091 = vpack.c.bf16 %v1075, %v1075
        %v1092 = vpack.c.bf16 %v1076, %v1076
        %v1093 = vpack.c.bf16 %v1077, %v1077
        %v1094 = vpack.c.bf16 %v1078, %v1078
        %v1095 = vpack.c.bf16 %v1079, %v1079
        %v1096 = vpack.c.bf16 %v1080, %v1080
        %v1097 = vpack.c.bf16 %v1081, %v1081
        %v1098 = vpack.c.bf16 %v1082, %v1082
        %v1099 = vpack.c.bf16 %v1083, %v1083
        %v1100 = vpack.c.bf16 %v1084, %v1084
        %v1101 = vpack.c.bf16 %v1085, %v1085
        %v1102 = vpack.c.bf16 %v1086, %v1086
        %v1104 = vshrl.u32 %v1087, 16
        %v1106 = vrot.slane %v1104, 7
        %v1107 = vshll.u32 %v1087, 16
        %v1109 = vor.u32 %v1106, %v1107
        %v1110 = vrot.slane %v1106, 4
        %v1112 = vshrl.u32 %v1088, 16
        %v1114 = vrot.slane %v1112, 7
        %v1115 = vshll.u32 %v1088, 16
        %v1117 = vor.u32 %v1114, %v1115
        %v1118 = vsel %vm721, %v1110, %v1117
        %v1119 = vrot.slane %v1114, 4
        %v1121 = vshrl.u32 %v1089, 16
        %v1123 = vrot.slane %v1121, 7
        %v1124 = vshll.u32 %v1089, 16
        %v1126 = vor.u32 %v1123, %v1124
        %v1127 = vrot.slane %v1123, 4
        %v1129 = vshrl.u32 %v1090, 16
        %v1131 = vrot.slane %v1129, 7
        %v1132 = vshll.u32 %v1090, 16
        %v1134 = vor.u32 %v1131, %v1132
        %v1135 = vsel %vm721, %v1127, %v1134
        %v1136 = vrot.slane %v1131, 4
        %v1138 = vshrl.u32 %v1091, 16
        %v1140 = vrot.slane %v1138, 7
        %v1141 = vshll.u32 %v1091, 16
        %v1143 = vor.u32 %v1140, %v1141
        %v1144 = vrot.slane %v1140, 4
        %v1146 = vshrl.u32 %v1092, 16
        %v1148 = vrot.slane %v1146, 7
        %v1149 = vshll.u32 %v1092, 16
        %v1151 = vor.u32 %v1148, %v1149
        %v1152 = vsel %vm721, %v1144, %v1151
        %v1153 = vrot.slane %v1148, 4
        %v1155 = vshrl.u32 %v1093, 16
        %v1157 = vrot.slane %v1155, 7
        %v1158 = vshll.u32 %v1093, 16
        %v1160 = vor.u32 %v1157, %v1158
        %v1161 = vrot.slane %v1157, 4
        %v1163 = vshrl.u32 %v1094, 16
        %v1165 = vrot.slane %v1163, 7
        %v1166 = vshll.u32 %v1094, 16
        %v1168 = vor.u32 %v1165, %v1166
        %v1169 = vsel %vm721, %v1161, %v1168
        %v1170 = vrot.slane %v1165, 4
        %v1172 = vshrl.u32 %v1095, 16
        %v1174 = vrot.slane %v1172, 7
        %v1175 = vshll.u32 %v1095, 16
        %v1177 = vor.u32 %v1174, %v1175
        %v1178 = vrot.slane %v1174, 4
        %v1180 = vshrl.u32 %v1096, 16
        %v1182 = vrot.slane %v1180, 7
        %v1183 = vshll.u32 %v1096, 16
        %v1185 = vor.u32 %v1182, %v1183
        %v1186 = vsel %vm721, %v1178, %v1185
        %v1187 = vrot.slane %v1182, 4
        %v1189 = vshrl.u32 %v1097, 16
        %v1191 = vrot.slane %v1189, 7
        %v1192 = vshll.u32 %v1097, 16
        %v1194 = vor.u32 %v1191, %v1192
        %v1195 = vrot.slane %v1191, 4
        %v1197 = vshrl.u32 %v1098, 16
        %v1199 = vrot.slane %v1197, 7
        %v1200 = vshll.u32 %v1098, 16
        %v1202 = vor.u32 %v1199, %v1200
        %v1203 = vsel %vm721, %v1195, %v1202
        %v1204 = vrot.slane %v1199, 4
        %v1206 = vshrl.u32 %v1099, 16
        %v1208 = vrot.slane %v1206, 7
        %v1209 = vshll.u32 %v1099, 16
        %v1211 = vor.u32 %v1208, %v1209
        %v1212 = vrot.slane %v1208, 4
        %v1214 = vshrl.u32 %v1100, 16
        %v1216 = vrot.slane %v1214, 7
        %v1217 = vshll.u32 %v1100, 16
        %v1219 = vor.u32 %v1216, %v1217
        %v1220 = vsel %vm721, %v1212, %v1219
        %v1221 = vrot.slane %v1216, 4
        %v1223 = vshrl.u32 %v1101, 16
        %v1225 = vrot.slane %v1223, 7
        %v1226 = vshll.u32 %v1101, 16
        %v1228 = vor.u32 %v1225, %v1226
        %v1229 = vrot.slane %v1225, 4
        %v1231 = vshrl.u32 %v1102, 16
        %v1233 = vrot.slane %v1231, 7
        %v1234 = vshll.u32 %v1102, 16
        %v1236 = vor.u32 %v1233, %v1234
        %v1237 = vsel %vm721, %v1229, %v1236
        %v1238 = vrot.slane %v1233, 4
        %s1263 = scalar_lea.vmem [#allocation2], 108
        %v1264 = vld [vmem:[%s1263] sm:$0xf]
        %v1265 = vsel %vm884, %v1109, %v1264
        %1266 = vst [vmem:[%s1263] sm:$0xf] %v1265
        %1267 = vst [vmem:[%s1263 + $0x4] sm:$0xf] %v1118
        %v1268 = vld [vmem:[%s1263 + $0x8] sm:$0x1]
        %v1269 = vsel %vm373, %v1119, %v1268
        %1270 = vst [vmem:[%s1263 + $0x8] sm:$0x1] %v1269
        %v1271 = vld [vmem:[%s1263 + $0xc] sm:$0xf]
        %v1272 = vsel %vm884, %v1126, %v1271
        %1273 = vst [vmem:[%s1263 + $0xc] sm:$0xf] %v1272
        %1274 = vst [vmem:[%s1263 + $0x10] sm:$0xf] %v1135
        %v1275 = vld [vmem:[%s1263 + $0x14] sm:$0x1]
        %v1276 = vsel %vm373, %v1136, %v1275
        %1277 = vst [vmem:[%s1263 + $0x14] sm:$0x1] %v1276
        %v1278 = vld [vmem:[%s1263 + $0x18] sm:$0xf]
        %v1279 = vsel %vm884, %v1143, %v1278
        %1280 = vst [vmem:[%s1263 + $0x18] sm:$0xf] %v1279
        %1281 = vst [vmem:[%s1263 + $0x1c] sm:$0xf] %v1152
        %v1282 = vld [vmem:[%s1263 + $0x20] sm:$0x1]
        %v1283 = vsel %vm373, %v1153, %v1282
        %1284 = vst [vmem:[%s1263 + $0x20] sm:$0x1] %v1283
        %v1285 = vld [vmem:[%s1263 + $0x24] sm:$0xf]
        %v1286 = vsel %vm884, %v1160, %v1285
        %1287 = vst [vmem:[%s1263 + $0x24] sm:$0xf] %v1286
        %1288 = vst [vmem:[%s1263 + $0x28] sm:$0xf] %v1169
        %v1289 = vld [vmem:[%s1263 + $0x2c] sm:$0x1]
        %v1290 = vsel %vm373, %v1170, %v1289
        %1291 = vst [vmem:[%s1263 + $0x2c] sm:$0x1] %v1290
        %v1292 = vld [vmem:[%s1263 + $0x30] sm:$0xf]
        %v1293 = vsel %vm884, %v1177, %v1292
        %1294 = vst [vmem:[%s1263 + $0x30] sm:$0xf] %v1293
        %1295 = vst [vmem:[%s1263 + $0x34] sm:$0xf] %v1186
        %v1296 = vld [vmem:[%s1263 + $0x38] sm:$0x1]
        %v1297 = vsel %vm373, %v1187, %v1296
        %1298 = vst [vmem:[%s1263 + $0x38] sm:$0x1] %v1297
        %v1299 = vld [vmem:[%s1263 + $0x3c] sm:$0xf]
        %v1300 = vsel %vm884, %v1194, %v1299
        %1301 = vst [vmem:[%s1263 + $0x3c] sm:$0xf] %v1300
        %1302 = vst [vmem:[%s1263 + $0x40] sm:$0xf] %v1203
        %v1303 = vld [vmem:[%s1263 + $0x44] sm:$0x1]
        %v1304 = vsel %vm373, %v1204, %v1303
        %1305 = vst [vmem:[%s1263 + $0x44] sm:$0x1] %v1304
        %v1306 = vld [vmem:[%s1263 + $0x48] sm:$0xf]
        %v1307 = vsel %vm884, %v1211, %v1306
        %1308 = vst [vmem:[%s1263 + $0x48] sm:$0xf] %v1307
        %1309 = vst [vmem:[%s1263 + $0x4c] sm:$0xf] %v1220
        %v1310 = vld [vmem:[%s1263 + $0x50] sm:$0x1]
        %v1311 = vsel %vm373, %v1221, %v1310
        %1312 = vst [vmem:[%s1263 + $0x50] sm:$0x1] %v1311
        %v1313 = vld [vmem:[%s1263 + $0x54] sm:$0xf]
        %v1314 = vsel %vm884, %v1228, %v1313
        %1315 = vst [vmem:[%s1263 + $0x54] sm:$0xf] %v1314
        %1316 = vst [vmem:[%s1263 + $0x58] sm:$0xf] %v1237
        %v1317 = vld [vmem:[%s1263 + $0x5c] sm:$0x1]
        %v1318 = vsel %vm373, %v1238, %v1317
        %1319 = vst [vmem:[%s1263 + $0x5c] sm:$0x1] %v1318
        %v1320 = vld [vmem:[#allocation2] sm:$0xf]
        %v1321 = vld [vmem:[#allocation2 + $0x4] sm:$0xf]
        %v1322 = vld [vmem:[#allocation2 + $0xc] sm:$0xf]
        %v1323 = vld [vmem:[#allocation2 + $0x10] sm:$0xf]
        %v1324 = vld [vmem:[#allocation2 + $0x18] sm:$0xf]
        %v1325 = vld [vmem:[#allocation2 + $0x1c] sm:$0xf]
        %v1326 = vld [vmem:[#allocation2 + $0x24] sm:$0xf]
        %v1327 = vld [vmem:[#allocation2 + $0x28] sm:$0xf]
        %v1328 = vld [vmem:[#allocation2 + $0x30] sm:$0xf]
        %v1329 = vld [vmem:[#allocation2 + $0x34] sm:$0xf]
        %v1330 = vld [vmem:[#allocation2 + $0x3c] sm:$0xf]
        %v1331 = vld [vmem:[#allocation2 + $0x40] sm:$0xf]
        %v1332 = vld [vmem:[#allocation2 + $0x48] sm:$0xf]
        %v1333 = vld [vmem:[#allocation2 + $0x4c] sm:$0xf]
        %v1334 = vld [vmem:[#allocation2 + $0x54] sm:$0xf]
        %v1335 = vld [vmem:[#allocation2 + $0x58] sm:$0xf]
        %v1336 = vunpack.c.l.bf16 %v1320
        %v1337 = vunpack.c.l.bf16 %v1321
        %v1338 = vunpack.c.l.bf16 %v1322
        %v1339 = vunpack.c.l.bf16 %v1323
        %v1340 = vunpack.c.l.bf16 %v1324
        %v1341 = vunpack.c.l.bf16 %v1325
        %v1342 = vunpack.c.l.bf16 %v1326
        %v1343 = vunpack.c.l.bf16 %v1327
        %v1344 = vunpack.c.l.bf16 %v1328
        %v1345 = vunpack.c.l.bf16 %v1329
        %v1346 = vunpack.c.l.bf16 %v1330
        %v1347 = vunpack.c.l.bf16 %v1331
        %v1348 = vunpack.c.l.bf16 %v1332
        %v1349 = vunpack.c.l.bf16 %v1333
        %v1350 = vunpack.c.l.bf16 %v1334
        %v1351 = vunpack.c.l.bf16 %v1335
        %v1352 = vperm.slane %v350, 0
        %v1353 = vmul.f32 %v1336, %v1352
        %v1354 = vmul.f32 %v1337, %v1352
        %v1355 = vmul.f32 %v1338, %v1352
        %v1356 = vmul.f32 %v1339, %v1352
        %v1357 = vmul.f32 %v1340, %v1352
        %v1358 = vmul.f32 %v1341, %v1352
        %v1359 = vmul.f32 %v1342, %v1352
        %v1360 = vmul.f32 %v1343, %v1352
        %v1361 = vmul.f32 %v1344, %v1352
        %v1362 = vmul.f32 %v1345, %v1352
        %v1363 = vmul.f32 %v1346, %v1352
        %v1364 = vmul.f32 %v1347, %v1352
        %v1365 = vmul.f32 %v1348, %v1352
        %v1366 = vmul.f32 %v1349, %v1352
        %v1367 = vmul.f32 %v1350, %v1352
        %v1368 = vmul.f32 %v1351, %v1352
        %v1369 = vadd.f32 %v1353, 0.0
        %v1370 = vadd.f32 %v1354, 0.0
        %v1371 = vadd.f32 %v1355, 0.0
        %v1372 = vadd.f32 %v1356, 0.0
        %v1373 = vadd.f32 %v1357, 0.0
        %v1374 = vadd.f32 %v1358, 0.0
        %v1375 = vadd.f32 %v1359, 0.0
        %v1376 = vadd.f32 %v1360, 0.0
        %v1377 = vadd.f32 %v1361, 0.0
        %v1378 = vadd.f32 %v1362, 0.0
        %v1379 = vadd.f32 %v1363, 0.0
        %v1380 = vadd.f32 %v1364, 0.0
        %v1381 = vadd.f32 %v1365, 0.0
        %v1382 = vadd.f32 %v1366, 0.0
        %v1383 = vadd.f32 %v1367, 0.0
        %v1384 = vadd.f32 %v1368, 0.0
        %v1385 = vld [vmem:[#allocation2 + $0x8] sm:$0x1]
        %v1386 = vld [vmem:[#allocation2 + $0x14] sm:$0x1]
        %v1387 = vld [vmem:[#allocation2 + $0x20] sm:$0x1]
        %v1388 = vld [vmem:[#allocation2 + $0x2c] sm:$0x1]
        %v1389 = vld [vmem:[#allocation2 + $0x38] sm:$0x1]
        %v1390 = vld [vmem:[#allocation2 + $0x44] sm:$0x1]
        %v1391 = vld [vmem:[#allocation2 + $0x50] sm:$0x1]
        %v1392 = vld [vmem:[#allocation2 + $0x5c] sm:$0x1]
        %v1393 = vunpack.c.l.bf16 %v1385
        %v1394 = vunpack.c.l.bf16 %v1386
        %v1395 = vunpack.c.l.bf16 %v1387
        %v1396 = vunpack.c.l.bf16 %v1388
        %v1397 = vunpack.c.l.bf16 %v1389
        %v1398 = vunpack.c.l.bf16 %v1390
        %v1399 = vunpack.c.l.bf16 %v1391
        %v1400 = vunpack.c.l.bf16 %v1392
        %v1401 = vperm.slane %v350, 1
        %v1402 = vmul.f32 %v1336, %v1401
        %v1403 = vmul.f32 %v1337, %v1401
        %v1404 = vmul.f32 %v1393, %v1401
        %v1405 = vmul.f32 %v1338, %v1401
        %v1406 = vmul.f32 %v1339, %v1401
        %v1407 = vmul.f32 %v1394, %v1401
        %v1408 = vmul.f32 %v1340, %v1401
        %v1409 = vmul.f32 %v1341, %v1401
        %v1410 = vmul.f32 %v1395, %v1401
        %v1411 = vmul.f32 %v1342, %v1401
        %v1412 = vmul.f32 %v1343, %v1401
        %v1413 = vmul.f32 %v1396, %v1401
        %v1414 = vmul.f32 %v1344, %v1401
        %v1415 = vmul.f32 %v1345, %v1401
        %v1416 = vmul.f32 %v1397, %v1401
        %v1417 = vmul.f32 %v1346, %v1401
        %v1418 = vmul.f32 %v1347, %v1401
        %v1419 = vmul.f32 %v1398, %v1401
        %v1420 = vmul.f32 %v1348, %v1401
        %v1421 = vmul.f32 %v1349, %v1401
        %v1422 = vmul.f32 %v1399, %v1401
        %v1423 = vmul.f32 %v1350, %v1401
        %v1424 = vmul.f32 %v1351, %v1401
        %v1425 = vmul.f32 %v1400, %v1401
        %vm1450 = vcmask 1046528
        %v1451 = vrot.slane %v1402, 1
        %v1452 = vrot.slane %v1403, 1
        %v1453 = vsel %vm1450, %v1451, %v1452
        %v1454 = vrot.slane %v1404, 1
        %v1455 = vsel %vm1450, %v1452, %v1454
        %v1456 = vrot.slane %v1405, 1
        %v1457 = vrot.slane %v1406, 1
        %v1458 = vsel %vm1450, %v1456, %v1457
        %v1459 = vrot.slane %v1407, 1
        %v1460 = vsel %vm1450, %v1457, %v1459
        %v1461 = vrot.slane %v1408, 1
        %v1462 = vrot.slane %v1409, 1
        %v1463 = vsel %vm1450, %v1461, %v1462
        %v1464 = vrot.slane %v1410, 1
        %v1465 = vsel %vm1450, %v1462, %v1464
        %v1466 = vrot.slane %v1411, 1
        %v1467 = vrot.slane %v1412, 1
        %v1468 = vsel %vm1450, %v1466, %v1467
        %v1469 = vrot.slane %v1413, 1
        %v1470 = vsel %vm1450, %v1467, %v1469
        %v1471 = vrot.slane %v1414, 1
        %v1472 = vrot.slane %v1415, 1
        %v1473 = vsel %vm1450, %v1471, %v1472
        %v1474 = vrot.slane %v1416, 1
        %v1475 = vsel %vm1450, %v1472, %v1474
        %v1476 = vrot.slane %v1417, 1
        %v1477 = vrot.slane %v1418, 1
        %v1478 = vsel %vm1450, %v1476, %v1477
        %v1479 = vrot.slane %v1419, 1
        %v1480 = vsel %vm1450, %v1477, %v1479
        %v1481 = vrot.slane %v1420, 1
        %v1482 = vrot.slane %v1421, 1
        %v1483 = vsel %vm1450, %v1481, %v1482
        %v1484 = vrot.slane %v1422, 1
        %v1485 = vsel %vm1450, %v1482, %v1484
        %v1486 = vrot.slane %v1423, 1
        %v1487 = vrot.slane %v1424, 1
        %v1488 = vsel %vm1450, %v1486, %v1487
        %v1489 = vrot.slane %v1425, 1
        %v1490 = vsel %vm1450, %v1487, %v1489
        %v1507 = vadd.f32 %v1369, %v1453
        %v1508 = vadd.f32 %v1370, %v1455
        %v1509 = vadd.f32 %v1371, %v1458
        %v1510 = vadd.f32 %v1372, %v1460
        %v1511 = vadd.f32 %v1373, %v1463
        %v1512 = vadd.f32 %v1374, %v1465
        %v1513 = vadd.f32 %v1375, %v1468
        %v1514 = vadd.f32 %v1376, %v1470
        %v1515 = vadd.f32 %v1377, %v1473
        %v1516 = vadd.f32 %v1378, %v1475
        %v1517 = vadd.f32 %v1379, %v1478
        %v1518 = vadd.f32 %v1380, %v1480
        %v1519 = vadd.f32 %v1381, %v1483
        %v1520 = vadd.f32 %v1382, %v1485
        %v1521 = vadd.f32 %v1383, %v1488
        %v1522 = vadd.f32 %v1384, %v1490
        %v1523 = vld [vmem:[#allocation2] sm:$0xe]
        %v1524 = vld [vmem:[#allocation2 + $0xc] sm:$0xe]
        %v1525 = vld [vmem:[#allocation2 + $0x18] sm:$0xe]
        %v1526 = vld [vmem:[#allocation2 + $0x24] sm:$0xe]
        %v1527 = vld [vmem:[#allocation2 + $0x30] sm:$0xe]
        %v1528 = vld [vmem:[#allocation2 + $0x3c] sm:$0xe]
        %v1529 = vld [vmem:[#allocation2 + $0x48] sm:$0xe]
        %v1530 = vld [vmem:[#allocation2 + $0x54] sm:$0xe]
        %v1531 = vunpack.c.l.bf16 %v1523
        %v1532 = vunpack.c.l.bf16 %v1524
        %v1533 = vunpack.c.l.bf16 %v1525
        %v1534 = vunpack.c.l.bf16 %v1526
        %v1535 = vunpack.c.l.bf16 %v1527
        %v1536 = vunpack.c.l.bf16 %v1528
        %v1537 = vunpack.c.l.bf16 %v1529
        %v1538 = vunpack.c.l.bf16 %v1530
        %v1539 = vperm.slane %v350, 2
        %v1540 = vmul.f32 %v1531, %v1539
        %v1541 = vmul.f32 %v1337, %v1539
        %v1542 = vmul.f32 %v1393, %v1539
        %v1543 = vmul.f32 %v1532, %v1539
        %v1544 = vmul.f32 %v1339, %v1539
        %v1545 = vmul.f32 %v1394, %v1539
        %v1546 = vmul.f32 %v1533, %v1539
        %v1547 = vmul.f32 %v1341, %v1539
        %v1548 = vmul.f32 %v1395, %v1539
        %v1549 = vmul.f32 %v1534, %v1539
        %v1550 = vmul.f32 %v1343, %v1539
        %v1551 = vmul.f32 %v1396, %v1539
        %v1552 = vmul.f32 %v1535, %v1539
        %v1553 = vmul.f32 %v1345, %v1539
        %v1554 = vmul.f32 %v1397, %v1539
        %v1555 = vmul.f32 %v1536, %v1539
        %v1556 = vmul.f32 %v1347, %v1539
        %v1557 = vmul.f32 %v1398, %v1539
        %v1558 = vmul.f32 %v1537, %v1539
        %v1559 = vmul.f32 %v1349, %v1539
        %v1560 = vmul.f32 %v1399, %v1539
        %v1561 = vmul.f32 %v1538, %v1539
        %v1562 = vmul.f32 %v1351, %v1539
        %v1563 = vmul.f32 %v1400, %v1539
        %vm1588 = vcmask 1045504
        %v1589 = vrot.slane %v1540, 2
        %v1590 = vrot.slane %v1541, 2
        %v1591 = vsel %vm1588, %v1589, %v1590
        %v1592 = vrot.slane %v1542, 2
        %v1593 = vsel %vm1588, %v1590, %v1592
        %v1594 = vrot.slane %v1543, 2
        %v1595 = vrot.slane %v1544, 2
        %v1596 = vsel %vm1588, %v1594, %v1595
        %v1597 = vrot.slane %v1545, 2
        %v1598 = vsel %vm1588, %v1595, %v1597
        %v1599 = vrot.slane %v1546, 2
        %v1600 = vrot.slane %v1547, 2
        %v1601 = vsel %vm1588, %v1599, %v1600
        %v1602 = vrot.slane %v1548, 2
        %v1603 = vsel %vm1588, %v1600, %v1602
        %v1604 = vrot.slane %v1549, 2
        %v1605 = vrot.slane %v1550, 2
        %v1606 = vsel %vm1588, %v1604, %v1605
        %v1607 = vrot.slane %v1551, 2
        %v1608 = vsel %vm1588, %v1605, %v1607
        %v1609 = vrot.slane %v1552, 2
        %v1610 = vrot.slane %v1553, 2
        %v1611 = vsel %vm1588, %v1609, %v1610
        %v1612 = vrot.slane %v1554, 2
        %v1613 = vsel %vm1588, %v1610, %v1612
        %v1614 = vrot.slane %v1555, 2
        %v1615 = vrot.slane %v1556, 2
        %v1616 = vsel %vm1588, %v1614, %v1615
        %v1617 = vrot.slane %v1557, 2
        %v1618 = vsel %vm1588, %v1615, %v1617
        %v1619 = vrot.slane %v1558, 2
        %v1620 = vrot.slane %v1559, 2
        %v1621 = vsel %vm1588, %v1619, %v1620
        %v1622 = vrot.slane %v1560, 2
        %v1623 = vsel %vm1588, %v1620, %v1622
        %v1624 = vrot.slane %v1561, 2
        %v1625 = vrot.slane %v1562, 2
        %v1626 = vsel %vm1588, %v1624, %v1625
        %v1627 = vrot.slane %v1563, 2
        %v1628 = vsel %vm1588, %v1625, %v1627
        %v1645 = vadd.f32 %v1507, %v1591
        %v1646 = vadd.f32 %v1508, %v1593
        %v1647 = vadd.f32 %v1509, %v1596
        %v1648 = vadd.f32 %v1510, %v1598
        %v1649 = vadd.f32 %v1511, %v1601
        %v1650 = vadd.f32 %v1512, %v1603
        %v1651 = vadd.f32 %v1513, %v1606
        %v1652 = vadd.f32 %v1514, %v1608
        %v1653 = vadd.f32 %v1515, %v1611
        %v1654 = vadd.f32 %v1516, %v1613
        %v1655 = vadd.f32 %v1517, %v1616
        %v1656 = vadd.f32 %v1518, %v1618
        %v1657 = vadd.f32 %v1519, %v1621
        %v1658 = vadd.f32 %v1520, %v1623
        %v1659 = vadd.f32 %v1521, %v1626
        %v1660 = vadd.f32 %v1522, %v1628
        %v1661 = vld [vmem:[%s882] sm:$0xf]
        %v1662 = vld [vmem:[%s882 + $0x4] sm:$0xf]
        %v1663 = vld [vmem:[%s882 + $0xc] sm:$0xf]
        %v1664 = vld [vmem:[%s882 + $0x10] sm:$0xf]
        %v1665 = vld [vmem:[%s882 + $0x18] sm:$0xf]
        %v1666 = vld [vmem:[%s882 + $0x1c] sm:$0xf]
        %v1667 = vld [vmem:[%s882 + $0x24] sm:$0xf]
        %v1668 = vld [vmem:[%s882 + $0x28] sm:$0xf]
        %v1669 = vld [vmem:[%s882 + $0x30] sm:$0xf]
        %v1670 = vld [vmem:[%s882 + $0x34] sm:$0xf]
        %v1671 = vld [vmem:[%s882 + $0x3c] sm:$0xf]
        %v1672 = vld [vmem:[%s882 + $0x40] sm:$0xf]
        %v1673 = vld [vmem:[%s882 + $0x48] sm:$0xf]
        %v1674 = vld [vmem:[%s882 + $0x4c] sm:$0xf]
        %v1675 = vld [vmem:[%s882 + $0x54] sm:$0xf]
        %v1676 = vld [vmem:[%s882 + $0x58] sm:$0xf]
        %v1677 = vunpack.c.l.bf16 %v1661
        %v1678 = vunpack.c.l.bf16 %v1662
        %v1679 = vunpack.c.l.bf16 %v1663
        %v1680 = vunpack.c.l.bf16 %v1664
        %v1681 = vunpack.c.l.bf16 %v1665
        %v1682 = vunpack.c.l.bf16 %v1666
        %v1683 = vunpack.c.l.bf16 %v1667
        %v1684 = vunpack.c.l.bf16 %v1668
        %v1685 = vunpack.c.l.bf16 %v1669
        %v1686 = vunpack.c.l.bf16 %v1670
        %v1687 = vunpack.c.l.bf16 %v1671
        %v1688 = vunpack.c.l.bf16 %v1672
        %v1689 = vunpack.c.l.bf16 %v1673
        %v1690 = vunpack.c.l.bf16 %v1674
        %v1691 = vunpack.c.l.bf16 %v1675
        %v1692 = vunpack.c.l.bf16 %v1676
        %v1693 = vperm.slane %v351, 0
        %v1694 = vmul.f32 %v1677, %v1693
        %v1695 = vmul.f32 %v1678, %v1693
        %v1696 = vmul.f32 %v1679, %v1693
        %v1697 = vmul.f32 %v1680, %v1693
        %v1698 = vmul.f32 %v1681, %v1693
        %v1699 = vmul.f32 %v1682, %v1693
        %v1700 = vmul.f32 %v1683, %v1693
        %v1701 = vmul.f32 %v1684, %v1693
        %v1702 = vmul.f32 %v1685, %v1693
        %v1703 = vmul.f32 %v1686, %v1693
        %v1704 = vmul.f32 %v1687, %v1693
        %v1705 = vmul.f32 %v1688, %v1693
        %v1706 = vmul.f32 %v1689, %v1693
        %v1707 = vmul.f32 %v1690, %v1693
        %v1708 = vmul.f32 %v1691, %v1693
        %v1709 = vmul.f32 %v1692, %v1693
        %v1710 = vadd.f32 %v1645, %v1694
        %v1711 = vadd.f32 %v1646, %v1695
        %v1712 = vadd.f32 %v1647, %v1696
        %v1713 = vadd.f32 %v1648, %v1697
        %v1714 = vadd.f32 %v1649, %v1698
        %v1715 = vadd.f32 %v1650, %v1699
        %v1716 = vadd.f32 %v1651, %v1700
        %v1717 = vadd.f32 %v1652, %v1701
        %v1718 = vadd.f32 %v1653, %v1702
        %v1719 = vadd.f32 %v1654, %v1703
        %v1720 = vadd.f32 %v1655, %v1704
        %v1721 = vadd.f32 %v1656, %v1705
        %v1722 = vadd.f32 %v1657, %v1706
        %v1723 = vadd.f32 %v1658, %v1707
        %v1724 = vadd.f32 %v1659, %v1708
        %v1725 = vadd.f32 %v1660, %v1709
        %v1726 = vld [vmem:[%s882 + $0x8] sm:$0x1]
        %v1727 = vld [vmem:[%s882 + $0x14] sm:$0x1]
        %v1728 = vld [vmem:[%s882 + $0x20] sm:$0x1]
        %v1729 = vld [vmem:[%s882 + $0x2c] sm:$0x1]
        %v1730 = vld [vmem:[%s882 + $0x38] sm:$0x1]
        %v1731 = vld [vmem:[%s882 + $0x44] sm:$0x1]
        %v1732 = vld [vmem:[%s882 + $0x50] sm:$0x1]
        %v1733 = vld [vmem:[%s882 + $0x5c] sm:$0x1]
        %v1734 = vunpack.c.l.bf16 %v1726
        %v1735 = vunpack.c.l.bf16 %v1727
        %v1736 = vunpack.c.l.bf16 %v1728
        %v1737 = vunpack.c.l.bf16 %v1729
        %v1738 = vunpack.c.l.bf16 %v1730
        %v1739 = vunpack.c.l.bf16 %v1731
        %v1740 = vunpack.c.l.bf16 %v1732
        %v1741 = vunpack.c.l.bf16 %v1733
        %v1742 = vperm.slane %v351, 1
        %v1743 = vmul.f32 %v1677, %v1742
        %v1744 = vmul.f32 %v1678, %v1742
        %v1745 = vmul.f32 %v1734, %v1742
        %v1746 = vmul.f32 %v1679, %v1742
        %v1747 = vmul.f32 %v1680, %v1742
        %v1748 = vmul.f32 %v1735, %v1742
        %v1749 = vmul.f32 %v1681, %v1742
        %v1750 = vmul.f32 %v1682, %v1742
        %v1751 = vmul.f32 %v1736, %v1742
        %v1752 = vmul.f32 %v1683, %v1742
        %v1753 = vmul.f32 %v1684, %v1742
        %v1754 = vmul.f32 %v1737, %v1742
        %v1755 = vmul.f32 %v1685, %v1742
        %v1756 = vmul.f32 %v1686, %v1742
        %v1757 = vmul.f32 %v1738, %v1742
        %v1758 = vmul.f32 %v1687, %v1742
        %v1759 = vmul.f32 %v1688, %v1742
        %v1760 = vmul.f32 %v1739, %v1742
        %v1761 = vmul.f32 %v1689, %v1742
        %v1762 = vmul.f32 %v1690, %v1742
        %v1763 = vmul.f32 %v1740, %v1742
        %v1764 = vmul.f32 %v1691, %v1742
        %v1765 = vmul.f32 %v1692, %v1742
        %v1766 = vmul.f32 %v1741, %v1742
        %v1791 = vrot.slane %v1743, 1
        %v1792 = vrot.slane %v1744, 1
        %v1793 = vsel %vm1450, %v1791, %v1792
        %v1794 = vrot.slane %v1745, 1
        %v1795 = vsel %vm1450, %v1792, %v1794
        %v1796 = vrot.slane %v1746, 1
        %v1797 = vrot.slane %v1747, 1
        %v1798 = vsel %vm1450, %v1796, %v1797
        %v1799 = vrot.slane %v1748, 1
        %v1800 = vsel %vm1450, %v1797, %v1799
        %v1801 = vrot.slane %v1749, 1
        %v1802 = vrot.slane %v1750, 1
        %v1803 = vsel %vm1450, %v1801, %v1802
        %v1804 = vrot.slane %v1751, 1
        %v1805 = vsel %vm1450, %v1802, %v1804
        %v1806 = vrot.slane %v1752, 1
        %v1807 = vrot.slane %v1753, 1
        %v1808 = vsel %vm1450, %v1806, %v1807
        %v1809 = vrot.slane %v1754, 1
        %v1810 = vsel %vm1450, %v1807, %v1809
        %v1811 = vrot.slane %v1755, 1
        %v1812 = vrot.slane %v1756, 1
        %v1813 = vsel %vm1450, %v1811, %v1812
        %v1814 = vrot.slane %v1757, 1
        %v1815 = vsel %vm1450, %v1812, %v1814
        %v1816 = vrot.slane %v1758, 1
        %v1817 = vrot.slane %v1759, 1
        %v1818 = vsel %vm1450, %v1816, %v1817
        %v1819 = vrot.slane %v1760, 1
        %v1820 = vsel %vm1450, %v1817, %v1819
        %v1821 = vrot.slane %v1761, 1
        %v1822 = vrot.slane %v1762, 1
        %v1823 = vsel %vm1450, %v1821, %v1822
        %v1824 = vrot.slane %v1763, 1
        %v1825 = vsel %vm1450, %v1822, %v1824
        %v1826 = vrot.slane %v1764, 1
        %v1827 = vrot.slane %v1765, 1
        %v1828 = vsel %vm1450, %v1826, %v1827
        %v1829 = vrot.slane %v1766, 1
        %v1830 = vsel %vm1450, %v1827, %v1829
        %v1847 = vadd.f32 %v1710, %v1793
        %v1848 = vadd.f32 %v1711, %v1795
        %v1849 = vadd.f32 %v1712, %v1798
        %v1850 = vadd.f32 %v1713, %v1800
        %v1851 = vadd.f32 %v1714, %v1803
        %v1852 = vadd.f32 %v1715, %v1805
        %v1853 = vadd.f32 %v1716, %v1808
        %v1854 = vadd.f32 %v1717, %v1810
        %v1855 = vadd.f32 %v1718, %v1813
        %v1856 = vadd.f32 %v1719, %v1815
        %v1857 = vadd.f32 %v1720, %v1818
        %v1858 = vadd.f32 %v1721, %v1820
        %v1859 = vadd.f32 %v1722, %v1823
        %v1860 = vadd.f32 %v1723, %v1825
        %v1861 = vadd.f32 %v1724, %v1828
        %v1862 = vadd.f32 %v1725, %v1830
        %v1863 = vld [vmem:[%s882] sm:$0xe]
        %v1864 = vld [vmem:[%s882 + $0xc] sm:$0xe]
        %v1865 = vld [vmem:[%s882 + $0x18] sm:$0xe]
        %v1866 = vld [vmem:[%s882 + $0x24] sm:$0xe]
        %v1867 = vld [vmem:[%s882 + $0x30] sm:$0xe]
        %v1868 = vld [vmem:[%s882 + $0x3c] sm:$0xe]
        %v1869 = vld [vmem:[%s882 + $0x48] sm:$0xe]
        %v1870 = vld [vmem:[%s882 + $0x54] sm:$0xe]
        %v1871 = vunpack.c.l.bf16 %v1863
        %v1872 = vunpack.c.l.bf16 %v1864
        %v1873 = vunpack.c.l.bf16 %v1865
        %v1874 = vunpack.c.l.bf16 %v1866
        %v1875 = vunpack.c.l.bf16 %v1867
        %v1876 = vunpack.c.l.bf16 %v1868
        %v1877 = vunpack.c.l.bf16 %v1869
        %v1878 = vunpack.c.l.bf16 %v1870
        %v1879 = vperm.slane %v351, 2
        %v1880 = vmul.f32 %v1871, %v1879
        %v1881 = vmul.f32 %v1678, %v1879
        %v1882 = vmul.f32 %v1734, %v1879
        %v1883 = vmul.f32 %v1872, %v1879
        %v1884 = vmul.f32 %v1680, %v1879
        %v1885 = vmul.f32 %v1735, %v1879
        %v1886 = vmul.f32 %v1873, %v1879
        %v1887 = vmul.f32 %v1682, %v1879
        %v1888 = vmul.f32 %v1736, %v1879
        %v1889 = vmul.f32 %v1874, %v1879
        %v1890 = vmul.f32 %v1684, %v1879
        %v1891 = vmul.f32 %v1737, %v1879
        %v1892 = vmul.f32 %v1875, %v1879
        %v1893 = vmul.f32 %v1686, %v1879
        %v1894 = vmul.f32 %v1738, %v1879
        %v1895 = vmul.f32 %v1876, %v1879
        %v1896 = vmul.f32 %v1688, %v1879
        %v1897 = vmul.f32 %v1739, %v1879
        %v1898 = vmul.f32 %v1877, %v1879
        %v1899 = vmul.f32 %v1690, %v1879
        %v1900 = vmul.f32 %v1740, %v1879
        %v1901 = vmul.f32 %v1878, %v1879
        %v1902 = vmul.f32 %v1692, %v1879
        %v1903 = vmul.f32 %v1741, %v1879
        %v1928 = vrot.slane %v1880, 2
        %v1929 = vrot.slane %v1881, 2
        %v1930 = vsel %vm1588, %v1928, %v1929
        %v1931 = vrot.slane %v1882, 2
        %v1932 = vsel %vm1588, %v1929, %v1931
        %v1933 = vrot.slane %v1883, 2
        %v1934 = vrot.slane %v1884, 2
        %v1935 = vsel %vm1588, %v1933, %v1934
        %v1936 = vrot.slane %v1885, 2
        %v1937 = vsel %vm1588, %v1934, %v1936
        %v1938 = vrot.slane %v1886, 2
        %v1939 = vrot.slane %v1887, 2
        %v1940 = vsel %vm1588, %v1938, %v1939
        %v1941 = vrot.slane %v1888, 2
        %v1942 = vsel %vm1588, %v1939, %v1941
        %v1943 = vrot.slane %v1889, 2
        %v1944 = vrot.slane %v1890, 2
        %v1945 = vsel %vm1588, %v1943, %v1944
        %v1946 = vrot.slane %v1891, 2
        %v1947 = vsel %vm1588, %v1944, %v1946
        %v1948 = vrot.slane %v1892, 2
        %v1949 = vrot.slane %v1893, 2
        %v1950 = vsel %vm1588, %v1948, %v1949
        %v1951 = vrot.slane %v1894, 2
        %v1952 = vsel %vm1588, %v1949, %v1951
        %v1953 = vrot.slane %v1895, 2
        %v1954 = vrot.slane %v1896, 2
        %v1955 = vsel %vm1588, %v1953, %v1954
        %v1956 = vrot.slane %v1897, 2
        %v1957 = vsel %vm1588, %v1954, %v1956
        %v1958 = vrot.slane %v1898, 2
        %v1959 = vrot.slane %v1899, 2
        %v1960 = vsel %vm1588, %v1958, %v1959
        %v1961 = vrot.slane %v1900, 2
        %v1962 = vsel %vm1588, %v1959, %v1961
        %v1963 = vrot.slane %v1901, 2
        %v1964 = vrot.slane %v1902, 2
        %v1965 = vsel %vm1588, %v1963, %v1964
        %v1966 = vrot.slane %v1903, 2
        %v1967 = vsel %vm1588, %v1964, %v1966
        %v1984 = vadd.f32 %v1847, %v1930
        %v1985 = vadd.f32 %v1848, %v1932
        %v1986 = vadd.f32 %v1849, %v1935
        %v1987 = vadd.f32 %v1850, %v1937
        %v1988 = vadd.f32 %v1851, %v1940
        %v1989 = vadd.f32 %v1852, %v1942
        %v1990 = vadd.f32 %v1853, %v1945
        %v1991 = vadd.f32 %v1854, %v1947
        %v1992 = vadd.f32 %v1855, %v1950
        %v1993 = vadd.f32 %v1856, %v1952
        %v1994 = vadd.f32 %v1857, %v1955
        %v1995 = vadd.f32 %v1858, %v1957
        %v1996 = vadd.f32 %v1859, %v1960
        %v1997 = vadd.f32 %v1860, %v1962
        %v1998 = vadd.f32 %v1861, %v1965
        %v1999 = vadd.f32 %v1862, %v1967
        %s2000 = scalar_lea.vmem [#allocation2], 24
        %v2001 = vld [vmem:[%s2000] sm:$0xf]
        %v2002 = vld [vmem:[%s2000 + $0x4] sm:$0xf]
        %v2003 = vld [vmem:[%s2000 + $0xc] sm:$0xf]
        %v2004 = vld [vmem:[%s2000 + $0x10] sm:$0xf]
        %v2005 = vld [vmem:[%s2000 + $0x18] sm:$0xf]
        %v2006 = vld [vmem:[%s2000 + $0x1c] sm:$0xf]
        %v2007 = vld [vmem:[%s2000 + $0x24] sm:$0xf]
        %v2008 = vld [vmem:[%s2000 + $0x28] sm:$0xf]
        %v2009 = vld [vmem:[%s2000 + $0x30] sm:$0xf]
        %v2010 = vld [vmem:[%s2000 + $0x34] sm:$0xf]
        %v2011 = vld [vmem:[%s2000 + $0x3c] sm:$0xf]
        %v2012 = vld [vmem:[%s2000 + $0x40] sm:$0xf]
        %v2013 = vld [vmem:[%s2000 + $0x48] sm:$0xf]
        %v2014 = vld [vmem:[%s2000 + $0x4c] sm:$0xf]
        %v2015 = vld [vmem:[%s2000 + $0x54] sm:$0xf]
        %v2016 = vld [vmem:[%s2000 + $0x58] sm:$0xf]
        %v2017 = vunpack.c.l.bf16 %v2001
        %v2018 = vunpack.c.l.bf16 %v2002
        %v2019 = vunpack.c.l.bf16 %v2003
        %v2020 = vunpack.c.l.bf16 %v2004
        %v2021 = vunpack.c.l.bf16 %v2005
        %v2022 = vunpack.c.l.bf16 %v2006
        %v2023 = vunpack.c.l.bf16 %v2007
        %v2024 = vunpack.c.l.bf16 %v2008
        %v2025 = vunpack.c.l.bf16 %v2009
        %v2026 = vunpack.c.l.bf16 %v2010
        %v2027 = vunpack.c.l.bf16 %v2011
        %v2028 = vunpack.c.l.bf16 %v2012
        %v2029 = vunpack.c.l.bf16 %v2013
        %v2030 = vunpack.c.l.bf16 %v2014
        %v2031 = vunpack.c.l.bf16 %v2015
        %v2032 = vunpack.c.l.bf16 %v2016
        %v2033 = vperm.slane %v352, 0
        %v2034 = vmul.f32 %v2017, %v2033
        %v2035 = vmul.f32 %v2018, %v2033
        %v2036 = vmul.f32 %v2019, %v2033
        %v2037 = vmul.f32 %v2020, %v2033
        %v2038 = vmul.f32 %v2021, %v2033
        %v2039 = vmul.f32 %v2022, %v2033
        %v2040 = vmul.f32 %v2023, %v2033
        %v2041 = vmul.f32 %v2024, %v2033
        %v2042 = vmul.f32 %v2025, %v2033
        %v2043 = vmul.f32 %v2026, %v2033
        %v2044 = vmul.f32 %v2027, %v2033
        %v2045 = vmul.f32 %v2028, %v2033
        %v2046 = vmul.f32 %v2029, %v2033
        %v2047 = vmul.f32 %v2030, %v2033
        %v2048 = vmul.f32 %v2031, %v2033
        %v2049 = vmul.f32 %v2032, %v2033
        %v2050 = vadd.f32 %v1984, %v2034
        %v2051 = vadd.f32 %v1985, %v2035
        %v2052 = vadd.f32 %v1986, %v2036
        %v2053 = vadd.f32 %v1987, %v2037
        %v2054 = vadd.f32 %v1988, %v2038
        %v2055 = vadd.f32 %v1989, %v2039
        %v2056 = vadd.f32 %v1990, %v2040
        %v2057 = vadd.f32 %v1991, %v2041
        %v2058 = vadd.f32 %v1992, %v2042
        %v2059 = vadd.f32 %v1993, %v2043
        %v2060 = vadd.f32 %v1994, %v2044
        %v2061 = vadd.f32 %v1995, %v2045
        %v2062 = vadd.f32 %v1996, %v2046
        %v2063 = vadd.f32 %v1997, %v2047
        %v2064 = vadd.f32 %v1998, %v2048
        %v2065 = vadd.f32 %v1999, %v2049
        %v2066 = vld [vmem:[%s2000 + $0x8] sm:$0x1]
        %v2067 = vld [vmem:[%s2000 + $0x14] sm:$0x1]
        %v2068 = vld [vmem:[%s2000 + $0x20] sm:$0x1]
        %v2069 = vld [vmem:[%s2000 + $0x2c] sm:$0x1]
        %v2070 = vld [vmem:[%s2000 + $0x38] sm:$0x1]
        %v2071 = vld [vmem:[%s2000 + $0x44] sm:$0x1]
        %v2072 = vld [vmem:[%s2000 + $0x50] sm:$0x1]
        %v2073 = vld [vmem:[%s2000 + $0x5c] sm:$0x1]
        %v2074 = vunpack.c.l.bf16 %v2066
        %v2075 = vunpack.c.l.bf16 %v2067
        %v2076 = vunpack.c.l.bf16 %v2068
        %v2077 = vunpack.c.l.bf16 %v2069
        %v2078 = vunpack.c.l.bf16 %v2070
        %v2079 = vunpack.c.l.bf16 %v2071
        %v2080 = vunpack.c.l.bf16 %v2072
        %v2081 = vunpack.c.l.bf16 %v2073
        %v2082 = vperm.slane %v352, 1
        %v2083 = vmul.f32 %v2017, %v2082
        %v2084 = vmul.f32 %v2018, %v2082
        %v2085 = vmul.f32 %v2074, %v2082
        %v2086 = vmul.f32 %v2019, %v2082
        %v2087 = vmul.f32 %v2020, %v2082
        %v2088 = vmul.f32 %v2075, %v2082
        %v2089 = vmul.f32 %v2021, %v2082
        %v2090 = vmul.f32 %v2022, %v2082
        %v2091 = vmul.f32 %v2076, %v2082
        %v2092 = vmul.f32 %v2023, %v2082
        %v2093 = vmul.f32 %v2024, %v2082
        %v2094 = vmul.f32 %v2077, %v2082
        %v2095 = vmul.f32 %v2025, %v2082
        %v2096 = vmul.f32 %v2026, %v2082
        %v2097 = vmul.f32 %v2078, %v2082
        %v2098 = vmul.f32 %v2027, %v2082
        %v2099 = vmul.f32 %v2028, %v2082
        %v2100 = vmul.f32 %v2079, %v2082
        %v2101 = vmul.f32 %v2029, %v2082
        %v2102 = vmul.f32 %v2030, %v2082
        %v2103 = vmul.f32 %v2080, %v2082
        %v2104 = vmul.f32 %v2031, %v2082
        %v2105 = vmul.f32 %v2032, %v2082
        %v2106 = vmul.f32 %v2081, %v2082
        %v2131 = vrot.slane %v2083, 1
        %v2132 = vrot.slane %v2084, 1
        %v2133 = vsel %vm1450, %v2131, %v2132
        %v2134 = vrot.slane %v2085, 1
        %v2135 = vsel %vm1450, %v2132, %v2134
        %v2136 = vrot.slane %v2086, 1
        %v2137 = vrot.slane %v2087, 1
        %v2138 = vsel %vm1450, %v2136, %v2137
        %v2139 = vrot.slane %v2088, 1
        %v2140 = vsel %vm1450, %v2137, %v2139
        %v2141 = vrot.slane %v2089, 1
        %v2142 = vrot.slane %v2090, 1
        %v2143 = vsel %vm1450, %v2141, %v2142
        %v2144 = vrot.slane %v2091, 1
        %v2145 = vsel %vm1450, %v2142, %v2144
        %v2146 = vrot.slane %v2092, 1
        %v2147 = vrot.slane %v2093, 1
        %v2148 = vsel %vm1450, %v2146, %v2147
        %v2149 = vrot.slane %v2094, 1
        %v2150 = vsel %vm1450, %v2147, %v2149
        %v2151 = vrot.slane %v2095, 1
        %v2152 = vrot.slane %v2096, 1
        %v2153 = vsel %vm1450, %v2151, %v2152
        %v2154 = vrot.slane %v2097, 1
        %v2155 = vsel %vm1450, %v2152, %v2154
        %v2156 = vrot.slane %v2098, 1
        %v2157 = vrot.slane %v2099, 1
        %v2158 = vsel %vm1450, %v2156, %v2157
        %v2159 = vrot.slane %v2100, 1
        %v2160 = vsel %vm1450, %v2157, %v2159
        %v2161 = vrot.slane %v2101, 1
        %v2162 = vrot.slane %v2102, 1
        %v2163 = vsel %vm1450, %v2161, %v2162
        %v2164 = vrot.slane %v2103, 1
        %v2165 = vsel %vm1450, %v2162, %v2164
        %v2166 = vrot.slane %v2104, 1
        %v2167 = vrot.slane %v2105, 1
        %v2168 = vsel %vm1450, %v2166, %v2167
        %v2169 = vrot.slane %v2106, 1
        %v2170 = vsel %vm1450, %v2167, %v2169
        %v2187 = vadd.f32 %v2050, %v2133
        %v2188 = vadd.f32 %v2051, %v2135
        %v2189 = vadd.f32 %v2052, %v2138
        %v2190 = vadd.f32 %v2053, %v2140
        %v2191 = vadd.f32 %v2054, %v2143
        %v2192 = vadd.f32 %v2055, %v2145
        %v2193 = vadd.f32 %v2056, %v2148
        %v2194 = vadd.f32 %v2057, %v2150
        %v2195 = vadd.f32 %v2058, %v2153
        %v2196 = vadd.f32 %v2059, %v2155
        %v2197 = vadd.f32 %v2060, %v2158
        %v2198 = vadd.f32 %v2061, %v2160
        %v2199 = vadd.f32 %v2062, %v2163
        %v2200 = vadd.f32 %v2063, %v2165
        %v2201 = vadd.f32 %v2064, %v2168
        %v2202 = vadd.f32 %v2065, %v2170
        %v2203 = vld [vmem:[%s2000] sm:$0xe]
        %v2204 = vld [vmem:[%s2000 + $0xc] sm:$0xe]
        %v2205 = vld [vmem:[%s2000 + $0x18] sm:$0xe]
        %v2206 = vld [vmem:[%s2000 + $0x24] sm:$0xe]
        %v2207 = vld [vmem:[%s2000 + $0x30] sm:$0xe]
        %v2208 = vld [vmem:[%s2000 + $0x3c] sm:$0xe]
        %v2209 = vld [vmem:[%s2000 + $0x48] sm:$0xe]
        %v2210 = vld [vmem:[%s2000 + $0x54] sm:$0xe]
        %v2211 = vunpack.c.l.bf16 %v2203
        %v2212 = vunpack.c.l.bf16 %v2204
        %v2213 = vunpack.c.l.bf16 %v2205
        %v2214 = vunpack.c.l.bf16 %v2206
        %v2215 = vunpack.c.l.bf16 %v2207
        %v2216 = vunpack.c.l.bf16 %v2208
        %v2217 = vunpack.c.l.bf16 %v2209
        %v2218 = vunpack.c.l.bf16 %v2210
        %v2219 = vperm.slane %v352, 2
        %v2220 = vmul.f32 %v2211, %v2219
        %v2221 = vmul.f32 %v2018, %v2219
        %v2222 = vmul.f32 %v2074, %v2219
        %v2223 = vmul.f32 %v2212, %v2219
        %v2224 = vmul.f32 %v2020, %v2219
        %v2225 = vmul.f32 %v2075, %v2219
        %v2226 = vmul.f32 %v2213, %v2219
        %v2227 = vmul.f32 %v2022, %v2219
        %v2228 = vmul.f32 %v2076, %v2219
        %v2229 = vmul.f32 %v2214, %v2219
        %v2230 = vmul.f32 %v2024, %v2219
        %v2231 = vmul.f32 %v2077, %v2219
        %v2232 = vmul.f32 %v2215, %v2219
        %v2233 = vmul.f32 %v2026, %v2219
        %v2234 = vmul.f32 %v2078, %v2219
        %v2235 = vmul.f32 %v2216, %v2219
        %v2236 = vmul.f32 %v2028, %v2219
        %v2237 = vmul.f32 %v2079, %v2219
        %v2238 = vmul.f32 %v2217, %v2219
        %v2239 = vmul.f32 %v2030, %v2219
        %v2240 = vmul.f32 %v2080, %v2219
        %v2241 = vmul.f32 %v2218, %v2219
        %v2242 = vmul.f32 %v2032, %v2219
        %v2243 = vmul.f32 %v2081, %v2219
        %v2268 = vrot.slane %v2220, 2
        %v2269 = vrot.slane %v2221, 2
        %v2270 = vsel %vm1588, %v2268, %v2269
        %v2271 = vrot.slane %v2222, 2
        %v2272 = vsel %vm1588, %v2269, %v2271
        %v2273 = vrot.slane %v2223, 2
        %v2274 = vrot.slane %v2224, 2
        %v2275 = vsel %vm1588, %v2273, %v2274
        %v2276 = vrot.slane %v2225, 2
        %v2277 = vsel %vm1588, %v2274, %v2276
        %v2278 = vrot.slane %v2226, 2
        %v2279 = vrot.slane %v2227, 2
        %v2280 = vsel %vm1588, %v2278, %v2279
        %v2281 = vrot.slane %v2228, 2
        %v2282 = vsel %vm1588, %v2279, %v2281
        %v2283 = vrot.slane %v2229, 2
        %v2284 = vrot.slane %v2230, 2
        %v2285 = vsel %vm1588, %v2283, %v2284
        %v2286 = vrot.slane %v2231, 2
        %v2287 = vsel %vm1588, %v2284, %v2286
        %v2288 = vrot.slane %v2232, 2
        %v2289 = vrot.slane %v2233, 2
        %v2290 = vsel %vm1588, %v2288, %v2289
        %v2291 = vrot.slane %v2234, 2
        %v2292 = vsel %vm1588, %v2289, %v2291
        %v2293 = vrot.slane %v2235, 2
        %v2294 = vrot.slane %v2236, 2
        %v2295 = vsel %vm1588, %v2293, %v2294
        %v2296 = vrot.slane %v2237, 2
        %v2297 = vsel %vm1588, %v2294, %v2296
        %v2298 = vrot.slane %v2238, 2
        %v2299 = vrot.slane %v2239, 2
        %v2300 = vsel %vm1588, %v2298, %v2299
        %v2301 = vrot.slane %v2240, 2
        %v2302 = vsel %vm1588, %v2299, %v2301
        %v2303 = vrot.slane %v2241, 2
        %v2304 = vrot.slane %v2242, 2
        %v2305 = vsel %vm1588, %v2303, %v2304
        %v2306 = vrot.slane %v2243, 2
        %v2307 = vsel %vm1588, %v2304, %v2306
        %v2324 = vadd.f32 %v2187, %v2270
        %v2325 = vadd.f32 %v2188, %v2272
        %v2326 = vadd.f32 %v2189, %v2275
        %v2327 = vadd.f32 %v2190, %v2277
        %v2328 = vadd.f32 %v2191, %v2280
        %v2329 = vadd.f32 %v2192, %v2282
        %v2330 = vadd.f32 %v2193, %v2285
        %v2331 = vadd.f32 %v2194, %v2287
        %v2332 = vadd.f32 %v2195, %v2290
        %v2333 = vadd.f32 %v2196, %v2292
        %v2334 = vadd.f32 %v2197, %v2295
        %v2335 = vadd.f32 %v2198, %v2297
        %v2336 = vadd.f32 %v2199, %v2300
        %v2337 = vadd.f32 %v2200, %v2302
        %v2338 = vadd.f32 %v2201, %v2305
        %v2339 = vadd.f32 %v2202, %v2307
        %v2341 = vperm.slane %v353, 0
        %v2343 = vadd.f32 %v2324, %v2341
        %v2344 = vadd.f32 %v2325, %v2341
        %v2345 = vadd.f32 %v2326, %v2341
        %v2346 = vadd.f32 %v2327, %v2341
        %v2347 = vadd.f32 %v2328, %v2341
        %v2348 = vadd.f32 %v2329, %v2341
        %v2349 = vadd.f32 %v2330, %v2341
        %v2350 = vadd.f32 %v2331, %v2341
        %v2351 = vadd.f32 %v2332, %v2341
        %v2352 = vadd.f32 %v2333, %v2341
        %v2353 = vadd.f32 %v2334, %v2341
        %v2354 = vadd.f32 %v2335, %v2341
        %v2355 = vadd.f32 %v2336, %v2341
        %v2356 = vadd.f32 %v2337, %v2341
        %v2357 = vadd.f32 %v2338, %v2341
        %v2358 = vadd.f32 %v2339, %v2341
        %v2359 = vmax.f32 %v2343, 0.0
        %v2360 = vmax.f32 %v2344, 0.0
        %v2361 = vmax.f32 %v2345, 0.0
        %v2362 = vmax.f32 %v2346, 0.0
        %v2363 = vmax.f32 %v2347, 0.0
        %v2364 = vmax.f32 %v2348, 0.0
        %v2365 = vmax.f32 %v2349, 0.0
        %v2366 = vmax.f32 %v2350, 0.0
        %v2367 = vmax.f32 %v2351, 0.0
        %v2368 = vmax.f32 %v2352, 0.0
        %v2369 = vmax.f32 %v2353, 0.0
        %v2370 = vmax.f32 %v2354, 0.0
        %v2371 = vmax.f32 %v2355, 0.0
        %v2372 = vmax.f32 %v2356, 0.0
        %v2373 = vmax.f32 %v2357, 0.0
        %v2374 = vmax.f32 %v2358, 0.0
        %v2375 = vmin.f32 %v2359, 6.0
        %v2376 = vmin.f32 %v2360, 6.0
        %v2377 = vmin.f32 %v2361, 6.0
        %v2378 = vmin.f32 %v2362, 6.0
        %v2379 = vmin.f32 %v2363, 6.0
        %v2380 = vmin.f32 %v2364, 6.0
        %v2381 = vmin.f32 %v2365, 6.0
        %v2382 = vmin.f32 %v2366, 6.0
        %v2383 = vmin.f32 %v2367, 6.0
        %v2384 = vmin.f32 %v2368, 6.0
        %v2385 = vmin.f32 %v2369, 6.0
        %v2386 = vmin.f32 %v2370, 6.0
        %v2387 = vmin.f32 %v2371, 6.0
        %v2388 = vmin.f32 %v2372, 6.0
        %v2389 = vmin.f32 %v2373, 6.0
        %v2390 = vmin.f32 %v2374, 6.0
        %v2391 = vpack.c.bf16 %v2375, %v2375
        %v2392 = vpack.c.bf16 %v2376, %v2376
        %v2393 = vpack.c.bf16 %v2377, %v2377
        %v2394 = vpack.c.bf16 %v2378, %v2378
        %v2395 = vpack.c.bf16 %v2379, %v2379
        %v2396 = vpack.c.bf16 %v2380, %v2380
        %v2397 = vpack.c.bf16 %v2381, %v2381
        %v2398 = vpack.c.bf16 %v2382, %v2382
        %v2399 = vpack.c.bf16 %v2383, %v2383
        %v2400 = vpack.c.bf16 %v2384, %v2384
        %v2401 = vpack.c.bf16 %v2385, %v2385
        %v2402 = vpack.c.bf16 %v2386, %v2386
        %v2403 = vpack.c.bf16 %v2387, %v2387
        %v2404 = vpack.c.bf16 %v2388, %v2388
        %v2405 = vpack.c.bf16 %v2389, %v2389
        %v2406 = vpack.c.bf16 %v2390, %v2390
        %v2408 = vperm.slane %v370, 0
        %v2426 = vunpack.c.l.b16 %v2391
        %v2427 = vunpack.c.l.b16 %v2392
        %v2428 = vunpack.c.l.b16 %v2393
        %v2429 = vunpack.c.l.b16 %v2394
        %v2430 = vunpack.c.l.b16 %v2395
        %v2431 = vunpack.c.l.b16 %v2396
        %v2432 = vunpack.c.l.b16 %v2397
        %v2433 = vunpack.c.l.b16 %v2398
        %v2434 = vunpack.c.l.b16 %v2399
        %v2435 = vunpack.c.l.b16 %v2400
        %v2436 = vunpack.c.l.b16 %v2401
        %v2437 = vunpack.c.l.b16 %v2402
        %v2438 = vunpack.c.l.b16 %v2403
        %v2439 = vunpack.c.l.b16 %v2404
        %v2440 = vunpack.c.l.b16 %v2405
        %v2441 = vunpack.c.l.b16 %v2406
        %v2442 = vpack.c.b16 %v2427, %v2426
        %v2443 = vpack.c.b16 %v2429, %v2428
        %v2444 = vpack.c.b16 %v2431, %v2430
        %v2445 = vpack.c.b16 %v2433, %v2432
        %v2446 = vpack.c.b16 %v2435, %v2434
        %v2447 = vpack.c.b16 %v2437, %v2436
        %v2448 = vpack.c.b16 %v2439, %v2438
        %v2449 = vpack.c.b16 %v2441, %v2440
        %v2474 = vunpack.c.l.b16 %v354
        %v2475 = vunpack.c.l.b16 %v355
        %v2476 = vunpack.c.l.b16 %v356
        %v2477 = vunpack.c.l.b16 %v357
        %v2478 = vunpack.c.l.b16 %v358
        %v2479 = vunpack.c.l.b16 %v359
        %v2480 = vunpack.c.l.b16 %v360
        %v2481 = vunpack.c.l.b16 %v361
        %v2482 = vunpack.c.l.b16 %v362
        %v2483 = vunpack.c.l.b16 %v363
        %v2484 = vunpack.c.l.b16 %v364
        %v2485 = vunpack.c.l.b16 %v365
        %v2486 = vunpack.c.l.b16 %v366
        %v2487 = vunpack.c.l.b16 %v367
        %v2488 = vunpack.c.l.b16 %v368
        %v2489 = vunpack.c.l.b16 %v369
        %v2490 = vpack.c.b16 %v2475, %v2474
        %v2491 = vpack.c.b16 %v2477, %v2476
        %v2492 = vpack.c.b16 %v2479, %v2478
        %v2493 = vpack.c.b16 %v2481, %v2480
        %v2494 = vpack.c.b16 %v2483, %v2482
        %v2495 = vpack.c.b16 %v2485, %v2484
        %v2496 = vpack.c.b16 %v2487, %v2486
        %v2497 = vpack.c.b16 %v2489, %v2488
        %2506 = vmatpush.bf16.msra.mxu0 %v2497
        %2507 = vmatpush.bf16.msra.mxu0 %v2496
        %2508 = vmatpush.bf16.msra.mxu0 %v2495
        %2509 = vmatpush.bf16.msra.mxu0 %v2494
        %2510 = vmatpush.bf16.msra.mxu0 %v2493
        %2511 = vmatpush.bf16.msra.mxu0 %v2492
        %2512 = vmatpush.bf16.msra.mxu0 %v2491
        %2513 = vmatpush.bf16.msra.mxu0 %v2490
        %2514 = vmatmul.bf16.gmra.mxu0 %v2442
        %v2515 = vpop.f32.mrf.mxu0
        %v2516 = vadd.f32 %v2408, %v2515
        %v2517 = vpop.f32.mrf.mxu0
        %v2518 = vadd.f32 %v2408, %v2517
        %2519 = vmatmul.bf16.gmra.mxu0 %v2443
        %v2520 = vpop.f32.mrf.mxu0
        %v2521 = vadd.f32 %v2408, %v2520
        %v2522 = vpop.f32.mrf.mxu0
        %v2523 = vadd.f32 %v2408, %v2522
        %2524 = vmatmul.bf16.gmra.mxu0 %v2444
        %v2525 = vpop.f32.mrf.mxu0
        %v2526 = vadd.f32 %v2408, %v2525
        %v2527 = vpop.f32.mrf.mxu0
        %v2528 = vadd.f32 %v2408, %v2527
        %2529 = vmatmul.bf16.gmra.mxu0 %v2445
        %v2530 = vpop.f32.mrf.mxu0
        %v2531 = vadd.f32 %v2408, %v2530
        %v2532 = vpop.f32.mrf.mxu0
        %v2533 = vadd.f32 %v2408, %v2532
        %2534 = vmatmul.bf16.gmra.mxu0 %v2446
        %v2535 = vpop.f32.mrf.mxu0
        %v2536 = vadd.f32 %v2408, %v2535
        %v2537 = vpop.f32.mrf.mxu0
        %v2538 = vadd.f32 %v2408, %v2537
        %2539 = vmatmul.bf16.gmra.mxu0 %v2447
        %v2540 = vpop.f32.mrf.mxu0
        %v2541 = vadd.f32 %v2408, %v2540
        %v2542 = vpop.f32.mrf.mxu0
        %v2543 = vadd.f32 %v2408, %v2542
        %2544 = vmatmul.bf16.gmra.mxu0 %v2448
        %v2545 = vpop.f32.mrf.mxu0
        %v2546 = vadd.f32 %v2408, %v2545
        %v2547 = vpop.f32.mrf.mxu0
        %v2548 = vadd.f32 %v2408, %v2547
        %2549 = vmatmul.bf16.gmra.mxu0 %v2449
        %v2550 = vpop.f32.mrf.mxu0
        %v2551 = vadd.f32 %v2408, %v2550
        %v2552 = vpop.f32.mrf.mxu0
        %v2553 = vadd.f32 %v2408, %v2552
        %2554 = vdwg.mxu0
        %v2555 = vld [vmem:[%s302] sm:$0xf]
        %v2556 = vld [vmem:[%s302 + $0x4] sm:$0xf]
        %v2557 = vld [vmem:[%s302 + $0x8] sm:$0xf]
        %v2558 = vld [vmem:[%s302 + $0xc] sm:$0xf]
        %v2559 = vld [vmem:[%s302 + $0x10] sm:$0xf]
        %v2560 = vld [vmem:[%s302 + $0x14] sm:$0xf]
        %v2561 = vld [vmem:[%s302 + $0x18] sm:$0xf]
        %v2562 = vld [vmem:[%s302 + $0x1c] sm:$0xf]
        %v2563 = vld [vmem:[%s302 + $0x20] sm:$0xf]
        %v2564 = vld [vmem:[%s302 + $0x24] sm:$0xf]
        %v2565 = vld [vmem:[%s302 + $0x28] sm:$0xf]
        %v2566 = vld [vmem:[%s302 + $0x2c] sm:$0xf]
        %v2567 = vld [vmem:[%s302 + $0x30] sm:$0xf]
        %v2568 = vld [vmem:[%s302 + $0x34] sm:$0xf]
        %v2569 = vld [vmem:[%s302 + $0x38] sm:$0xf]
        %v2570 = vld [vmem:[%s302 + $0x3c] sm:$0xf]
        %v2571 = vunpack.c.l.bf16 %v2555
        %v2572 = vunpack.c.l.bf16 %v2556
        %v2573 = vunpack.c.l.bf16 %v2557
        %v2574 = vunpack.c.l.bf16 %v2558
        %v2575 = vunpack.c.l.bf16 %v2559
        %v2576 = vunpack.c.l.bf16 %v2560
        %v2577 = vunpack.c.l.bf16 %v2561
        %v2578 = vunpack.c.l.bf16 %v2562
        %v2579 = vunpack.c.l.bf16 %v2563
        %v2580 = vunpack.c.l.bf16 %v2564
        %v2581 = vunpack.c.l.bf16 %v2565
        %v2582 = vunpack.c.l.bf16 %v2566
        %v2583 = vunpack.c.l.bf16 %v2567
        %v2584 = vunpack.c.l.bf16 %v2568
        %v2585 = vunpack.c.l.bf16 %v2569
        %v2586 = vunpack.c.l.bf16 %v2570
        %v2587 = vadd.f32 %v2516, %v2571
        %v2588 = vadd.f32 %v2518, %v2572
        %v2589 = vadd.f32 %v2521, %v2573
        %v2590 = vadd.f32 %v2523, %v2574
        %v2591 = vadd.f32 %v2526, %v2575
        %v2592 = vadd.f32 %v2528, %v2576
        %v2593 = vadd.f32 %v2531, %v2577
        %v2594 = vadd.f32 %v2533, %v2578
        %v2595 = vadd.f32 %v2536, %v2579
        %v2596 = vadd.f32 %v2538, %v2580
        %v2597 = vadd.f32 %v2541, %v2581
        %v2598 = vadd.f32 %v2543, %v2582
        %v2599 = vadd.f32 %v2546, %v2583
        %v2600 = vadd.f32 %v2548, %v2584
        %v2601 = vadd.f32 %v2551, %v2585
        %v2602 = vadd.f32 %v2553, %v2586
        %2603 = vst [vmem:[%s348] sm:$0xff] %v2587
        %2604 = vst [vmem:[%s348 + $0x8] sm:$0xff] %v2588
        %2605 = vst [vmem:[%s348 + $0x10] sm:$0xff] %v2589
        %2606 = vst [vmem:[%s348 + $0x18] sm:$0xff] %v2590
        %2607 = vst [vmem:[%s348 + $0x20] sm:$0xff] %v2591
        %2608 = vst [vmem:[%s348 + $0x28] sm:$0xff] %v2592
        %2609 = vst [vmem:[%s348 + $0x30] sm:$0xff] %v2593
        %2610 = vst [vmem:[%s348 + $0x38] sm:$0xff] %v2594
        %2611 = vst [vmem:[%s348 + $0x40] sm:$0xff] %v2595
        %2612 = vst [vmem:[%s348 + $0x48] sm:$0xff] %v2596
        %2613 = vst [vmem:[%s348 + $0x50] sm:$0xff] %v2597
        %2614 = vst [vmem:[%s348 + $0x58] sm:$0xff] %v2598
        %2615 = vst [vmem:[%s348 + $0x60] sm:$0xff] %v2599
        %2616 = vst [vmem:[%s348 + $0x68] sm:$0xff] %v2600
        %2617 = vst [vmem:[%s348 + $0x70] sm:$0xff] %v2601
        %2618 = vst [vmem:[%s348 + $0x78] sm:$0xff] %v2602
        %s2619 = scalar_lea.vmem [#allocation2], 96
        %v2620 = vld [vmem:[%s2619] sm:$0xf]
        %v2621 = vld [vmem:[%s2619 + $0x4] sm:$0xf]
        %v2622 = vld [vmem:[%s2619 + $0xc] sm:$0xf]
        %v2623 = vld [vmem:[%s2619 + $0x10] sm:$0xf]
        %v2624 = vld [vmem:[%s2619 + $0x18] sm:$0xf]
        %v2625 = vld [vmem:[%s2619 + $0x1c] sm:$0xf]
        %v2626 = vld [vmem:[%s2619 + $0x24] sm:$0xf]
        %v2627 = vld [vmem:[%s2619 + $0x28] sm:$0xf]
        %v2628 = vld [vmem:[%s2619 + $0x30] sm:$0xf]
        %v2629 = vld [vmem:[%s2619 + $0x34] sm:$0xf]
        %v2630 = vld [vmem:[%s2619 + $0x3c] sm:$0xf]
        %v2631 = vld [vmem:[%s2619 + $0x40] sm:$0xf]
        %v2632 = vld [vmem:[%s2619 + $0x48] sm:$0xf]
        %v2633 = vld [vmem:[%s2619 + $0x4c] sm:$0xf]
        %v2634 = vld [vmem:[%s2619 + $0x54] sm:$0xf]
        %v2635 = vld [vmem:[%s2619 + $0x58] sm:$0xf]
        %v2636 = vunpack.c.l.bf16 %v2620
        %v2637 = vunpack.c.l.bf16 %v2621
        %v2638 = vunpack.c.l.bf16 %v2622
        %v2639 = vunpack.c.l.bf16 %v2623
        %v2640 = vunpack.c.l.bf16 %v2624
        %v2641 = vunpack.c.l.bf16 %v2625
        %v2642 = vunpack.c.l.bf16 %v2626
        %v2643 = vunpack.c.l.bf16 %v2627
        %v2644 = vunpack.c.l.bf16 %v2628
        %v2645 = vunpack.c.l.bf16 %v2629
        %v2646 = vunpack.c.l.bf16 %v2630
        %v2647 = vunpack.c.l.bf16 %v2631
        %v2648 = vunpack.c.l.bf16 %v2632
        %v2649 = vunpack.c.l.bf16 %v2633
        %v2650 = vunpack.c.l.bf16 %v2634
        %v2651 = vunpack.c.l.bf16 %v2635
        %v2652 = vmul.f32 %v2636, %v1352
        %v2653 = vmul.f32 %v2637, %v1352
        %v2654 = vmul.f32 %v2638, %v1352
        %v2655 = vmul.f32 %v2639, %v1352
        %v2656 = vmul.f32 %v2640, %v1352
        %v2657 = vmul.f32 %v2641, %v1352
        %v2658 = vmul.f32 %v2642, %v1352
        %v2659 = vmul.f32 %v2643, %v1352
        %v2660 = vmul.f32 %v2644, %v1352
        %v2661 = vmul.f32 %v2645, %v1352
        %v2662 = vmul.f32 %v2646, %v1352
        %v2663 = vmul.f32 %v2647, %v1352
        %v2664 = vmul.f32 %v2648, %v1352
        %v2665 = vmul.f32 %v2649, %v1352
        %v2666 = vmul.f32 %v2650, %v1352
        %v2667 = vmul.f32 %v2651, %v1352
        %v2668 = vadd.f32 %v2652, 0.0
        %v2669 = vadd.f32 %v2653, 0.0
        %v2670 = vadd.f32 %v2654, 0.0
        %v2671 = vadd.f32 %v2655, 0.0
        %v2672 = vadd.f32 %v2656, 0.0
        %v2673 = vadd.f32 %v2657, 0.0
        %v2674 = vadd.f32 %v2658, 0.0
        %v2675 = vadd.f32 %v2659, 0.0
        %v2676 = vadd.f32 %v2660, 0.0
        %v2677 = vadd.f32 %v2661, 0.0
        %v2678 = vadd.f32 %v2662, 0.0
        %v2679 = vadd.f32 %v2663, 0.0
        %v2680 = vadd.f32 %v2664, 0.0
        %v2681 = vadd.f32 %v2665, 0.0
        %v2682 = vadd.f32 %v2666, 0.0
        %v2683 = vadd.f32 %v2667, 0.0
        %v2684 = vld [vmem:[%s2619 + $0x8] sm:$0x1]
        %v2685 = vld [vmem:[%s2619 + $0x14] sm:$0x1]
        %v2686 = vld [vmem:[%s2619 + $0x20] sm:$0x1]
        %v2687 = vld [vmem:[%s2619 + $0x2c] sm:$0x1]
        %v2688 = vld [vmem:[%s2619 + $0x38] sm:$0x1]
        %v2689 = vld [vmem:[%s2619 + $0x44] sm:$0x1]
        %v2690 = vld [vmem:[%s2619 + $0x50] sm:$0x1]
        %v2691 = vld [vmem:[%s2619 + $0x5c] sm:$0x1]
        %v2692 = vunpack.c.l.bf16 %v2684
        %v2693 = vunpack.c.l.bf16 %v2685
        %v2694 = vunpack.c.l.bf16 %v2686
        %v2695 = vunpack.c.l.bf16 %v2687
        %v2696 = vunpack.c.l.bf16 %v2688
        %v2697 = vunpack.c.l.bf16 %v2689
        %v2698 = vunpack.c.l.bf16 %v2690
        %v2699 = vunpack.c.l.bf16 %v2691
        %v2700 = vmul.f32 %v2636, %v1401
        %v2701 = vmul.f32 %v2637, %v1401
        %v2702 = vmul.f32 %v2692, %v1401
        %v2703 = vmul.f32 %v2638, %v1401
        %v2704 = vmul.f32 %v2639, %v1401
        %v2705 = vmul.f32 %v2693, %v1401
        %v2706 = vmul.f32 %v2640, %v1401
        %v2707 = vmul.f32 %v2641, %v1401
        %v2708 = vmul.f32 %v2694, %v1401
        %v2709 = vmul.f32 %v2642, %v1401
        %v2710 = vmul.f32 %v2643, %v1401
        %v2711 = vmul.f32 %v2695, %v1401
        %v2712 = vmul.f32 %v2644, %v1401
        %v2713 = vmul.f32 %v2645, %v1401
        %v2714 = vmul.f32 %v2696, %v1401
        %v2715 = vmul.f32 %v2646, %v1401
        %v2716 = vmul.f32 %v2647, %v1401
        %v2717 = vmul.f32 %v2697, %v1401
        %v2718 = vmul.f32 %v2648, %v1401
        %v2719 = vmul.f32 %v2649, %v1401
        %v2720 = vmul.f32 %v2698, %v1401
        %v2721 = vmul.f32 %v2650, %v1401
        %v2722 = vmul.f32 %v2651, %v1401
        %v2723 = vmul.f32 %v2699, %v1401
        %v2748 = vrot.slane %v2700, 1
        %v2749 = vrot.slane %v2701, 1
        %v2750 = vsel %vm1450, %v2748, %v2749
        %v2751 = vrot.slane %v2702, 1
        %v2752 = vsel %vm1450, %v2749, %v2751
        %v2753 = vrot.slane %v2703, 1
        %v2754 = vrot.slane %v2704, 1
        %v2755 = vsel %vm1450, %v2753, %v2754
        %v2756 = vrot.slane %v2705, 1
        %v2757 = vsel %vm1450, %v2754, %v2756
        %v2758 = vrot.slane %v2706, 1
        %v2759 = vrot.slane %v2707, 1
        %v2760 = vsel %vm1450, %v2758, %v2759
        %v2761 = vrot.slane %v2708, 1
        %v2762 = vsel %vm1450, %v2759, %v2761
        %v2763 = vrot.slane %v2709, 1
        %v2764 = vrot.slane %v2710, 1
        %v2765 = vsel %vm1450, %v2763, %v2764
        %v2766 = vrot.slane %v2711, 1
        %v2767 = vsel %vm1450, %v2764, %v2766
        %v2768 = vrot.slane %v2712, 1
        %v2769 = vrot.slane %v2713, 1
        %v2770 = vsel %vm1450, %v2768, %v2769
        %v2771 = vrot.slane %v2714, 1
        %v2772 = vsel %vm1450, %v2769, %v2771
        %v2773 = vrot.slane %v2715, 1
        %v2774 = vrot.slane %v2716, 1
        %v2775 = vsel %vm1450, %v2773, %v2774
        %v2776 = vrot.slane %v2717, 1
        %v2777 = vsel %vm1450, %v2774, %v2776
        %v2778 = vrot.slane %v2718, 1
        %v2779 = vrot.slane %v2719, 1
        %v2780 = vsel %vm1450, %v2778, %v2779
        %v2781 = vrot.slane %v2720, 1
        %v2782 = vsel %vm1450, %v2779, %v2781
        %v2783 = vrot.slane %v2721, 1
        %v2784 = vrot.slane %v2722, 1
        %v2785 = vsel %vm1450, %v2783, %v2784
        %v2786 = vrot.slane %v2723, 1
        %v2787 = vsel %vm1450, %v2784, %v2786
        %v2804 = vadd.f32 %v2668, %v2750
        %v2805 = vadd.f32 %v2669, %v2752
        %v2806 = vadd.f32 %v2670, %v2755
        %v2807 = vadd.f32 %v2671, %v2757
        %v2808 = vadd.f32 %v2672, %v2760
        %v2809 = vadd.f32 %v2673, %v2762
        %v2810 = vadd.f32 %v2674, %v2765
        %v2811 = vadd.f32 %v2675, %v2767
        %v2812 = vadd.f32 %v2676, %v2770
        %v2813 = vadd.f32 %v2677, %v2772
        %v2814 = vadd.f32 %v2678, %v2775
        %v2815 = vadd.f32 %v2679, %v2777
        %v2816 = vadd.f32 %v2680, %v2780
        %v2817 = vadd.f32 %v2681, %v2782
        %v2818 = vadd.f32 %v2682, %v2785
        %v2819 = vadd.f32 %v2683, %v2787
        %v2820 = vld [vmem:[%s2619] sm:$0xe]
        %v2821 = vld [vmem:[%s2619 + $0xc] sm:$0xe]
        %v2822 = vld [vmem:[%s2619 + $0x18] sm:$0xe]
        %v2823 = vld [vmem:[%s2619 + $0x24] sm:$0xe]
        %v2824 = vld [vmem:[%s2619 + $0x30] sm:$0xe]
        %v2825 = vld [vmem:[%s2619 + $0x3c] sm:$0xe]
        %v2826 = vld [vmem:[%s2619 + $0x48] sm:$0xe]
        %v2827 = vld [vmem:[%s2619 + $0x54] sm:$0xe]
        %v2828 = vunpack.c.l.bf16 %v2820
        %v2829 = vunpack.c.l.bf16 %v2821
        %v2830 = vunpack.c.l.bf16 %v2822
        %v2831 = vunpack.c.l.bf16 %v2823
        %v2832 = vunpack.c.l.bf16 %v2824
        %v2833 = vunpack.c.l.bf16 %v2825
        %v2834 = vunpack.c.l.bf16 %v2826
        %v2835 = vunpack.c.l.bf16 %v2827
        %v2836 = vmul.f32 %v2828, %v1539
        %v2837 = vmul.f32 %v2637, %v1539
        %v2838 = vmul.f32 %v2692, %v1539
        %v2839 = vmul.f32 %v2829, %v1539
        %v2840 = vmul.f32 %v2639, %v1539
        %v2841 = vmul.f32 %v2693, %v1539
        %v2842 = vmul.f32 %v2830, %v1539
        %v2843 = vmul.f32 %v2641, %v1539
        %v2844 = vmul.f32 %v2694, %v1539
        %v2845 = vmul.f32 %v2831, %v1539
        %v2846 = vmul.f32 %v2643, %v1539
        %v2847 = vmul.f32 %v2695, %v1539
        %v2848 = vmul.f32 %v2832, %v1539
        %v2849 = vmul.f32 %v2645, %v1539
        %v2850 = vmul.f32 %v2696, %v1539
        %v2851 = vmul.f32 %v2833, %v1539
        %v2852 = vmul.f32 %v2647, %v1539
        %v2853 = vmul.f32 %v2697, %v1539
        %v2854 = vmul.f32 %v2834, %v1539
        %v2855 = vmul.f32 %v2649, %v1539
        %v2856 = vmul.f32 %v2698, %v1539
        %v2857 = vmul.f32 %v2835, %v1539
        %v2858 = vmul.f32 %v2651, %v1539
        %v2859 = vmul.f32 %v2699, %v1539
        %v2884 = vrot.slane %v2836, 2
        %v2885 = vrot.slane %v2837, 2
        %v2886 = vsel %vm1588, %v2884, %v2885
        %v2887 = vrot.slane %v2838, 2
        %v2888 = vsel %vm1588, %v2885, %v2887
        %v2889 = vrot.slane %v2839, 2
        %v2890 = vrot.slane %v2840, 2
        %v2891 = vsel %vm1588, %v2889, %v2890
        %v2892 = vrot.slane %v2841, 2
        %v2893 = vsel %vm1588, %v2890, %v2892
        %v2894 = vrot.slane %v2842, 2
        %v2895 = vrot.slane %v2843, 2
        %v2896 = vsel %vm1588, %v2894, %v2895
        %v2897 = vrot.slane %v2844, 2
        %v2898 = vsel %vm1588, %v2895, %v2897
        %v2899 = vrot.slane %v2845, 2
        %v2900 = vrot.slane %v2846, 2
        %v2901 = vsel %vm1588, %v2899, %v2900
        %v2902 = vrot.slane %v2847, 2
        %v2903 = vsel %vm1588, %v2900, %v2902
        %v2904 = vrot.slane %v2848, 2
        %v2905 = vrot.slane %v2849, 2
        %v2906 = vsel %vm1588, %v2904, %v2905
        %v2907 = vrot.slane %v2850, 2
        %v2908 = vsel %vm1588, %v2905, %v2907
        %v2909 = vrot.slane %v2851, 2
        %v2910 = vrot.slane %v2852, 2
        %v2911 = vsel %vm1588, %v2909, %v2910
        %v2912 = vrot.slane %v2853, 2
        %v2913 = vsel %vm1588, %v2910, %v2912
        %v2914 = vrot.slane %v2854, 2
        %v2915 = vrot.slane %v2855, 2
        %v2916 = vsel %vm1588, %v2914, %v2915
        %v2917 = vrot.slane %v2856, 2
        %v2918 = vsel %vm1588, %v2915, %v2917
        %v2919 = vrot.slane %v2857, 2
        %v2920 = vrot.slane %v2858, 2
        %v2921 = vsel %vm1588, %v2919, %v2920
        %v2922 = vrot.slane %v2859, 2
        %v2923 = vsel %vm1588, %v2920, %v2922
        %v2940 = vadd.f32 %v2804, %v2886
        %v2941 = vadd.f32 %v2805, %v2888
        %v2942 = vadd.f32 %v2806, %v2891
        %v2943 = vadd.f32 %v2807, %v2893
        %v2944 = vadd.f32 %v2808, %v2896
        %v2945 = vadd.f32 %v2809, %v2898
        %v2946 = vadd.f32 %v2810, %v2901
        %v2947 = vadd.f32 %v2811, %v2903
        %v2948 = vadd.f32 %v2812, %v2906
        %v2949 = vadd.f32 %v2813, %v2908
        %v2950 = vadd.f32 %v2814, %v2911
        %v2951 = vadd.f32 %v2815, %v2913
        %v2952 = vadd.f32 %v2816, %v2916
        %v2953 = vadd.f32 %v2817, %v2918
        %v2954 = vadd.f32 %v2818, %v2921
        %v2955 = vadd.f32 %v2819, %v2923
        %v2956 = vld [vmem:[%s1263] sm:$0xf]
        %v2957 = vld [vmem:[%s1263 + $0x4] sm:$0xf]
        %v2958 = vld [vmem:[%s1263 + $0xc] sm:$0xf]
        %v2959 = vld [vmem:[%s1263 + $0x10] sm:$0xf]
        %v2960 = vld [vmem:[%s1263 + $0x18] sm:$0xf]
        %v2961 = vld [vmem:[%s1263 + $0x1c] sm:$0xf]
        %v2962 = vld [vmem:[%s1263 + $0x24] sm:$0xf]
        %v2963 = vld [vmem:[%s1263 + $0x28] sm:$0xf]
        %v2964 = vld [vmem:[%s1263 + $0x30] sm:$0xf]
        %v2965 = vld [vmem:[%s1263 + $0x34] sm:$0xf]
        %v2966 = vld [vmem:[%s1263 + $0x3c] sm:$0xf]
        %v2967 = vld [vmem:[%s1263 + $0x40] sm:$0xf]
        %v2968 = vld [vmem:[%s1263 + $0x48] sm:$0xf]
        %v2969 = vld [vmem:[%s1263 + $0x4c] sm:$0xf]
        %v2970 = vld [vmem:[%s1263 + $0x54] sm:$0xf]
        %v2971 = vld [vmem:[%s1263 + $0x58] sm:$0xf]
        %v2972 = vunpack.c.l.bf16 %v2956
        %v2973 = vunpack.c.l.bf16 %v2957
        %v2974 = vunpack.c.l.bf16 %v2958
        %v2975 = vunpack.c.l.bf16 %v2959
        %v2976 = vunpack.c.l.bf16 %v2960
        %v2977 = vunpack.c.l.bf16 %v2961
        %v2978 = vunpack.c.l.bf16 %v2962
        %v2979 = vunpack.c.l.bf16 %v2963
        %v2980 = vunpack.c.l.bf16 %v2964
        %v2981 = vunpack.c.l.bf16 %v2965
        %v2982 = vunpack.c.l.bf16 %v2966
        %v2983 = vunpack.c.l.bf16 %v2967
        %v2984 = vunpack.c.l.bf16 %v2968
        %v2985 = vunpack.c.l.bf16 %v2969
        %v2986 = vunpack.c.l.bf16 %v2970
        %v2987 = vunpack.c.l.bf16 %v2971
        %v2988 = vmul.f32 %v2972, %v1693
        %v2989 = vmul.f32 %v2973, %v1693
        %v2990 = vmul.f32 %v2974, %v1693
        %v2991 = vmul.f32 %v2975, %v1693
        %v2992 = vmul.f32 %v2976, %v1693
        %v2993 = vmul.f32 %v2977, %v1693
        %v2994 = vmul.f32 %v2978, %v1693
        %v2995 = vmul.f32 %v2979, %v1693
        %v2996 = vmul.f32 %v2980, %v1693
        %v2997 = vmul.f32 %v2981, %v1693
        %v2998 = vmul.f32 %v2982, %v1693
        %v2999 = vmul.f32 %v2983, %v1693
        %v3000 = vmul.f32 %v2984, %v1693
        %v3001 = vmul.f32 %v2985, %v1693
        %v3002 = vmul.f32 %v2986, %v1693
        %v3003 = vmul.f32 %v2987, %v1693
        %v3004 = vadd.f32 %v2940, %v2988
        %v3005 = vadd.f32 %v2941, %v2989
        %v3006 = vadd.f32 %v2942, %v2990
        %v3007 = vadd.f32 %v2943, %v2991
        %v3008 = vadd.f32 %v2944, %v2992
        %v3009 = vadd.f32 %v2945, %v2993
        %v3010 = vadd.f32 %v2946, %v2994
        %v3011 = vadd.f32 %v2947, %v2995
        %v3012 = vadd.f32 %v2948, %v2996
        %v3013 = vadd.f32 %v2949, %v2997
        %v3014 = vadd.f32 %v2950, %v2998
        %v3015 = vadd.f32 %v2951, %v2999
        %v3016 = vadd.f32 %v2952, %v3000
        %v3017 = vadd.f32 %v2953, %v3001
        %v3018 = vadd.f32 %v2954, %v3002
        %v3019 = vadd.f32 %v2955, %v3003
        %v3020 = vld [vmem:[%s1263 + $0x8] sm:$0x1]
        %v3021 = vld [vmem:[%s1263 + $0x14] sm:$0x1]
        %v3022 = vld [vmem:[%s1263 + $0x20] sm:$0x1]
        %v3023 = vld [vmem:[%s1263 + $0x2c] sm:$0x1]
        %v3024 = vld [vmem:[%s1263 + $0x38] sm:$0x1]
        %v3025 = vld [vmem:[%s1263 + $0x44] sm:$0x1]
        %v3026 = vld [vmem:[%s1263 + $0x50] sm:$0x1]
        %v3027 = vld [vmem:[%s1263 + $0x5c] sm:$0x1]
        %v3028 = vunpack.c.l.bf16 %v3020
        %v3029 = vunpack.c.l.bf16 %v3021
        %v3030 = vunpack.c.l.bf16 %v3022
        %v3031 = vunpack.c.l.bf16 %v3023
        %v3032 = vunpack.c.l.bf16 %v3024
        %v3033 = vunpack.c.l.bf16 %v3025
        %v3034 = vunpack.c.l.bf16 %v3026
        %v3035 = vunpack.c.l.bf16 %v3027
        %v3036 = vmul.f32 %v2972, %v1742
        %v3037 = vmul.f32 %v2973, %v1742
        %v3038 = vmul.f32 %v3028, %v1742
        %v3039 = vmul.f32 %v2974, %v1742
        %v3040 = vmul.f32 %v2975, %v1742
        %v3041 = vmul.f32 %v3029, %v1742
        %v3042 = vmul.f32 %v2976, %v1742
        %v3043 = vmul.f32 %v2977, %v1742
        %v3044 = vmul.f32 %v3030, %v1742
        %v3045 = vmul.f32 %v2978, %v1742
        %v3046 = vmul.f32 %v2979, %v1742
        %v3047 = vmul.f32 %v3031, %v1742
        %v3048 = vmul.f32 %v2980, %v1742
        %v3049 = vmul.f32 %v2981, %v1742
        %v3050 = vmul.f32 %v3032, %v1742
        %v3051 = vmul.f32 %v2982, %v1742
        %v3052 = vmul.f32 %v2983, %v1742
        %v3053 = vmul.f32 %v3033, %v1742
        %v3054 = vmul.f32 %v2984, %v1742
        %v3055 = vmul.f32 %v2985, %v1742
        %v3056 = vmul.f32 %v3034, %v1742
        %v3057 = vmul.f32 %v2986, %v1742
        %v3058 = vmul.f32 %v2987, %v1742
        %v3059 = vmul.f32 %v3035, %v1742
        %v3084 = vrot.slane %v3036, 1
        %v3085 = vrot.slane %v3037, 1
        %v3086 = vsel %vm1450, %v3084, %v3085
        %v3087 = vrot.slane %v3038, 1
        %v3088 = vsel %vm1450, %v3085, %v3087
        %v3089 = vrot.slane %v3039, 1
        %v3090 = vrot.slane %v3040, 1
        %v3091 = vsel %vm1450, %v3089, %v3090
        %v3092 = vrot.slane %v3041, 1
        %v3093 = vsel %vm1450, %v3090, %v3092
        %v3094 = vrot.slane %v3042, 1
        %v3095 = vrot.slane %v3043, 1
        %v3096 = vsel %vm1450, %v3094, %v3095
        %v3097 = vrot.slane %v3044, 1
        %v3098 = vsel %vm1450, %v3095, %v3097
        %v3099 = vrot.slane %v3045, 1
        %v3100 = vrot.slane %v3046, 1
        %v3101 = vsel %vm1450, %v3099, %v3100
        %v3102 = vrot.slane %v3047, 1
        %v3103 = vsel %vm1450, %v3100, %v3102
        %v3104 = vrot.slane %v3048, 1
        %v3105 = vrot.slane %v3049, 1
        %v3106 = vsel %vm1450, %v3104, %v3105
        %v3107 = vrot.slane %v3050, 1
        %v3108 = vsel %vm1450, %v3105, %v3107
        %v3109 = vrot.slane %v3051, 1
        %v3110 = vrot.slane %v3052, 1
        %v3111 = vsel %vm1450, %v3109, %v3110
        %v3112 = vrot.slane %v3053, 1
        %v3113 = vsel %vm1450, %v3110, %v3112
        %v3114 = vrot.slane %v3054, 1
        %v3115 = vrot.slane %v3055, 1
        %v3116 = vsel %vm1450, %v3114, %v3115
        %v3117 = vrot.slane %v3056, 1
        %v3118 = vsel %vm1450, %v3115, %v3117
        %v3119 = vrot.slane %v3057, 1
        %v3120 = vrot.slane %v3058, 1
        %v3121 = vsel %vm1450, %v3119, %v3120
        %v3122 = vrot.slane %v3059, 1
        %v3123 = vsel %vm1450, %v3120, %v3122
        %v3140 = vadd.f32 %v3004, %v3086
        %v3141 = vadd.f32 %v3005, %v3088
        %v3142 = vadd.f32 %v3006, %v3091
        %v3143 = vadd.f32 %v3007, %v3093
        %v3144 = vadd.f32 %v3008, %v3096
        %v3145 = vadd.f32 %v3009, %v3098
        %v3146 = vadd.f32 %v3010, %v3101
        %v3147 = vadd.f32 %v3011, %v3103
        %v3148 = vadd.f32 %v3012, %v3106
        %v3149 = vadd.f32 %v3013, %v3108
        %v3150 = vadd.f32 %v3014, %v3111
        %v3151 = vadd.f32 %v3015, %v3113
        %v3152 = vadd.f32 %v3016, %v3116
        %v3153 = vadd.f32 %v3017, %v3118
        %v3154 = vadd.f32 %v3018, %v3121
        %v3155 = vadd.f32 %v3019, %v3123
        %v3156 = vld [vmem:[%s1263] sm:$0xe]
        %v3157 = vld [vmem:[%s1263 + $0xc] sm:$0xe]
        %v3158 = vld [vmem:[%s1263 + $0x18] sm:$0xe]
        %v3159 = vld [vmem:[%s1263 + $0x24] sm:$0xe]
        %v3160 = vld [vmem:[%s1263 + $0x30] sm:$0xe]
        %v3161 = vld [vmem:[%s1263 + $0x3c] sm:$0xe]
        %v3162 = vld [vmem:[%s1263 + $0x48] sm:$0xe]
        %v3163 = vld [vmem:[%s1263 + $0x54] sm:$0xe]
        %v3164 = vunpack.c.l.bf16 %v3156
        %v3165 = vunpack.c.l.bf16 %v3157
        %v3166 = vunpack.c.l.bf16 %v3158
        %v3167 = vunpack.c.l.bf16 %v3159
        %v3168 = vunpack.c.l.bf16 %v3160
        %v3169 = vunpack.c.l.bf16 %v3161
        %v3170 = vunpack.c.l.bf16 %v3162
        %v3171 = vunpack.c.l.bf16 %v3163
        %v3172 = vmul.f32 %v3164, %v1879
        %v3173 = vmul.f32 %v2973, %v1879
        %v3174 = vmul.f32 %v3028, %v1879
        %v3175 = vmul.f32 %v3165, %v1879
        %v3176 = vmul.f32 %v2975, %v1879
        %v3177 = vmul.f32 %v3029, %v1879
        %v3178 = vmul.f32 %v3166, %v1879
        %v3179 = vmul.f32 %v2977, %v1879
        %v3180 = vmul.f32 %v3030, %v1879
        %v3181 = vmul.f32 %v3167, %v1879
        %v3182 = vmul.f32 %v2979, %v1879
        %v3183 = vmul.f32 %v3031, %v1879
        %v3184 = vmul.f32 %v3168, %v1879
        %v3185 = vmul.f32 %v2981, %v1879
        %v3186 = vmul.f32 %v3032, %v1879
        %v3187 = vmul.f32 %v3169, %v1879
        %v3188 = vmul.f32 %v2983, %v1879
        %v3189 = vmul.f32 %v3033, %v1879
        %v3190 = vmul.f32 %v3170, %v1879
        %v3191 = vmul.f32 %v2985, %v1879
        %v3192 = vmul.f32 %v3034, %v1879
        %v3193 = vmul.f32 %v3171, %v1879
        %v3194 = vmul.f32 %v2987, %v1879
        %v3195 = vmul.f32 %v3035, %v1879
        %v3220 = vrot.slane %v3172, 2
        %v3221 = vrot.slane %v3173, 2
        %v3222 = vsel %vm1588, %v3220, %v3221
        %v3223 = vrot.slane %v3174, 2
        %v3224 = vsel %vm1588, %v3221, %v3223
        %v3225 = vrot.slane %v3175, 2
        %v3226 = vrot.slane %v3176, 2
        %v3227 = vsel %vm1588, %v3225, %v3226
        %v3228 = vrot.slane %v3177, 2
        %v3229 = vsel %vm1588, %v3226, %v3228
        %v3230 = vrot.slane %v3178, 2
        %v3231 = vrot.slane %v3179, 2
        %v3232 = vsel %vm1588, %v3230, %v3231
        %v3233 = vrot.slane %v3180, 2
        %v3234 = vsel %vm1588, %v3231, %v3233
        %v3235 = vrot.slane %v3181, 2
        %v3236 = vrot.slane %v3182, 2
        %v3237 = vsel %vm1588, %v3235, %v3236
        %v3238 = vrot.slane %v3183, 2
        %v3239 = vsel %vm1588, %v3236, %v3238
        %v3240 = vrot.slane %v3184, 2
        %v3241 = vrot.slane %v3185, 2
        %v3242 = vsel %vm1588, %v3240, %v3241
        %v3243 = vrot.slane %v3186, 2
        %v3244 = vsel %vm1588, %v3241, %v3243
        %v3245 = vrot.slane %v3187, 2
        %v3246 = vrot.slane %v3188, 2
        %v3247 = vsel %vm1588, %v3245, %v3246
        %v3248 = vrot.slane %v3189, 2
        %v3249 = vsel %vm1588, %v3246, %v3248
        %v3250 = vrot.slane %v3190, 2
        %v3251 = vrot.slane %v3191, 2
        %v3252 = vsel %vm1588, %v3250, %v3251
        %v3253 = vrot.slane %v3192, 2
        %v3254 = vsel %vm1588, %v3251, %v3253
        %v3255 = vrot.slane %v3193, 2
        %v3256 = vrot.slane %v3194, 2
        %v3257 = vsel %vm1588, %v3255, %v3256
        %v3258 = vrot.slane %v3195, 2
        %v3259 = vsel %vm1588, %v3256, %v3258
        %v3276 = vadd.f32 %v3140, %v3222
        %v3277 = vadd.f32 %v3141, %v3224
        %v3278 = vadd.f32 %v3142, %v3227
        %v3279 = vadd.f32 %v3143, %v3229
        %v3280 = vadd.f32 %v3144, %v3232
        %v3281 = vadd.f32 %v3145, %v3234
        %v3282 = vadd.f32 %v3146, %v3237
        %v3283 = vadd.f32 %v3147, %v3239
        %v3284 = vadd.f32 %v3148, %v3242
        %v3285 = vadd.f32 %v3149, %v3244
        %v3286 = vadd.f32 %v3150, %v3247
        %v3287 = vadd.f32 %v3151, %v3249
        %v3288 = vadd.f32 %v3152, %v3252
        %v3289 = vadd.f32 %v3153, %v3254
        %v3290 = vadd.f32 %v3154, %v3257
        %v3291 = vadd.f32 %v3155, %v3259
        %s3292 = scalar_lea.vmem [#allocation2], 120
        %v3293 = vld [vmem:[%s3292] sm:$0xf]
        %v3294 = vld [vmem:[%s3292 + $0x4] sm:$0xf]
        %v3295 = vld [vmem:[%s3292 + $0xc] sm:$0xf]
        %v3296 = vld [vmem:[%s3292 + $0x10] sm:$0xf]
        %v3297 = vld [vmem:[%s3292 + $0x18] sm:$0xf]
        %v3298 = vld [vmem:[%s3292 + $0x1c] sm:$0xf]
        %v3299 = vld [vmem:[%s3292 + $0x24] sm:$0xf]
        %v3300 = vld [vmem:[%s3292 + $0x28] sm:$0xf]
        %v3301 = vld [vmem:[%s3292 + $0x30] sm:$0xf]
        %v3302 = vld [vmem:[%s3292 + $0x34] sm:$0xf]
        %v3303 = vld [vmem:[%s3292 + $0x3c] sm:$0xf]
        %v3304 = vld [vmem:[%s3292 + $0x40] sm:$0xf]
        %v3305 = vld [vmem:[%s3292 + $0x48] sm:$0xf]
        %v3306 = vld [vmem:[%s3292 + $0x4c] sm:$0xf]
        %v3307 = vld [vmem:[%s3292 + $0x54] sm:$0xf]
        %v3308 = vld [vmem:[%s3292 + $0x58] sm:$0xf]
        %v3309 = vunpack.c.l.bf16 %v3293
        %v3310 = vunpack.c.l.bf16 %v3294
        %v3311 = vunpack.c.l.bf16 %v3295
        %v3312 = vunpack.c.l.bf16 %v3296
        %v3313 = vunpack.c.l.bf16 %v3297
        %v3314 = vunpack.c.l.bf16 %v3298
        %v3315 = vunpack.c.l.bf16 %v3299
        %v3316 = vunpack.c.l.bf16 %v3300
        %v3317 = vunpack.c.l.bf16 %v3301
        %v3318 = vunpack.c.l.bf16 %v3302
        %v3319 = vunpack.c.l.bf16 %v3303
        %v3320 = vunpack.c.l.bf16 %v3304
        %v3321 = vunpack.c.l.bf16 %v3305
        %v3322 = vunpack.c.l.bf16 %v3306
        %v3323 = vunpack.c.l.bf16 %v3307
        %v3324 = vunpack.c.l.bf16 %v3308
        %v3325 = vmul.f32 %v3309, %v2033
        %v3326 = vmul.f32 %v3310, %v2033
        %v3327 = vmul.f32 %v3311, %v2033
        %v3328 = vmul.f32 %v3312, %v2033
        %v3329 = vmul.f32 %v3313, %v2033
        %v3330 = vmul.f32 %v3314, %v2033
        %v3331 = vmul.f32 %v3315, %v2033
        %v3332 = vmul.f32 %v3316, %v2033
        %v3333 = vmul.f32 %v3317, %v2033
        %v3334 = vmul.f32 %v3318, %v2033
        %v3335 = vmul.f32 %v3319, %v2033
        %v3336 = vmul.f32 %v3320, %v2033
        %v3337 = vmul.f32 %v3321, %v2033
        %v3338 = vmul.f32 %v3322, %v2033
        %v3339 = vmul.f32 %v3323, %v2033
        %v3340 = vmul.f32 %v3324, %v2033
        %v3341 = vadd.f32 %v3276, %v3325
        %v3342 = vadd.f32 %v3277, %v3326
        %v3343 = vadd.f32 %v3278, %v3327
        %v3344 = vadd.f32 %v3279, %v3328
        %v3345 = vadd.f32 %v3280, %v3329
        %v3346 = vadd.f32 %v3281, %v3330
        %v3347 = vadd.f32 %v3282, %v3331
        %v3348 = vadd.f32 %v3283, %v3332
        %v3349 = vadd.f32 %v3284, %v3333
        %v3350 = vadd.f32 %v3285, %v3334
        %v3351 = vadd.f32 %v3286, %v3335
        %v3352 = vadd.f32 %v3287, %v3336
        %v3353 = vadd.f32 %v3288, %v3337
        %v3354 = vadd.f32 %v3289, %v3338
        %v3355 = vadd.f32 %v3290, %v3339
        %v3356 = vadd.f32 %v3291, %v3340
        %v3357 = vld [vmem:[%s3292 + $0x8] sm:$0x1]
        %v3358 = vld [vmem:[%s3292 + $0x14] sm:$0x1]
        %v3359 = vld [vmem:[%s3292 + $0x20] sm:$0x1]
        %v3360 = vld [vmem:[%s3292 + $0x2c] sm:$0x1]
        %v3361 = vld [vmem:[%s3292 + $0x38] sm:$0x1]
        %v3362 = vld [vmem:[%s3292 + $0x44] sm:$0x1]
        %v3363 = vld [vmem:[%s3292 + $0x50] sm:$0x1]
        %v3364 = vld [vmem:[%s3292 + $0x5c] sm:$0x1]
        %v3365 = vunpack.c.l.bf16 %v3357
        %v3366 = vunpack.c.l.bf16 %v3358
        %v3367 = vunpack.c.l.bf16 %v3359
        %v3368 = vunpack.c.l.bf16 %v3360
        %v3369 = vunpack.c.l.bf16 %v3361
        %v3370 = vunpack.c.l.bf16 %v3362
        %v3371 = vunpack.c.l.bf16 %v3363
        %v3372 = vunpack.c.l.bf16 %v3364
        %v3373 = vmul.f32 %v3309, %v2082
        %v3374 = vmul.f32 %v3310, %v2082
        %v3375 = vmul.f32 %v3365, %v2082
        %v3376 = vmul.f32 %v3311, %v2082
        %v3377 = vmul.f32 %v3312, %v2082
        %v3378 = vmul.f32 %v3366, %v2082
        %v3379 = vmul.f32 %v3313, %v2082
        %v3380 = vmul.f32 %v3314, %v2082
        %v3381 = vmul.f32 %v3367, %v2082
        %v3382 = vmul.f32 %v3315, %v2082
        %v3383 = vmul.f32 %v3316, %v2082
        %v3384 = vmul.f32 %v3368, %v2082
        %v3385 = vmul.f32 %v3317, %v2082
        %v3386 = vmul.f32 %v3318, %v2082
        %v3387 = vmul.f32 %v3369, %v2082
        %v3388 = vmul.f32 %v3319, %v2082
        %v3389 = vmul.f32 %v3320, %v2082
        %v3390 = vmul.f32 %v3370, %v2082
        %v3391 = vmul.f32 %v3321, %v2082
        %v3392 = vmul.f32 %v3322, %v2082
        %v3393 = vmul.f32 %v3371, %v2082
        %v3394 = vmul.f32 %v3323, %v2082
        %v3395 = vmul.f32 %v3324, %v2082
        %v3396 = vmul.f32 %v3372, %v2082
        %v3421 = vrot.slane %v3373, 1
        %v3422 = vrot.slane %v3374, 1
        %v3423 = vsel %vm1450, %v3421, %v3422
        %v3424 = vrot.slane %v3375, 1
        %v3425 = vsel %vm1450, %v3422, %v3424
        %v3426 = vrot.slane %v3376, 1
        %v3427 = vrot.slane %v3377, 1
        %v3428 = vsel %vm1450, %v3426, %v3427
        %v3429 = vrot.slane %v3378, 1
        %v3430 = vsel %vm1450, %v3427, %v3429
        %v3431 = vrot.slane %v3379, 1
        %v3432 = vrot.slane %v3380, 1
        %v3433 = vsel %vm1450, %v3431, %v3432
        %v3434 = vrot.slane %v3381, 1
        %v3435 = vsel %vm1450, %v3432, %v3434
        %v3436 = vrot.slane %v3382, 1
        %v3437 = vrot.slane %v3383, 1
        %v3438 = vsel %vm1450, %v3436, %v3437
        %v3439 = vrot.slane %v3384, 1
        %v3440 = vsel %vm1450, %v3437, %v3439
        %v3441 = vrot.slane %v3385, 1
        %v3442 = vrot.slane %v3386, 1
        %v3443 = vsel %vm1450, %v3441, %v3442
        %v3444 = vrot.slane %v3387, 1
        %v3445 = vsel %vm1450, %v3442, %v3444
        %v3446 = vrot.slane %v3388, 1
        %v3447 = vrot.slane %v3389, 1
        %v3448 = vsel %vm1450, %v3446, %v3447
        %v3449 = vrot.slane %v3390, 1
        %v3450 = vsel %vm1450, %v3447, %v3449
        %v3451 = vrot.slane %v3391, 1
        %v3452 = vrot.slane %v3392, 1
        %v3453 = vsel %vm1450, %v3451, %v3452
        %v3454 = vrot.slane %v3393, 1
        %v3455 = vsel %vm1450, %v3452, %v3454
        %v3456 = vrot.slane %v3394, 1
        %v3457 = vrot.slane %v3395, 1
        %v3458 = vsel %vm1450, %v3456, %v3457
        %v3459 = vrot.slane %v3396, 1
        %v3460 = vsel %vm1450, %v3457, %v3459
        %v3477 = vadd.f32 %v3341, %v3423
        %v3478 = vadd.f32 %v3342, %v3425
        %v3479 = vadd.f32 %v3343, %v3428
        %v3480 = vadd.f32 %v3344, %v3430
        %v3481 = vadd.f32 %v3345, %v3433
        %v3482 = vadd.f32 %v3346, %v3435
        %v3483 = vadd.f32 %v3347, %v3438
        %v3484 = vadd.f32 %v3348, %v3440
        %v3485 = vadd.f32 %v3349, %v3443
        %v3486 = vadd.f32 %v3350, %v3445
        %v3487 = vadd.f32 %v3351, %v3448
        %v3488 = vadd.f32 %v3352, %v3450
        %v3489 = vadd.f32 %v3353, %v3453
        %v3490 = vadd.f32 %v3354, %v3455
        %v3491 = vadd.f32 %v3355, %v3458
        %v3492 = vadd.f32 %v3356, %v3460
        %v3493 = vld [vmem:[%s3292] sm:$0xe]
        %v3494 = vld [vmem:[%s3292 + $0xc] sm:$0xe]
        %v3495 = vld [vmem:[%s3292 + $0x18] sm:$0xe]
        %v3496 = vld [vmem:[%s3292 + $0x24] sm:$0xe]
        %v3497 = vld [vmem:[%s3292 + $0x30] sm:$0xe]
        %v3498 = vld [vmem:[%s3292 + $0x3c] sm:$0xe]
        %v3499 = vld [vmem:[%s3292 + $0x48] sm:$0xe]
        %v3500 = vld [vmem:[%s3292 + $0x54] sm:$0xe]
        %v3501 = vunpack.c.l.bf16 %v3493
        %v3502 = vunpack.c.l.bf16 %v3494
        %v3503 = vunpack.c.l.bf16 %v3495
        %v3504 = vunpack.c.l.bf16 %v3496
        %v3505 = vunpack.c.l.bf16 %v3497
        %v3506 = vunpack.c.l.bf16 %v3498
        %v3507 = vunpack.c.l.bf16 %v3499
        %v3508 = vunpack.c.l.bf16 %v3500
        %v3509 = vmul.f32 %v3501, %v2219
        %v3510 = vmul.f32 %v3310, %v2219
        %v3511 = vmul.f32 %v3365, %v2219
        %v3512 = vmul.f32 %v3502, %v2219
        %v3513 = vmul.f32 %v3312, %v2219
        %v3514 = vmul.f32 %v3366, %v2219
        %v3515 = vmul.f32 %v3503, %v2219
        %v3516 = vmul.f32 %v3314, %v2219
        %v3517 = vmul.f32 %v3367, %v2219
        %v3518 = vmul.f32 %v3504, %v2219
        %v3519 = vmul.f32 %v3316, %v2219
        %v3520 = vmul.f32 %v3368, %v2219
        %v3521 = vmul.f32 %v3505, %v2219
        %v3522 = vmul.f32 %v3318, %v2219
        %v3523 = vmul.f32 %v3369, %v2219
        %v3524 = vmul.f32 %v3506, %v2219
        %v3525 = vmul.f32 %v3320, %v2219
        %v3526 = vmul.f32 %v3370, %v2219
        %v3527 = vmul.f32 %v3507, %v2219
        %v3528 = vmul.f32 %v3322, %v2219
        %v3529 = vmul.f32 %v3371, %v2219
        %v3530 = vmul.f32 %v3508, %v2219
        %v3531 = vmul.f32 %v3324, %v2219
        %v3532 = vmul.f32 %v3372, %v2219
        %v3557 = vrot.slane %v3509, 2
        %v3558 = vrot.slane %v3510, 2
        %v3559 = vsel %vm1588, %v3557, %v3558
        %v3560 = vrot.slane %v3511, 2
        %v3561 = vsel %vm1588, %v3558, %v3560
        %v3562 = vrot.slane %v3512, 2
        %v3563 = vrot.slane %v3513, 2
        %v3564 = vsel %vm1588, %v3562, %v3563
        %v3565 = vrot.slane %v3514, 2
        %v3566 = vsel %vm1588, %v3563, %v3565
        %v3567 = vrot.slane %v3515, 2
        %v3568 = vrot.slane %v3516, 2
        %v3569 = vsel %vm1588, %v3567, %v3568
        %v3570 = vrot.slane %v3517, 2
        %v3571 = vsel %vm1588, %v3568, %v3570
        %v3572 = vrot.slane %v3518, 2
        %v3573 = vrot.slane %v3519, 2
        %v3574 = vsel %vm1588, %v3572, %v3573
        %v3575 = vrot.slane %v3520, 2
        %v3576 = vsel %vm1588, %v3573, %v3575
        %v3577 = vrot.slane %v3521, 2
        %v3578 = vrot.slane %v3522, 2
        %v3579 = vsel %vm1588, %v3577, %v3578
        %v3580 = vrot.slane %v3523, 2
        %v3581 = vsel %vm1588, %v3578, %v3580
        %v3582 = vrot.slane %v3524, 2
        %v3583 = vrot.slane %v3525, 2
        %v3584 = vsel %vm1588, %v3582, %v3583
        %v3585 = vrot.slane %v3526, 2
        %v3586 = vsel %vm1588, %v3583, %v3585
        %v3587 = vrot.slane %v3527, 2
        %v3588 = vrot.slane %v3528, 2
        %v3589 = vsel %vm1588, %v3587, %v3588
        %v3590 = vrot.slane %v3529, 2
        %v3591 = vsel %vm1588, %v3588, %v3590
        %v3592 = vrot.slane %v3530, 2
        %v3593 = vrot.slane %v3531, 2
        %v3594 = vsel %vm1588, %v3592, %v3593
        %v3595 = vrot.slane %v3532, 2
        %v3596 = vsel %vm1588, %v3593, %v3595
        %v3613 = vadd.f32 %v3477, %v3559
        %v3614 = vadd.f32 %v3478, %v3561
        %v3615 = vadd.f32 %v3479, %v3564
        %v3616 = vadd.f32 %v3480, %v3566
        %v3617 = vadd.f32 %v3481, %v3569
        %v3618 = vadd.f32 %v3482, %v3571
        %v3619 = vadd.f32 %v3483, %v3574
        %v3620 = vadd.f32 %v3484, %v3576
        %v3621 = vadd.f32 %v3485, %v3579
        %v3622 = vadd.f32 %v3486, %v3581
        %v3623 = vadd.f32 %v3487, %v3584
        %v3624 = vadd.f32 %v3488, %v3586
        %v3625 = vadd.f32 %v3489, %v3589
        %v3626 = vadd.f32 %v3490, %v3591
        %v3627 = vadd.f32 %v3491, %v3594
        %v3628 = vadd.f32 %v3492, %v3596
        %v3629 = vadd.f32 %v3613, %v2341
        %v3630 = vadd.f32 %v3614, %v2341
        %v3631 = vadd.f32 %v3615, %v2341
        %v3632 = vadd.f32 %v3616, %v2341
        %v3633 = vadd.f32 %v3617, %v2341
        %v3634 = vadd.f32 %v3618, %v2341
        %v3635 = vadd.f32 %v3619, %v2341
        %v3636 = vadd.f32 %v3620, %v2341
        %v3637 = vadd.f32 %v3621, %v2341
        %v3638 = vadd.f32 %v3622, %v2341
        %v3639 = vadd.f32 %v3623, %v2341
        %v3640 = vadd.f32 %v3624, %v2341
        %v3641 = vadd.f32 %v3625, %v2341
        %v3642 = vadd.f32 %v3626, %v2341
        %v3643 = vadd.f32 %v3627, %v2341
        %v3644 = vadd.f32 %v3628, %v2341
        %v3645 = vmax.f32 %v3629, 0.0
        %v3646 = vmax.f32 %v3630, 0.0
        %v3647 = vmax.f32 %v3631, 0.0
        %v3648 = vmax.f32 %v3632, 0.0
        %v3649 = vmax.f32 %v3633, 0.0
        %v3650 = vmax.f32 %v3634, 0.0
        %v3651 = vmax.f32 %v3635, 0.0
        %v3652 = vmax.f32 %v3636, 0.0
        %v3653 = vmax.f32 %v3637, 0.0
        %v3654 = vmax.f32 %v3638, 0.0
        %v3655 = vmax.f32 %v3639, 0.0
        %v3656 = vmax.f32 %v3640, 0.0
        %v3657 = vmax.f32 %v3641, 0.0
        %v3658 = vmax.f32 %v3642, 0.0
        %v3659 = vmax.f32 %v3643, 0.0
        %v3660 = vmax.f32 %v3644, 0.0
        %v3661 = vmin.f32 %v3645, 6.0
        %v3662 = vmin.f32 %v3646, 6.0
        %v3663 = vmin.f32 %v3647, 6.0
        %v3664 = vmin.f32 %v3648, 6.0
        %v3665 = vmin.f32 %v3649, 6.0
        %v3666 = vmin.f32 %v3650, 6.0
        %v3667 = vmin.f32 %v3651, 6.0
        %v3668 = vmin.f32 %v3652, 6.0
        %v3669 = vmin.f32 %v3653, 6.0
        %v3670 = vmin.f32 %v3654, 6.0
        %v3671 = vmin.f32 %v3655, 6.0
        %v3672 = vmin.f32 %v3656, 6.0
        %v3673 = vmin.f32 %v3657, 6.0
        %v3674 = vmin.f32 %v3658, 6.0
        %v3675 = vmin.f32 %v3659, 6.0
        %v3676 = vmin.f32 %v3660, 6.0
        %v3677 = vpack.c.bf16 %v3661, %v3661
        %v3678 = vpack.c.bf16 %v3662, %v3662
        %v3679 = vpack.c.bf16 %v3663, %v3663
        %v3680 = vpack.c.bf16 %v3664, %v3664
        %v3681 = vpack.c.bf16 %v3665, %v3665
        %v3682 = vpack.c.bf16 %v3666, %v3666
        %v3683 = vpack.c.bf16 %v3667, %v3667
        %v3684 = vpack.c.bf16 %v3668, %v3668
        %v3685 = vpack.c.bf16 %v3669, %v3669
        %v3686 = vpack.c.bf16 %v3670, %v3670
        %v3687 = vpack.c.bf16 %v3671, %v3671
        %v3688 = vpack.c.bf16 %v3672, %v3672
        %v3689 = vpack.c.bf16 %v3673, %v3673
        %v3690 = vpack.c.bf16 %v3674, %v3674
        %v3691 = vpack.c.bf16 %v3675, %v3675
        %v3692 = vpack.c.bf16 %v3676, %v3676
        %v3709 = vunpack.c.l.b16 %v3677
        %v3710 = vunpack.c.l.b16 %v3678
        %v3711 = vunpack.c.l.b16 %v3679
        %v3712 = vunpack.c.l.b16 %v3680
        %v3713 = vunpack.c.l.b16 %v3681
        %v3714 = vunpack.c.l.b16 %v3682
        %v3715 = vunpack.c.l.b16 %v3683
        %v3716 = vunpack.c.l.b16 %v3684
        %v3717 = vunpack.c.l.b16 %v3685
        %v3718 = vunpack.c.l.b16 %v3686
        %v3719 = vunpack.c.l.b16 %v3687
        %v3720 = vunpack.c.l.b16 %v3688
        %v3721 = vunpack.c.l.b16 %v3689
        %v3722 = vunpack.c.l.b16 %v3690
        %v3723 = vunpack.c.l.b16 %v3691
        %v3724 = vunpack.c.l.b16 %v3692
        %v3725 = vpack.c.b16 %v3710, %v3709
        %v3726 = vpack.c.b16 %v3712, %v3711
        %v3727 = vpack.c.b16 %v3714, %v3713
        %v3728 = vpack.c.b16 %v3716, %v3715
        %v3729 = vpack.c.b16 %v3718, %v3717
        %v3730 = vpack.c.b16 %v3720, %v3719
        %v3731 = vpack.c.b16 %v3722, %v3721
        %v3732 = vpack.c.b16 %v3724, %v3723
        %3741 = vmatpush.bf16.msra.mxu0 %v2497
        %3742 = vmatpush.bf16.msra.mxu0 %v2496
        %3743 = vmatpush.bf16.msra.mxu0 %v2495
        %3744 = vmatpush.bf16.msra.mxu0 %v2494
        %3745 = vmatpush.bf16.msra.mxu0 %v2493
        %3746 = vmatpush.bf16.msra.mxu0 %v2492
        %3747 = vmatpush.bf16.msra.mxu0 %v2491
        %3748 = vmatpush.bf16.msra.mxu0 %v2490
        %3749 = vmatmul.bf16.gmra.mxu0 %v3725
        %v3750 = vpop.f32.mrf.mxu0
        %v3751 = vadd.f32 %v2408, %v3750
        %v3752 = vpop.f32.mrf.mxu0
        %v3753 = vadd.f32 %v2408, %v3752
        %3754 = vmatmul.bf16.gmra.mxu0 %v3726
        %v3755 = vpop.f32.mrf.mxu0
        %v3756 = vadd.f32 %v2408, %v3755
        %v3757 = vpop.f32.mrf.mxu0
        %v3758 = vadd.f32 %v2408, %v3757
        %3759 = vmatmul.bf16.gmra.mxu0 %v3727
        %v3760 = vpop.f32.mrf.mxu0
        %v3761 = vadd.f32 %v2408, %v3760
        %v3762 = vpop.f32.mrf.mxu0
        %v3763 = vadd.f32 %v2408, %v3762
        %3764 = vmatmul.bf16.gmra.mxu0 %v3728
        %v3765 = vpop.f32.mrf.mxu0
        %v3766 = vadd.f32 %v2408, %v3765
        %v3767 = vpop.f32.mrf.mxu0
        %v3768 = vadd.f32 %v2408, %v3767
        %3769 = vmatmul.bf16.gmra.mxu0 %v3729
        %v3770 = vpop.f32.mrf.mxu0
        %v3771 = vadd.f32 %v2408, %v3770
        %v3772 = vpop.f32.mrf.mxu0
        %v3773 = vadd.f32 %v2408, %v3772
        %3774 = vmatmul.bf16.gmra.mxu0 %v3730
        %v3775 = vpop.f32.mrf.mxu0
        %v3776 = vadd.f32 %v2408, %v3775
        %v3777 = vpop.f32.mrf.mxu0
        %v3778 = vadd.f32 %v2408, %v3777
        %3779 = vmatmul.bf16.gmra.mxu0 %v3731
        %v3780 = vpop.f32.mrf.mxu0
        %v3781 = vadd.f32 %v2408, %v3780
        %v3782 = vpop.f32.mrf.mxu0
        %v3783 = vadd.f32 %v2408, %v3782
        %3784 = vmatmul.bf16.gmra.mxu0 %v3732
        %v3785 = vpop.f32.mrf.mxu0
        %v3786 = vadd.f32 %v2408, %v3785
        %v3787 = vpop.f32.mrf.mxu0
        %v3788 = vadd.f32 %v2408, %v3787
        %3789 = vdwg.mxu0
        %v3790 = vld [vmem:[%s941] sm:$0xf]
        %v3791 = vld [vmem:[%s941 + $0x4] sm:$0xf]
        %v3792 = vld [vmem:[%s941 + $0x8] sm:$0xf]
        %v3793 = vld [vmem:[%s941 + $0xc] sm:$0xf]
        %v3794 = vld [vmem:[%s941 + $0x10] sm:$0xf]
        %v3795 = vld [vmem:[%s941 + $0x14] sm:$0xf]
        %v3796 = vld [vmem:[%s941 + $0x18] sm:$0xf]
        %v3797 = vld [vmem:[%s941 + $0x1c] sm:$0xf]
        %v3798 = vld [vmem:[%s941 + $0x20] sm:$0xf]
        %v3799 = vld [vmem:[%s941 + $0x24] sm:$0xf]
        %v3800 = vld [vmem:[%s941 + $0x28] sm:$0xf]
        %v3801 = vld [vmem:[%s941 + $0x2c] sm:$0xf]
        %v3802 = vld [vmem:[%s941 + $0x30] sm:$0xf]
        %v3803 = vld [vmem:[%s941 + $0x34] sm:$0xf]
        %v3804 = vld [vmem:[%s941 + $0x38] sm:$0xf]
        %v3805 = vld [vmem:[%s941 + $0x3c] sm:$0xf]
        %v3806 = vunpack.c.l.bf16 %v3790
        %v3807 = vunpack.c.l.bf16 %v3791
        %v3808 = vunpack.c.l.bf16 %v3792
        %v3809 = vunpack.c.l.bf16 %v3793
        %v3810 = vunpack.c.l.bf16 %v3794
        %v3811 = vunpack.c.l.bf16 %v3795
        %v3812 = vunpack.c.l.bf16 %v3796
        %v3813 = vunpack.c.l.bf16 %v3797
        %v3814 = vunpack.c.l.bf16 %v3798
        %v3815 = vunpack.c.l.bf16 %v3799
        %v3816 = vunpack.c.l.bf16 %v3800
        %v3817 = vunpack.c.l.bf16 %v3801
        %v3818 = vunpack.c.l.bf16 %v3802
        %v3819 = vunpack.c.l.bf16 %v3803
        %v3820 = vunpack.c.l.bf16 %v3804
        %v3821 = vunpack.c.l.bf16 %v3805
        %v3822 = vadd.f32 %v3751, %v3806
        %v3823 = vadd.f32 %v3753, %v3807
        %v3824 = vadd.f32 %v3756, %v3808
        %v3825 = vadd.f32 %v3758, %v3809
        %v3826 = vadd.f32 %v3761, %v3810
        %v3827 = vadd.f32 %v3763, %v3811
        %v3828 = vadd.f32 %v3766, %v3812
        %v3829 = vadd.f32 %v3768, %v3813
        %v3830 = vadd.f32 %v3771, %v3814
        %v3831 = vadd.f32 %v3773, %v3815
        %v3832 = vadd.f32 %v3776, %v3816
        %v3833 = vadd.f32 %v3778, %v3817
        %v3834 = vadd.f32 %v3781, %v3818
        %v3835 = vadd.f32 %v3783, %v3819
        %v3836 = vadd.f32 %v3786, %v3820
        %v3837 = vadd.f32 %v3788, %v3821
        %s3838 = scalar_lea.vmem %s348, 128 [#allocation11]
        %3839 = vst [vmem:[%s3838] sm:$0xff] %v3822
        %3840 = vst [vmem:[%s3838 + $0x8] sm:$0xff] %v3823
        %3841 = vst [vmem:[%s3838 + $0x10] sm:$0xff] %v3824
        %3842 = vst [vmem:[%s3838 + $0x18] sm:$0xff] %v3825
        %3843 = vst [vmem:[%s3838 + $0x20] sm:$0xff] %v3826
        %3844 = vst [vmem:[%s3838 + $0x28] sm:$0xff] %v3827
        %3845 = vst [vmem:[%s3838 + $0x30] sm:$0xff] %v3828
        %3846 = vst [vmem:[%s3838 + $0x38] sm:$0xff] %v3829
        %3847 = vst [vmem:[%s3838 + $0x40] sm:$0xff] %v3830
        %3848 = vst [vmem:[%s3838 + $0x48] sm:$0xff] %v3831
        %3849 = vst [vmem:[%s3838 + $0x50] sm:$0xff] %v3832
        %3850 = vst [vmem:[%s3838 + $0x58] sm:$0xff] %v3833
        %3851 = vst [vmem:[%s3838 + $0x60] sm:$0xff] %v3834
        %3852 = vst [vmem:[%s3838 + $0x68] sm:$0xff] %v3835
        %3853 = vst [vmem:[%s3838 + $0x70] sm:$0xff] %v3836
        %3854 = vst [vmem:[%s3838 + $0x78] sm:$0xff] %v3837
        %s3855 = sand.u32 %s186, 1
        %s3856 = scalar_lea.sflag [#allocation5], %s3855
        %s3857 = sand.u32 %s186, 1
        %s3858 = smul.addr %s3857, 256
        %s3859 = scalar_lea.vmem [#allocation11], %s3858
        // Predicated region
        $region65: #{tpu_custom_call.1} parent=47 // pred_check
          %p3860 = pneg %p196
        $region66: #{tpu_custom_call.1} parent=47 // pred_check_branch
          %3862 = sbr.rel (%p3860) target = $region68
        $region67: #{tpu_custom_call.1} parent=47 // pred_region
          %3864 = vsyncadd %s3856, 0
          %s3865 = smul.addr %s26, 32
          %s3866 = smul.addr %s3865, 8
          %s3867 = scalar_lea.hbm %s7, %s3866
          %s3868 = sshll.u32 %s3859, 4
          %s3869 = int_to_ptr.vmem [resolvable:$true] %s3868
          %s3870 = sshll.u32 %s3867, 4
          %s3871 = int_to_ptr.hbm [resolvable:$true] %s3870
          %3876 = dma.vmem_to_hbm [thread:$0]  %s3869, 4096, %s3871, %s3856, 128, 128, 8
        $region68: #{tpu_custom_call.1} parent=47 // pred_fallthru
          _
      $region48: #{tpu_custom_call.1} parent=5 // pred_fallthru
        _
      %p3877 = scmp.le.s32.totalorder 2, %s21
      // Predicated region
      $region69: #{tpu_custom_call.1} parent=5 // pred_check
        %p3878 = pneg %p3877
      $region70: #{tpu_custom_call.1} parent=5 // pred_check_branch
        %3880 = sbr.rel (%p3878) target = $region72
      $region71: #{tpu_custom_call.1} parent=5 // pred_region
        %s3881 = ssub.s32 %s21, 2
        // Predicated region
        $region73: #{tpu_custom_call.1} parent=71 // pred_check
          %p3882 = pneg %p202
        $region74: #{tpu_custom_call.1} parent=71 // pred_check_branch
          %3884 = sbr.rel (%p3882) target = $region76
        $region75: #{tpu_custom_call.1} parent=71 // pred_region
          %s3885 = sand.u32 %s187, 1
          %s3886 = scalar_lea.sflag [#allocation5], %s3885
          %s3887 = sand.u32 %s187, 1
          %s3888 = smul.addr %s3887, 256
          %s3889 = scalar_lea.vmem [#allocation11], %s3888
          %3891 = dma.done %s3886, 4096
        $region76: #{tpu_custom_call.1} parent=71 // pred_fallthru
          _
      $region72: #{tpu_custom_call.1} parent=5 // pred_fallthru
        _
    $region6: #{tpu_custom_call.1} parent=1 // loop_footer
      %s25 = sadd.s32 1, %s21
    $region7: #{tpu_custom_call.1} parent=1 // loop_footer_branch
      %20 = sbr.rel target = $region3
    $region8: #{tpu_custom_call.1} parent=1 // loop_exit
      _
    %3892 = vsyncpa [#allocation4], 1
    %s3893 = scalar_lea.sflag [#allocation4], 1
    %3894 = vsyncpa %s3893, 1
    %3895 = vsyncpa [#allocation7], 1
    %3896 = vsyncpa [#allocation10], 1
    %3897 = vsyncpa [#allocation5], 1
    %s3898 = scalar_lea.sflag [#allocation5], 1
    %3899 = vsyncpa %s3898, 1

</llo_original>
